<compile_context>
chip_gen: v7x
topology: tpu7x:2x2x1
jax: 0.10.0
libtpu: 0.0.40
codegen_flags: <defaults>
</compile_context>

<pallas_src>
import numpy as np
import jax
import jax.numpy as jnp
from jax.experimental import pallas as pl
from jax.experimental.pallas import tpu as pltpu


# ---------------------------------------------------------------------------
# Fused forward kernel factory (one grid step == NB images)
# ---------------------------------------------------------------------------
def _make_kernel(nb):
    R = nb * 32                      # rows per block: image i -> rows [32i, 32i+32)
    bf16 = jnp.bfloat16
    f32 = jnp.float32

    def kernel(x_ref, w1_ref, b1_ref, w2_ref, b2_ref,
               wf1_ref, bf1_ref, wf2_ref, bf2_ref, wf3_ref, bf3_ref,
               sa_ref, sb_ref, o_ref, m1_ref, r1_ref):

        def mm(a, b):                # bf16 MXU operands, f32 accumulate
            return jnp.dot(a, b, preferred_element_type=f32)

        # ---- conv1 + bias + ReLU + 2x2 max-pool --------------------------
        # Even/odd horizontal-pool phases are fused into lanes [0:128)/[128:256)
        # of w1; the 5 vertical taps are row-shifted reads of the input slab.
        # Rows 32i + r (r < 28) are valid; rows r >= 28 are don't-care.
        y1 = mm(x_ref[0, 0:R, :].astype(bf16), w1_ref[0])            # (R, 256)
        for ky in range(1, 5):
            y1 = y1 + mm(x_ref[0, ky:ky + R, :].astype(bf16), w1_ref[ky])
        m1 = jnp.maximum(jnp.maximum(y1[:, :128], y1[:, 128:]) + b1_ref[...], 0.0)
        m1_ref[0:R, :] = m1
        m1_ref[R:R + 8, :] = jnp.zeros((8, 128), f32)                # keep pad finite
        # vertical half of pool1; valid rows are 32i + 2*h1 (row-dilated x2)
        r1_ref[0:R, :] = jnp.maximum(m1_ref[0:R, :], m1_ref[1:R + 1, :])
        r1_ref[R:R + 8, :] = jnp.zeros((8, 128), f32)

        # ---- conv2 + bias + ReLU + horizontal half of pool2 --------------
        # Valid output rows are 32i + 2*h2 (h2 < 10); taps shift by 2*ky.
        y2 = mm(r1_ref[0:R, :].astype(bf16), w2_ref[0])              # (R, 256)
        for ky in range(1, 5):
            y2 = y2 + mm(r1_ref[2 * ky:2 * ky + R, :].astype(bf16), w2_ref[ky])
        m2 = jnp.maximum(jnp.maximum(y2[:, :128], y2[:, 128:]) + b2_ref[...], 0.0)
        m2b = m2.astype(bf16)                                        # (R, 128)

        # ---- vertical half of pool2 + fc1 ---------------------------------
        # pool2[i, h3] = max(m2[32i + 4h3], m2[32i + 4h3 + 2]); the per-image
        # row gather is a tiny one-hot selection matmul (no strided loads).
        z = jnp.zeros((nb, 128), f32)
        for h3 in range(5):
            fa = mm(sa_ref[h3], m2b)                                 # (nb, 128)
            fb = mm(sb_ref[h3], m2b)
            feat = jnp.maximum(fa, fb).astype(bf16)                  # pool2 row (i, h3)
            z = z + mm(feat, wf1_ref[h3])                            # fc1 partial
        z = jnp.maximum(z + bf1_ref[...], 0.0)                       # fc1 + ReLU
        z = jnp.maximum(mm(z.astype(bf16), wf2_ref[...]) + bf2_ref[...], 0.0)
        z = mm(z.astype(bf16), wf3_ref[...]) + bf3_ref[...]          # (nb, 128)
        o_ref[0] = z

    return kernel


# ---------------------------------------------------------------------------
# One-time (init) weight layout work — hoisted out of the forward pass
# ---------------------------------------------------------------------------
def _conv_pool_toeplitz(w_oihw, w_in, w_pool, k_pad, n_pad):
    """Per-vertical-tap Toeplitz weight with both horizontal pool phases fused.

    out[ky, col*I + c, dx*n_pad + wp*O + o] = w[o, c, ky, (2*wp + dx) ... kx]
    so the kernel only accumulates 5 plain matmuls over row-shifted (R, 128)
    activation slabs; the horizontal conv slide AND both columns of the 2x2
    max-pool live in the weight.  K and N are zero-padded to 128 lanes.
    """
    o_ch, i_ch, k, _ = w_oihw.shape
    m = np.zeros((k, k_pad, 2 * n_pad), np.float32)
    for ky in range(k):
        for dx, base in ((0, 0), (1, n_pad)):
            for wp in range(w_pool):
                for kx in range(k):
                    col = 2 * wp + dx + kx
                    if col >= w_in:
                        continue
                    for c in range(i_ch):
                        m[ky, col * i_ch + c,
                          base + wp * o_ch: base + (wp + 1) * o_ch] = w_oihw[:, c, ky, kx]
    return m


def init_params(key):
    """PyTorch-layout parameters with nn.Conv2d / nn.Linear default init."""
    ks = jax.random.split(key, 10)

    def u(k, shape, fan_in):
        bound = 1.0 / np.sqrt(float(fan_in))
        return jax.random.uniform(k, shape, jnp.float32, -bound, bound)

    return {
        "conv1_w": u(ks[0], (6, 3, 5, 5), 3 * 25),
        "conv1_b": u(ks[1], (6,), 3 * 25),
        "conv2_w": u(ks[2], (16, 6, 5, 5), 6 * 25),
        "conv2_b": u(ks[3], (16,), 6 * 25),
        "fc1_w": u(ks[4], (120, 400), 400),
        "fc1_b": u(ks[5], (120,), 400),
        "fc2_w": u(ks[6], (84, 120), 120),
        "fc2_b": u(ks[7], (84,), 120),
        "fc3_w": u(ks[8], (10, 84), 84),
        "fc3_b": u(ks[9], (10,), 84),
    }


def prepare_kernel_params(torch_params):
    """Hoist ALL weight layout work out of the jit'd forward (done once).

    Matmul weights are stored bf16 (MXU operands); biases stay f32 so all
    elementwise math remains f32 (v5e has no bf16 VPU).  Every K/N dim is
    padded to a multiple of 128 for lane-dense stores and un-ragged MXU passes.
    """
    p = {k: np.asarray(v, np.float32) for k, v in torch_params.items()}

    w1 = _conv_pool_toeplitz(p["conv1_w"], 32, 14, 128, 128)       # (5,128,256)
    w2 = _conv_pool_toeplitz(p["conv2_w"], 14, 5, 128, 128)        # (5,128,256)
    b1 = np.zeros((1, 128), np.float32); b1[0, :84] = np.tile(p["conv1_b"], 14)
    b2 = np.zeros((1, 128), np.float32); b2[0, :80] = np.tile(p["conv2_b"], 5)

    # fc1 rows reordered so the kernel's (h3, w3, c)-major activation layout
    # matches torch.flatten on NCHW (c, h3, w3); split per pooled row h3.
    wf1 = np.zeros((5, 128, 128), np.float32)
    wf1[:, :80, :120] = (p["fc1_w"].reshape(120, 16, 5, 5)
                         .transpose(2, 3, 1, 0).reshape(5, 80, 120))
    bf1 = np.zeros((1, 128), np.float32); bf1[0, :120] = p["fc1_b"]

    wf2 = np.zeros((128, 128), np.float32); wf2[:120, :84] = p["fc2_w"].T
    bf2 = np.zeros((1, 128), np.float32); bf2[0, :84] = p["fc2_b"]
    wf3 = np.zeros((128, 128), np.float32); wf3[:84, :10] = p["fc3_w"].T
    bf3 = np.zeros((1, 128), np.float32); bf3[0, :10] = p["fc3_b"]

    kp = {k: jnp.asarray(v, jnp.bfloat16)
          for k, v in {"w1": w1, "w2": w2, "wf1": wf1, "wf2": wf2, "wf3": wf3}.items()}
    kp.update({k: jnp.asarray(v) for k, v in
               {"b1": b1, "b2": b2, "bf1": bf1, "bf2": bf2, "bf3": bf3}.items()})
    return kp


# ---------------------------------------------------------------------------
# Forward wrapper: one pallas_call, grid over batch tiles of NB images
# ---------------------------------------------------------------------------
def _replicated(arr):
    zeros = (0,) * arr.ndim
    return pl.BlockSpec(arr.shape, lambda g: zeros)


def cifar_model_forward(kparams, x_nchw, nb=4):
    """x_nchw: (B, 3, 32, 32) float32 (PyTorch input layout)."""
    B = x_nchw.shape[0]
    G = max(1, -(-B // nb))          # grid steps (keep >=2 and even for v7x)
    Bp = G * nb
    R = nb * 32

    # NCHW -> per-image (H, W*C) slabs, lanes padded 96->128, NB images stacked
    # per block along rows, plus 8 trailing zero rows so the 5 vertical conv
    # taps can read row-shifted (R, 128) windows without going out of bounds.
    x = jnp.transpose(x_nchw, (0, 2, 3, 1)).reshape(B, 32, 96)
    x = jnp.pad(x, ((0, Bp - B), (0, 0), (0, 32)))
    x = x.reshape(G, R, 128)
    x = jnp.pad(x, ((0, 0), (0, 8), (0, 0)))

    # One-hot row-selection matrices for pool2's two vertical phases per h3
    # (trace-time constants; replace a strided row gather with tiny matmuls).
    sa = np.zeros((5, nb, R), np.float32)
    sb = np.zeros((5, nb, R), np.float32)
    for h3 in range(5):
        for i in range(nb):
            sa[h3, i, 32 * i + 4 * h3] = 1.0
            sb[h3, i, 32 * i + 4 * h3 + 2] = 1.0
    sa = jnp.asarray(sa, jnp.bfloat16)
    sb = jnp.asarray(sb, jnp.bfloat16)

    weights = (kparams["w1"], kparams["b1"], kparams["w2"], kparams["b2"],
               kparams["wf1"], kparams["bf1"], kparams["wf2"], kparams["bf2"],
               kparams["wf3"], kparams["bf3"], sa, sb)

    out = pl.pallas_call(
        _make_kernel(nb),
        out_shape=jax.ShapeDtypeStruct((G, nb, 128), jnp.float32),
        grid=(G,),
        in_specs=[pl.BlockSpec((1, R + 8, 128), lambda g: (g, 0, 0))]
                 + [_replicated(w) for w in weights],
        out_specs=pl.BlockSpec((1, nb, 128), lambda g: (g, 0, 0)),
        scratch_shapes=[pltpu.VMEM((R + 8, 128), jnp.float32),   # m1 (post hpool+relu)
                        pltpu.VMEM((R + 8, 128), jnp.float32)],  # r1 (pool1, dilated)
        compiler_params=pltpu.CompilerParams(
            dimension_semantics=("parallel",),
            vmem_limit_bytes=32 * 1024 * 1024),
    )(x, *weights)

    return out.reshape(Bp, 128)[:B, :10]


# ---------------------------------------------------------------------------
# Plain-JAX reference (mirrors the PyTorch module) for self-validation
# ---------------------------------------------------------------------------
def _reference_forward(p, x):
    hi = jax.lax.Precision.HIGHEST
    dn = ("NCHW", "OIHW", "NCHW")
    y = jax.lax.conv_general_dilated(x, p["conv1_w"], (1, 1), "VALID",
                                     dimension_numbers=dn, precision=hi)
    y = jax.nn.relu(y + p["conv1_b"][None, :, None, None])
    y = jax.lax.reduce_window(y, -jnp.inf, jax.lax.max,
                              (1, 1, 2, 2), (1, 1, 2, 2), "VALID")
    y = jax.lax.conv_general_dilated(y, p["conv2_w"], (1, 1), "VALID",
                                     dimension_numbers=dn, precision=hi)
    y = jax.nn.relu(y + p["conv2_b"][None, :, None, None])
    y = jax.lax.reduce_window(y, -jnp.inf, jax.lax.max,
                              (1, 1, 2, 2), (1, 1, 2, 2), "VALID")
    f = y.reshape(y.shape[0], -1)
    f = jax.nn.relu(jnp.dot(f, p["fc1_w"].T, precision=hi) + p["fc1_b"])
    f = jax.nn.relu(jnp.dot(f, p["fc2_w"].T, precision=hi) + p["fc2_b"])
    return jnp.dot(f, p["fc3_w"].T, precision=hi) + p["fc3_b"]


if __name__ == "__main__":
    key = jax.random.PRNGKey(0)
    pkey, xkey = jax.random.split(key)
    torch_params = init_params(pkey)
    kparams = prepare_kernel_params(torch_params)   # one-time layout hoisting
    # fc1 expects 16*5*5 features, which pins the input to (B, 3, 32, 32).
    # B=8 with nb=4 -> 2 even grid steps, so both v7x TensorCores get work.
    x = jax.random.normal(xkey, (8, 3, 32, 32), jnp.float32)

    fwd = jax.jit(cifar_model_forward)
    out = jax.block_until_ready(fwd(kparams, x))
    assert out.shape == (8, 10) and out.dtype == jnp.float32

    ref = jax.block_until_ready(_reference_forward(torch_params, x))
    err = float(jnp.max(jnp.abs(out - ref)))
    # bf16 MXU operands (f32 accumulate / f32 elementwise) vs f32 reference;
    # typical max abs err ~1e-2.
    assert err < 3e-2, f"kernel/reference mismatch: max abs err = {err}"
    print("KERNEL_OK")
</pallas_src>

<mosaic_0001>
module attributes {stable_mosaic.version = 11 : i64} {
  func.func @kernel(%arg0: i32, %arg1: memref<1x136x128xf32, #tpu.memory_space<vmem>>, %arg2: memref<5x128x256xbf16, #tpu.memory_space<vmem>>, %arg3: memref<1x128xf32, #tpu.memory_space<vmem>>, %arg4: memref<5x128x256xbf16, #tpu.memory_space<vmem>>, %arg5: memref<1x128xf32, #tpu.memory_space<vmem>>, %arg6: memref<5x128x128xbf16, #tpu.memory_space<vmem>>, %arg7: memref<1x128xf32, #tpu.memory_space<vmem>>, %arg8: memref<128x128xbf16, #tpu.memory_space<vmem>>, %arg9: memref<1x128xf32, #tpu.memory_space<vmem>>, %arg10: memref<128x128xbf16, #tpu.memory_space<vmem>>, %arg11: memref<1x128xf32, #tpu.memory_space<vmem>>, %arg12: memref<5x4x128xbf16, #tpu.memory_space<vmem>>, %arg13: memref<5x4x128xbf16, #tpu.memory_space<vmem>>, %arg14: memref<1x4x128xf32, #tpu.memory_space<vmem>>, %arg15: memref<136x128xf32, #tpu.memory_space<vmem>>, %arg16: memref<136x128xf32, #tpu.memory_space<vmem>>) attributes {dimension_semantics = [#tpu.dimension_semantics<parallel>], iteration_bounds = array<i64: 2>, scalar_prefetch = 0 : i64, scratch_operands = 2 : i64, tpu.core_type = #tpu.core_type<tc>, window_params = [{transform_indices = @transform_0, window_bounds = array<i64: 1, 136, 128>}, {pipeline_mode = #tpu.pipeline_mode<synchronous>, transform_indices = @transform_1, window_bounds = array<i64: 5, 128, 256>}, {pipeline_mode = #tpu.pipeline_mode<synchronous>, transform_indices = @transform_2, window_bounds = array<i64: 1, 128>}, {pipeline_mode = #tpu.pipeline_mode<synchronous>, transform_indices = @transform_3, window_bounds = array<i64: 5, 128, 256>}, {pipeline_mode = #tpu.pipeline_mode<synchronous>, transform_indices = @transform_4, window_bounds = array<i64: 1, 128>}, {pipeline_mode = #tpu.pipeline_mode<synchronous>, transform_indices = @transform_5, window_bounds = array<i64: 5, 128, 128>}, {pipeline_mode = #tpu.pipeline_mode<synchronous>, transform_indices = @transform_6, window_bounds = array<i64: 1, 128>}, {pipeline_mode = #tpu.pipeline_mode<synchronous>, transform_indices = @transform_7, window_bounds = array<i64: 128, 128>}, {pipeline_mode = #tpu.pipeline_mode<synchronous>, transform_indices = @transform_8, window_bounds = array<i64: 1, 128>}, {pipeline_mode = #tpu.pipeline_mode<synchronous>, transform_indices = @transform_9, window_bounds = array<i64: 128, 128>}, {pipeline_mode = #tpu.pipeline_mode<synchronous>, transform_indices = @transform_10, window_bounds = array<i64: 1, 128>}, {pipeline_mode = #tpu.pipeline_mode<synchronous>, transform_indices = @transform_11, window_bounds = array<i64: 5, 4, 128>}, {pipeline_mode = #tpu.pipeline_mode<synchronous>, transform_indices = @transform_12, window_bounds = array<i64: 5, 4, 128>}, {transform_indices = @transform_13, window_bounds = array<i64: 1, 4, 128>}]} {
    %c0 = arith.constant 0 : index
    %c0_0 = arith.constant 0 : index
    %c0_1 = arith.constant 0 : index
    %0 = vector.load %arg1[%c0, %c0_0, %c0_1] : memref<1x136x128xf32, #tpu.memory_space<vmem>>, vector<1x128x128xf32>
    %1 = vector.shape_cast %0 : vector<1x128x128xf32> to vector<128x128xf32>
    %2 = arith.truncf %1 : vector<128x128xf32> to vector<128x128xbf16>
    %c0_2 = arith.constant 0 : index
    %c0_3 = arith.constant 0 : index
    %c0_4 = arith.constant 0 : index
    %3 = vector.load %arg2[%c0_2, %c0_3, %c0_4] : memref<5x128x256xbf16, #tpu.memory_space<vmem>>, vector<1x128x256xbf16>
    %4 = vector.shape_cast %3 : vector<1x128x256xbf16> to vector<128x256xbf16>
    %cst = arith.constant dense<0.000000e+00> : vector<128x256xf32>
    %5 = tpu.matmul %2, %4, %cst {dimension_numbers = #tpu.dot_dimension_numbers<[1], [0], [0], [1], [0, 0, 1, 1], [], []>} : vector<128x128xbf16>, vector<128x256xbf16>, vector<128x256xf32> -> vector<128x256xf32>
    %c0_5 = arith.constant 0 : index
    %c1 = arith.constant 1 : index
    %c0_6 = arith.constant 0 : index
    %6 = vector.load %arg1[%c0_5, %c1, %c0_6] : memref<1x136x128xf32, #tpu.memory_space<vmem>>, vector<1x128x128xf32>
    %7 = vector.shape_cast %6 : vector<1x128x128xf32> to vector<128x128xf32>
    %8 = arith.truncf %7 : vector<128x128xf32> to vector<128x128xbf16>
    %c1_7 = arith.constant 1 : index
    %c0_8 = arith.constant 0 : index
    %c0_9 = arith.constant 0 : index
    %9 = vector.load %arg2[%c1_7, %c0_8, %c0_9] : memref<5x128x256xbf16, #tpu.memory_space<vmem>>, vector<1x128x256xbf16>
    %10 = vector.shape_cast %9 : vector<1x128x256xbf16> to vector<128x256xbf16>
    %cst_10 = arith.constant dense<0.000000e+00> : vector<128x256xf32>
    %11 = tpu.matmul %8, %10, %cst_10 {dimension_numbers = #tpu.dot_dimension_numbers<[1], [0], [0], [1], [0, 0, 1, 1], [], []>} : vector<128x128xbf16>, vector<128x256xbf16>, vector<128x256xf32> -> vector<128x256xf32>
    %12 = arith.addf %5, %11 : vector<128x256xf32>
    %c0_11 = arith.constant 0 : index
    %c2 = arith.constant 2 : index
    %c0_12 = arith.constant 0 : index
    %13 = vector.load %arg1[%c0_11, %c2, %c0_12] : memref<1x136x128xf32, #tpu.memory_space<vmem>>, vector<1x128x128xf32>
    %14 = vector.shape_cast %13 : vector<1x128x128xf32> to vector<128x128xf32>
    %15 = arith.truncf %14 : vector<128x128xf32> to vector<128x128xbf16>
    %c2_13 = arith.constant 2 : index
    %c0_14 = arith.constant 0 : index
    %c0_15 = arith.constant 0 : index
    %16 = vector.load %arg2[%c2_13, %c0_14, %c0_15] : memref<5x128x256xbf16, #tpu.memory_space<vmem>>, vector<1x128x256xbf16>
    %17 = vector.shape_cast %16 : vector<1x128x256xbf16> to vector<128x256xbf16>
    %cst_16 = arith.constant dense<0.000000e+00> : vector<128x256xf32>
    %18 = tpu.matmul %15, %17, %cst_16 {dimension_numbers = #tpu.dot_dimension_numbers<[1], [0], [0], [1], [0, 0, 1, 1], [], []>} : vector<128x128xbf16>, vector<128x256xbf16>, vector<128x256xf32> -> vector<128x256xf32>
    %19 = arith.addf %12, %18 : vector<128x256xf32>
    %c0_17 = arith.constant 0 : index
    %c3 = arith.constant 3 : index
    %c0_18 = arith.constant 0 : index
    %20 = vector.load %arg1[%c0_17, %c3, %c0_18] : memref<1x136x128xf32, #tpu.memory_space<vmem>>, vector<1x128x128xf32>
    %21 = vector.shape_cast %20 : vector<1x128x128xf32> to vector<128x128xf32>
    %22 = arith.truncf %21 : vector<128x128xf32> to vector<128x128xbf16>
    %c3_19 = arith.constant 3 : index
    %c0_20 = arith.constant 0 : index
    %c0_21 = arith.constant 0 : index
    %23 = vector.load %arg2[%c3_19, %c0_20, %c0_21] : memref<5x128x256xbf16, #tpu.memory_space<vmem>>, vector<1x128x256xbf16>
    %24 = vector.shape_cast %23 : vector<1x128x256xbf16> to vector<128x256xbf16>
    %cst_22 = arith.constant dense<0.000000e+00> : vector<128x256xf32>
    %25 = tpu.matmul %22, %24, %cst_22 {dimension_numbers = #tpu.dot_dimension_numbers<[1], [0], [0], [1], [0, 0, 1, 1], [], []>} : vector<128x128xbf16>, vector<128x256xbf16>, vector<128x256xf32> -> vector<128x256xf32>
    %26 = arith.addf %19, %25 : vector<128x256xf32>
    %c0_23 = arith.constant 0 : index
    %c4 = arith.constant 4 : index
    %c0_24 = arith.constant 0 : index
    %27 = vector.load %arg1[%c0_23, %c4, %c0_24] : memref<1x136x128xf32, #tpu.memory_space<vmem>>, vector<1x128x128xf32>
    %28 = vector.shape_cast %27 : vector<1x128x128xf32> to vector<128x128xf32>
    %29 = arith.truncf %28 : vector<128x128xf32> to vector<128x128xbf16>
    %c4_25 = arith.constant 4 : index
    %c0_26 = arith.constant 0 : index
    %c0_27 = arith.constant 0 : index
    %30 = vector.load %arg2[%c4_25, %c0_26, %c0_27] : memref<5x128x256xbf16, #tpu.memory_space<vmem>>, vector<1x128x256xbf16>
    %31 = vector.shape_cast %30 : vector<1x128x256xbf16> to vector<128x256xbf16>
    %cst_28 = arith.constant dense<0.000000e+00> : vector<128x256xf32>
    %32 = tpu.matmul %29, %31, %cst_28 {dimension_numbers = #tpu.dot_dimension_numbers<[1], [0], [0], [1], [0, 0, 1, 1], [], []>} : vector<128x128xbf16>, vector<128x256xbf16>, vector<128x256xf32> -> vector<128x256xf32>
    %33 = arith.addf %26, %32 : vector<128x256xf32>
    %34 = vector.extract_strided_slice %33 {offsets = [0, 0], sizes = [128, 128], strides = [1, 1]} : vector<128x256xf32> to vector<128x128xf32>
    %35 = vector.extract_strided_slice %33 {offsets = [0, 128], sizes = [128, 128], strides = [1, 1]} : vector<128x256xf32> to vector<128x128xf32>
    %36 = arith.maximumf %34, %35 : vector<128x128xf32>
    %c0_29 = arith.constant 0 : index
    %c0_30 = arith.constant 0 : index
    %37 = vector.load %arg3[%c0_29, %c0_30] : memref<1x128xf32, #tpu.memory_space<vmem>>, vector<1x128xf32>
    %38 = vector.broadcast %37 : vector<1x128xf32> to vector<128x128xf32>
    %39 = arith.addf %36, %38 : vector<128x128xf32>
    %cst_31 = arith.constant 0.000000e+00 : f32
    %40 = vector.broadcast %cst_31 : f32 to vector<128x128xf32>
    %41 = arith.maximumf %39, %40 : vector<128x128xf32>
    %c0_32 = arith.constant 0 : index
    %c0_33 = arith.constant 0 : index
    %42 = vector.load %arg15[%c0_32, %c0_33] : memref<136x128xf32, #tpu.memory_space<vmem>>, vector<128x128xf32>
    tpu.vector_store %arg15[%c0_32, %c0_33], %41 {strides = array<i32>} : memref<136x128xf32, #tpu.memory_space<vmem>>, vector<128x128xf32>,
    %cst_34 = arith.constant 0.000000e+00 : f32
    %43 = vector.broadcast %cst_34 : f32 to vector<8x128xf32>
    %c128 = arith.constant 128 : index
    %c0_35 = arith.constant 0 : index
    %44 = vector.load %arg15[%c128, %c0_35] : memref<136x128xf32, #tpu.memory_space<vmem>>, vector<8x128xf32>
    tpu.vector_store %arg15[%c128, %c0_35], %43 {strides = array<i32>} : memref<136x128xf32, #tpu.memory_space<vmem>>, vector<8x128xf32>,
    %c0_36 = arith.constant 0 : index
    %c0_37 = arith.constant 0 : index
    %45 = vector.load %arg15[%c0_36, %c0_37] : memref<136x128xf32, #tpu.memory_space<vmem>>, vector<128x128xf32>
    %c1_38 = arith.constant 1 : index
    %c0_39 = arith.constant 0 : index
    %46 = vector.load %arg15[%c1_38, %c0_39] : memref<136x128xf32, #tpu.memory_space<vmem>>, vector<128x128xf32>
    %47 = arith.maximumf %45, %46 : vector<128x128xf32>
    %c0_40 = arith.constant 0 : index
    %c0_41 = arith.constant 0 : index
    %48 = vector.load %arg16[%c0_40, %c0_41] : memref<136x128xf32, #tpu.memory_space<vmem>>, vector<128x128xf32>
    tpu.vector_store %arg16[%c0_40, %c0_41], %47 {strides = array<i32>} : memref<136x128xf32, #tpu.memory_space<vmem>>, vector<128x128xf32>,
    %cst_42 = arith.constant 0.000000e+00 : f32
    %49 = vector.broadcast %cst_42 : f32 to vector<8x128xf32>
    %c128_43 = arith.constant 128 : index
    %c0_44 = arith.constant 0 : index
    %50 = vector.load %arg16[%c128_43, %c0_44] : memref<136x128xf32, #tpu.memory_space<vmem>>, vector<8x128xf32>
    tpu.vector_store %arg16[%c128_43, %c0_44], %49 {strides = array<i32>} : memref<136x128xf32, #tpu.memory_space<vmem>>, vector<8x128xf32>,
    %c0_45 = arith.constant 0 : index
    %c0_46 = arith.constant 0 : index
    %51 = vector.load %arg16[%c0_45, %c0_46] : memref<136x128xf32, #tpu.memory_space<vmem>>, vector<128x128xf32>
    %52 = arith.truncf %51 : vector<128x128xf32> to vector<128x128xbf16>
    %c0_47 = arith.constant 0 : index
    %c0_48 = arith.constant 0 : index
    %c0_49 = arith.constant 0 : index
    %53 = vector.load %arg4[%c0_47, %c0_48, %c0_49] : memref<5x128x256xbf16, #tpu.memory_space<vmem>>, vector<1x128x256xbf16>
    %54 = vector.shape_cast %53 : vector<1x128x256xbf16> to vector<128x256xbf16>
    %cst_50 = arith.constant dense<0.000000e+00> : vector<128x256xf32>
    %55 = tpu.matmul %52, %54, %cst_50 {dimension_numbers = #tpu.dot_dimension_numbers<[1], [0], [0], [1], [0, 0, 1, 1], [], []>} : vector<128x128xbf16>, vector<128x256xbf16>, vector<128x256xf32> -> vector<128x256xf32>
    %c2_51 = arith.constant 2 : index
    %c0_52 = arith.constant 0 : index
    %56 = vector.load %arg16[%c2_51, %c0_52] : memref<136x128xf32, #tpu.memory_space<vmem>>, vector<128x128xf32>
    %57 = arith.truncf %56 : vector<128x128xf32> to vector<128x128xbf16>
    %c1_53 = arith.constant 1 : index
    %c0_54 = arith.constant 0 : index
    %c0_55 = arith.constant 0 : index
    %58 = vector.load %arg4[%c1_53, %c0_54, %c0_55] : memref<5x128x256xbf16, #tpu.memory_space<vmem>>, vector<1x128x256xbf16>
    %59 = vector.shape_cast %58 : vector<1x128x256xbf16> to vector<128x256xbf16>
    %cst_56 = arith.constant dense<0.000000e+00> : vector<128x256xf32>
    %60 = tpu.matmul %57, %59, %cst_56 {dimension_numbers = #tpu.dot_dimension_numbers<[1], [0], [0], [1], [0, 0, 1, 1], [], []>} : vector<128x128xbf16>, vector<128x256xbf16>, vector<128x256xf32> -> vector<128x256xf32>
    %61 = arith.addf %55, %60 : vector<128x256xf32>
    %c4_57 = arith.constant 4 : index
    %c0_58 = arith.constant 0 : index
    %62 = vector.load %arg16[%c4_57, %c0_58] : memref<136x128xf32, #tpu.memory_space<vmem>>, vector<128x128xf32>
    %63 = arith.truncf %62 : vector<128x128xf32> to vector<128x128xbf16>
    %c2_59 = arith.constant 2 : index
    %c0_60 = arith.constant 0 : index
    %c0_61 = arith.constant 0 : index
    %64 = vector.load %arg4[%c2_59, %c0_60, %c0_61] : memref<5x128x256xbf16, #tpu.memory_space<vmem>>, vector<1x128x256xbf16>
    %65 = vector.shape_cast %64 : vector<1x128x256xbf16> to vector<128x256xbf16>
    %cst_62 = arith.constant dense<0.000000e+00> : vector<128x256xf32>
    %66 = tpu.matmul %63, %65, %cst_62 {dimension_numbers = #tpu.dot_dimension_numbers<[1], [0], [0], [1], [0, 0, 1, 1], [], []>} : vector<128x128xbf16>, vector<128x256xbf16>, vector<128x256xf32> -> vector<128x256xf32>
    %67 = arith.addf %61, %66 : vector<128x256xf32>
    %c6 = arith.constant 6 : index
    %c0_63 = arith.constant 0 : index
    %68 = vector.load %arg16[%c6, %c0_63] : memref<136x128xf32, #tpu.memory_space<vmem>>, vector<128x128xf32>
    %69 = arith.truncf %68 : vector<128x128xf32> to vector<128x128xbf16>
    %c3_64 = arith.constant 3 : index
    %c0_65 = arith.constant 0 : index
    %c0_66 = arith.constant 0 : index
    %70 = vector.load %arg4[%c3_64, %c0_65, %c0_66] : memref<5x128x256xbf16, #tpu.memory_space<vmem>>, vector<1x128x256xbf16>
    %71 = vector.shape_cast %70 : vector<1x128x256xbf16> to vector<128x256xbf16>
    %cst_67 = arith.constant dense<0.000000e+00> : vector<128x256xf32>
    %72 = tpu.matmul %69, %71, %cst_67 {dimension_numbers = #tpu.dot_dimension_numbers<[1], [0], [0], [1], [0, 0, 1, 1], [], []>} : vector<128x128xbf16>, vector<128x256xbf16>, vector<128x256xf32> -> vector<128x256xf32>
    %73 = arith.addf %67, %72 : vector<128x256xf32>
    %c8 = arith.constant 8 : index
    %c0_68 = arith.constant 0 : index
    %74 = vector.load %arg16[%c8, %c0_68] : memref<136x128xf32, #tpu.memory_space<vmem>>, vector<128x128xf32>
    %75 = arith.truncf %74 : vector<128x128xf32> to vector<128x128xbf16>
    %c4_69 = arith.constant 4 : index
    %c0_70 = arith.constant 0 : index
    %c0_71 = arith.constant 0 : index
    %76 = vector.load %arg4[%c4_69, %c0_70, %c0_71] : memref<5x128x256xbf16, #tpu.memory_space<vmem>>, vector<1x128x256xbf16>
    %77 = vector.shape_cast %76 : vector<1x128x256xbf16> to vector<128x256xbf16>
    %cst_72 = arith.constant dense<0.000000e+00> : vector<128x256xf32>
    %78 = tpu.matmul %75, %77, %cst_72 {dimension_numbers = #tpu.dot_dimension_numbers<[1], [0], [0], [1], [0, 0, 1, 1], [], []>} : vector<128x128xbf16>, vector<128x256xbf16>, vector<128x256xf32> -> vector<128x256xf32>
    %79 = arith.addf %73, %78 : vector<128x256xf32>
    %80 = vector.extract_strided_slice %79 {offsets = [0, 0], sizes = [128, 128], strides = [1, 1]} : vector<128x256xf32> to vector<128x128xf32>
    %81 = vector.extract_strided_slice %79 {offsets = [0, 128], sizes = [128, 128], strides = [1, 1]} : vector<128x256xf32> to vector<128x128xf32>
    %82 = arith.maximumf %80, %81 : vector<128x128xf32>
    %c0_73 = arith.constant 0 : index
    %c0_74 = arith.constant 0 : index
    %83 = vector.load %arg5[%c0_73, %c0_74] : memref<1x128xf32, #tpu.memory_space<vmem>>, vector<1x128xf32>
    %84 = vector.broadcast %83 : vector<1x128xf32> to vector<128x128xf32>
    %85 = arith.addf %82, %84 : vector<128x128xf32>
    %cst_75 = arith.constant 0.000000e+00 : f32
    %86 = vector.broadcast %cst_75 : f32 to vector<128x128xf32>
    %87 = arith.maximumf %85, %86 : vector<128x128xf32>
    %88 = arith.truncf %87 : vector<128x128xf32> to vector<128x128xbf16>
    %cst_76 = arith.constant 0.000000e+00 : f32
    %89 = vector.broadcast %cst_76 : f32 to vector<4x128xf32>
    %c0_77 = arith.constant 0 : index
    %c0_78 = arith.constant 0 : index
    %c0_79 = arith.constant 0 : index
    %90 = vector.load %arg12[%c0_77, %c0_78, %c0_79] : memref<5x4x128xbf16, #tpu.memory_space<vmem>>, vector<1x4x128xbf16>
    %91 = vector.shape_cast %90 : vector<1x4x128xbf16> to vector<4x128xbf16>
    %cst_80 = arith.constant dense<0.000000e+00> : vector<4x128xf32>
    %92 = tpu.matmul %91, %88, %cst_80 {dimension_numbers = #tpu.dot_dimension_numbers<[1], [0], [0], [1], [0, 0, 1, 1], [], []>} : vector<4x128xbf16>, vector<128x128xbf16>, vector<4x128xf32> -> vector<4x128xf32>
    %c0_81 = arith.constant 0 : index
    %c0_82 = arith.constant 0 : index
    %c0_83 = arith.constant 0 : index
    %93 = vector.load %arg13[%c0_81, %c0_82, %c0_83] : memref<5x4x128xbf16, #tpu.memory_space<vmem>>, vector<1x4x128xbf16>
    %94 = vector.shape_cast %93 : vector<1x4x128xbf16> to vector<4x128xbf16>
    %cst_84 = arith.constant dense<0.000000e+00> : vector<4x128xf32>
    %95 = tpu.matmul %94, %88, %cst_84 {dimension_numbers = #tpu.dot_dimension_numbers<[1], [0], [0], [1], [0, 0, 1, 1], [], []>} : vector<4x128xbf16>, vector<128x128xbf16>, vector<4x128xf32> -> vector<4x128xf32>
    %96 = arith.maximumf %92, %95 : vector<4x128xf32>
    %97 = arith.truncf %96 : vector<4x128xf32> to vector<4x128xbf16>
    %c0_85 = arith.constant 0 : index
    %c0_86 = arith.constant 0 : index
    %c0_87 = arith.constant 0 : index
    %98 = vector.load %arg6[%c0_85, %c0_86, %c0_87] : memref<5x128x128xbf16, #tpu.memory_space<vmem>>, vector<1x128x128xbf16>
    %99 = vector.shape_cast %98 : vector<1x128x128xbf16> to vector<128x128xbf16>
    %cst_88 = arith.constant dense<0.000000e+00> : vector<4x128xf32>
    %100 = tpu.matmul %97, %99, %cst_88 {dimension_numbers = #tpu.dot_dimension_numbers<[1], [0], [0], [1], [0, 0, 1, 1], [], []>} : vector<4x128xbf16>, vector<128x128xbf16>, vector<4x128xf32> -> vector<4x128xf32>
    %101 = arith.addf %89, %100 : vector<4x128xf32>
    %c1_89 = arith.constant 1 : index
    %c0_90 = arith.constant 0 : index
    %c0_91 = arith.constant 0 : index
    %102 = vector.load %arg12[%c1_89, %c0_90, %c0_91] : memref<5x4x128xbf16, #tpu.memory_space<vmem>>, vector<1x4x128xbf16>
    %103 = vector.shape_cast %102 : vector<1x4x128xbf16> to vector<4x128xbf16>
    %cst_92 = arith.constant dense<0.000000e+00> : vector<4x128xf32>
    %104 = tpu.matmul %103, %88, %cst_92 {dimension_numbers = #tpu.dot_dimension_numbers<[1], [0], [0], [1], [0, 0, 1, 1], [], []>} : vector<4x128xbf16>, vector<128x128xbf16>, vector<4x128xf32> -> vector<4x128xf32>
    %c1_93 = arith.constant 1 : index
    %c0_94 = arith.constant 0 : index
    %c0_95 = arith.constant 0 : index
    %105 = vector.load %arg13[%c1_93, %c0_94, %c0_95] : memref<5x4x128xbf16, #tpu.memory_space<vmem>>, vector<1x4x128xbf16>
    %106 = vector.shape_cast %105 : vector<1x4x128xbf16> to vector<4x128xbf16>
    %cst_96 = arith.constant dense<0.000000e+00> : vector<4x128xf32>
    %107 = tpu.matmul %106, %88, %cst_96 {dimension_numbers = #tpu.dot_dimension_numbers<[1], [0], [0], [1], [0, 0, 1, 1], [], []>} : vector<4x128xbf16>, vector<128x128xbf16>, vector<4x128xf32> -> vector<4x128xf32>
    %108 = arith.maximumf %104, %107 : vector<4x128xf32>
    %109 = arith.truncf %108 : vector<4x128xf32> to vector<4x128xbf16>
    %c1_97 = arith.constant 1 : index
    %c0_98 = arith.constant 0 : index
    %c0_99 = arith.constant 0 : index
    %110 = vector.load %arg6[%c1_97, %c0_98, %c0_99] : memref<5x128x128xbf16, #tpu.memory_space<vmem>>, vector<1x128x128xbf16>
    %111 = vector.shape_cast %110 : vector<1x128x128xbf16> to vector<128x128xbf16>
    %cst_100 = arith.constant dense<0.000000e+00> : vector<4x128xf32>
    %112 = tpu.matmul %109, %111, %cst_100 {dimension_numbers = #tpu.dot_dimension_numbers<[1], [0], [0], [1], [0, 0, 1, 1], [], []>} : vector<4x128xbf16>, vector<128x128xbf16>, vector<4x128xf32> -> vector<4x128xf32>
    %113 = arith.addf %101, %112 : vector<4x128xf32>
    %c2_101 = arith.constant 2 : index
    %c0_102 = arith.constant 0 : index
    %c0_103 = arith.constant 0 : index
    %114 = vector.load %arg12[%c2_101, %c0_102, %c0_103] : memref<5x4x128xbf16, #tpu.memory_space<vmem>>, vector<1x4x128xbf16>
    %115 = vector.shape_cast %114 : vector<1x4x128xbf16> to vector<4x128xbf16>
    %cst_104 = arith.constant dense<0.000000e+00> : vector<4x128xf32>
    %116 = tpu.matmul %115, %88, %cst_104 {dimension_numbers = #tpu.dot_dimension_numbers<[1], [0], [0], [1], [0, 0, 1, 1], [], []>} : vector<4x128xbf16>, vector<128x128xbf16>, vector<4x128xf32> -> vector<4x128xf32>
    %c2_105 = arith.constant 2 : index
    %c0_106 = arith.constant 0 : index
    %c0_107 = arith.constant 0 : index
    %117 = vector.load %arg13[%c2_105, %c0_106, %c0_107] : memref<5x4x128xbf16, #tpu.memory_space<vmem>>, vector<1x4x128xbf16>
    %118 = vector.shape_cast %117 : vector<1x4x128xbf16> to vector<4x128xbf16>
    %cst_108 = arith.constant dense<0.000000e+00> : vector<4x128xf32>
    %119 = tpu.matmul %118, %88, %cst_108 {dimension_numbers = #tpu.dot_dimension_numbers<[1], [0], [0], [1], [0, 0, 1, 1], [], []>} : vector<4x128xbf16>, vector<128x128xbf16>, vector<4x128xf32> -> vector<4x128xf32>
    %120 = arith.maximumf %116, %119 : vector<4x128xf32>
    %121 = arith.truncf %120 : vector<4x128xf32> to vector<4x128xbf16>
    %c2_109 = arith.constant 2 : index
    %c0_110 = arith.constant 0 : index
    %c0_111 = arith.constant 0 : index
    %122 = vector.load %arg6[%c2_109, %c0_110, %c0_111] : memref<5x128x128xbf16, #tpu.memory_space<vmem>>, vector<1x128x128xbf16>
    %123 = vector.shape_cast %122 : vector<1x128x128xbf16> to vector<128x128xbf16>
    %cst_112 = arith.constant dense<0.000000e+00> : vector<4x128xf32>
    %124 = tpu.matmul %121, %123, %cst_112 {dimension_numbers = #tpu.dot_dimension_numbers<[1], [0], [0], [1], [0, 0, 1, 1], [], []>} : vector<4x128xbf16>, vector<128x128xbf16>, vector<4x128xf32> -> vector<4x128xf32>
    %125 = arith.addf %113, %124 : vector<4x128xf32>
    %c3_113 = arith.constant 3 : index
    %c0_114 = arith.constant 0 : index
    %c0_115 = arith.constant 0 : index
    %126 = vector.load %arg12[%c3_113, %c0_114, %c0_115] : memref<5x4x128xbf16, #tpu.memory_space<vmem>>, vector<1x4x128xbf16>
    %127 = vector.shape_cast %126 : vector<1x4x128xbf16> to vector<4x128xbf16>
    %cst_116 = arith.constant dense<0.000000e+00> : vector<4x128xf32>
    %128 = tpu.matmul %127, %88, %cst_116 {dimension_numbers = #tpu.dot_dimension_numbers<[1], [0], [0], [1], [0, 0, 1, 1], [], []>} : vector<4x128xbf16>, vector<128x128xbf16>, vector<4x128xf32> -> vector<4x128xf32>
    %c3_117 = arith.constant 3 : index
    %c0_118 = arith.constant 0 : index
    %c0_119 = arith.constant 0 : index
    %129 = vector.load %arg13[%c3_117, %c0_118, %c0_119] : memref<5x4x128xbf16, #tpu.memory_space<vmem>>, vector<1x4x128xbf16>
    %130 = vector.shape_cast %129 : vector<1x4x128xbf16> to vector<4x128xbf16>
    %cst_120 = arith.constant dense<0.000000e+00> : vector<4x128xf32>
    %131 = tpu.matmul %130, %88, %cst_120 {dimension_numbers = #tpu.dot_dimension_numbers<[1], [0], [0], [1], [0, 0, 1, 1], [], []>} : vector<4x128xbf16>, vector<128x128xbf16>, vector<4x128xf32> -> vector<4x128xf32>
    %132 = arith.maximumf %128, %131 : vector<4x128xf32>
    %133 = arith.truncf %132 : vector<4x128xf32> to vector<4x128xbf16>
    %c3_121 = arith.constant 3 : index
    %c0_122 = arith.constant 0 : index
    %c0_123 = arith.constant 0 : index
    %134 = vector.load %arg6[%c3_121, %c0_122, %c0_123] : memref<5x128x128xbf16, #tpu.memory_space<vmem>>, vector<1x128x128xbf16>
    %135 = vector.shape_cast %134 : vector<1x128x128xbf16> to vector<128x128xbf16>
    %cst_124 = arith.constant dense<0.000000e+00> : vector<4x128xf32>
    %136 = tpu.matmul %133, %135, %cst_124 {dimension_numbers = #tpu.dot_dimension_numbers<[1], [0], [0], [1], [0, 0, 1, 1], [], []>} : vector<4x128xbf16>, vector<128x128xbf16>, vector<4x128xf32> -> vector<4x128xf32>
    %137 = arith.addf %125, %136 : vector<4x128xf32>
    %c4_125 = arith.constant 4 : index
    %c0_126 = arith.constant 0 : index
    %c0_127 = arith.constant 0 : index
    %138 = vector.load %arg12[%c4_125, %c0_126, %c0_127] : memref<5x4x128xbf16, #tpu.memory_space<vmem>>, vector<1x4x128xbf16>
    %139 = vector.shape_cast %138 : vector<1x4x128xbf16> to vector<4x128xbf16>
    %cst_128 = arith.constant dense<0.000000e+00> : vector<4x128xf32>
    %140 = tpu.matmul %139, %88, %cst_128 {dimension_numbers = #tpu.dot_dimension_numbers<[1], [0], [0], [1], [0, 0, 1, 1], [], []>} : vector<4x128xbf16>, vector<128x128xbf16>, vector<4x128xf32> -> vector<4x128xf32>
    %c4_129 = arith.constant 4 : index
    %c0_130 = arith.constant 0 : index
    %c0_131 = arith.constant 0 : index
    %141 = vector.load %arg13[%c4_129, %c0_130, %c0_131] : memref<5x4x128xbf16, #tpu.memory_space<vmem>>, vector<1x4x128xbf16>
    %142 = vector.shape_cast %141 : vector<1x4x128xbf16> to vector<4x128xbf16>
    %cst_132 = arith.constant dense<0.000000e+00> : vector<4x128xf32>
    %143 = tpu.matmul %142, %88, %cst_132 {dimension_numbers = #tpu.dot_dimension_numbers<[1], [0], [0], [1], [0, 0, 1, 1], [], []>} : vector<4x128xbf16>, vector<128x128xbf16>, vector<4x128xf32> -> vector<4x128xf32>
    %144 = arith.maximumf %140, %143 : vector<4x128xf32>
    %145 = arith.truncf %144 : vector<4x128xf32> to vector<4x128xbf16>
    %c4_133 = arith.constant 4 : index
    %c0_134 = arith.constant 0 : index
    %c0_135 = arith.constant 0 : index
    %146 = vector.load %arg6[%c4_133, %c0_134, %c0_135] : memref<5x128x128xbf16, #tpu.memory_space<vmem>>, vector<1x128x128xbf16>
    %147 = vector.shape_cast %146 : vector<1x128x128xbf16> to vector<128x128xbf16>
    %cst_136 = arith.constant dense<0.000000e+00> : vector<4x128xf32>
    %148 = tpu.matmul %145, %147, %cst_136 {dimension_numbers = #tpu.dot_dimension_numbers<[1], [0], [0], [1], [0, 0, 1, 1], [], []>} : vector<4x128xbf16>, vector<128x128xbf16>, vector<4x128xf32> -> vector<4x128xf32>
    %149 = arith.addf %137, %148 : vector<4x128xf32>
    %c0_137 = arith.constant 0 : index
    %c0_138 = arith.constant 0 : index
    %150 = vector.load %arg7[%c0_137, %c0_138] : memref<1x128xf32, #tpu.memory_space<vmem>>, vector<1x128xf32>
    %151 = vector.broadcast %150 : vector<1x128xf32> to vector<4x128xf32>
    %152 = arith.addf %149, %151 : vector<4x128xf32>
    %cst_139 = arith.constant 0.000000e+00 : f32
    %153 = vector.broadcast %cst_139 : f32 to vector<4x128xf32>
    %154 = arith.maximumf %152, %153 : vector<4x128xf32>
    %155 = arith.truncf %154 : vector<4x128xf32> to vector<4x128xbf16>
    %c0_140 = arith.constant 0 : index
    %c0_141 = arith.constant 0 : index
    %156 = vector.load %arg8[%c0_140, %c0_141] : memref<128x128xbf16, #tpu.memory_space<vmem>>, vector<128x128xbf16>
    %cst_142 = arith.constant dense<0.000000e+00> : vector<4x128xf32>
    %157 = tpu.matmul %155, %156, %cst_142 {dimension_numbers = #tpu.dot_dimension_numbers<[1], [0], [0], [1], [0, 0, 1, 1], [], []>} : vector<4x128xbf16>, vector<128x128xbf16>, vector<4x128xf32> -> vector<4x128xf32>
    %c0_143 = arith.constant 0 : index
    %c0_144 = arith.constant 0 : index
    %158 = vector.load %arg9[%c0_143, %c0_144] : memref<1x128xf32, #tpu.memory_space<vmem>>, vector<1x128xf32>
    %159 = vector.broadcast %158 : vector<1x128xf32> to vector<4x128xf32>
    %160 = arith.addf %157, %159 : vector<4x128xf32>
    %cst_145 = arith.constant 0.000000e+00 : f32
    %161 = vector.broadcast %cst_145 : f32 to vector<4x128xf32>
    %162 = arith.maximumf %160, %161 : vector<4x128xf32>
    %163 = arith.truncf %162 : vector<4x128xf32> to vector<4x128xbf16>
    %c0_146 = arith.constant 0 : index
    %c0_147 = arith.constant 0 : index
    %164 = vector.load %arg10[%c0_146, %c0_147] : memref<128x128xbf16, #tpu.memory_space<vmem>>, vector<128x128xbf16>
    %cst_148 = arith.constant dense<0.000000e+00> : vector<4x128xf32>
    %165 = tpu.matmul %163, %164, %cst_148 {dimension_numbers = #tpu.dot_dimension_numbers<[1], [0], [0], [1], [0, 0, 1, 1], [], []>} : vector<4x128xbf16>, vector<128x128xbf16>, vector<4x128xf32> -> vector<4x128xf32>
    %c0_149 = arith.constant 0 : index
    %c0_150 = arith.constant 0 : index
    %166 = vector.load %arg11[%c0_149, %c0_150] : memref<1x128xf32, #tpu.memory_space<vmem>>, vector<1x128xf32>
    %167 = vector.broadcast %166 : vector<1x128xf32> to vector<4x128xf32>
    %168 = arith.addf %165, %167 : vector<4x128xf32>
    %c0_151 = arith.constant 0 : index
    %c0_152 = arith.constant 0 : index
    %c0_153 = arith.constant 0 : index
    %169 = vector.load %arg14[%c0_151, %c0_152, %c0_153] : memref<1x4x128xf32, #tpu.memory_space<vmem>>, vector<1x4x128xf32>
    %170 = vector.shape_cast %169 : vector<1x4x128xf32> to vector<4x128xf32>
    %171 = vector.shape_cast %168 : vector<4x128xf32> to vector<1x4x128xf32>
    tpu.vector_store %arg14[%c0_151, %c0_152, %c0_153], %171 {strides = array<i32>} : memref<1x4x128xf32, #tpu.memory_space<vmem>>, vector<1x4x128xf32>,
    return
  }
  func.func @transform_0(%arg0: i32) -> (i32, i32, i32) {
    %c0_i32 = arith.constant 0 : i32
    %c0_i32_0 = arith.constant 0 : i32
    %c0_i32_1 = arith.constant 0 : i32
    return %arg0, %c0_i32, %c0_i32_0 : i32, i32, i32
  }
  func.func @transform_1(%arg0: i32) -> (i32, i32, i32) {
    %c0_i32 = arith.constant 0 : i32
    %c0_i32_0 = arith.constant 0 : i32
    %c0_i32_1 = arith.constant 0 : i32
    %c0_i32_2 = arith.constant 0 : i32
    return %c0_i32, %c0_i32_0, %c0_i32_1 : i32, i32, i32
  }
  func.func @transform_2(%arg0: i32) -> (i32, i32) {
    %c0_i32 = arith.constant 0 : i32
    %c0_i32_0 = arith.constant 0 : i32
    %c0_i32_1 = arith.constant 0 : i32
    return %c0_i32, %c0_i32_0 : i32, i32
  }
  func.func @transform_3(%arg0: i32) -> (i32, i32, i32) {
    %c0_i32 = arith.constant 0 : i32
    %c0_i32_0 = arith.constant 0 : i32
    %c0_i32_1 = arith.constant 0 : i32
    %c0_i32_2 = arith.constant 0 : i32
    return %c0_i32, %c0_i32_0, %c0_i32_1 : i32, i32, i32
  }
  func.func @transform_4(%arg0: i32) -> (i32, i32) {
    %c0_i32 = arith.constant 0 : i32
    %c0_i32_0 = arith.constant 0 : i32
    %c0_i32_1 = arith.constant 0 : i32
    return %c0_i32, %c0_i32_0 : i32, i32
  }
  func.func @transform_5(%arg0: i32) -> (i32, i32, i32) {
    %c0_i32 = arith.constant 0 : i32
    %c0_i32_0 = arith.constant 0 : i32
    %c0_i32_1 = arith.constant 0 : i32
    %c0_i32_2 = arith.constant 0 : i32
    return %c0_i32, %c0_i32_0, %c0_i32_1 : i32, i32, i32
  }
  func.func @transform_6(%arg0: i32) -> (i32, i32) {
    %c0_i32 = arith.constant 0 : i32
    %c0_i32_0 = arith.constant 0 : i32
    %c0_i32_1 = arith.constant 0 : i32
    return %c0_i32, %c0_i32_0 : i32, i32
  }
  func.func @transform_7(%arg0: i32) -> (i32, i32) {
    %c0_i32 = arith.constant 0 : i32
    %c0_i32_0 = arith.constant 0 : i32
    %c0_i32_1 = arith.constant 0 : i32
    return %c0_i32, %c0_i32_0 : i32, i32
  }
  func.func @transform_8(%arg0: i32) -> (i32, i32) {
    %c0_i32 = arith.constant 0 : i32
    %c0_i32_0 = arith.constant 0 : i32
    %c0_i32_1 = arith.constant 0 : i32
    return %c0_i32, %c0_i32_0 : i32, i32
  }
  func.func @transform_9(%arg0: i32) -> (i32, i32) {
    %c0_i32 = arith.constant 0 : i32
    %c0_i32_0 = arith.constant 0 : i32
    %c0_i32_1 = arith.constant 0 : i32
    return %c0_i32, %c0_i32_0 : i32, i32
  }
  func.func @transform_10(%arg0: i32) -> (i32, i32) {
    %c0_i32 = arith.constant 0 : i32
    %c0_i32_0 = arith.constant 0 : i32
    %c0_i32_1 = arith.constant 0 : i32
    return %c0_i32, %c0_i32_0 : i32, i32
  }
  func.func @transform_11(%arg0: i32) -> (i32, i32, i32) {
    %c0_i32 = arith.constant 0 : i32
    %c0_i32_0 = arith.constant 0 : i32
    %c0_i32_1 = arith.constant 0 : i32
    %c0_i32_2 = arith.constant 0 : i32
    return %c0_i32, %c0_i32_0, %c0_i32_1 : i32, i32, i32
  }
  func.func @transform_12(%arg0: i32) -> (i32, i32, i32) {
    %c0_i32 = arith.constant 0 : i32
    %c0_i32_0 = arith.constant 0 : i32
    %c0_i32_1 = arith.constant 0 : i32
    %c0_i32_2 = arith.constant 0 : i32
    return %c0_i32, %c0_i32_0, %c0_i32_1 : i32, i32, i32
  }
  func.func @transform_13(%arg0: i32) -> (i32, i32, i32) {
    %c0_i32 = arith.constant 0 : i32
    %c0_i32_0 = arith.constant 0 : i32
    %c0_i32_1 = arith.constant 0 : i32
    return %arg0, %c0_i32, %c0_i32_0 : i32, i32, i32
  }
}

</mosaic_0001>

<llo_original>
// kernel: cifar_model_forward.1
$region0: #{cifar_model_forward.1}
  #allocation0 [shape = 'u32[]', space=smem, size = 0x4, offset = 0x4, fixed_abs, tag = 'smem constant byte address 0x4 - core index']
  #allocation1 [shape = 'u32[144,128]{1,0:T(1,128)}', space=vmem, size = 0x12000, scoped, tag = 'internal scratch']
  #allocation2 [shape = 'f32[136,128]{1,0:T(8,128)}', space=vmem, size = 0x11000, scoped, tag = 'scratch operand']
  #allocation3 [shape = 'f32[136,128]{1,0:T(8,128)}', space=vmem, size = 0x11000, scoped, tag = 'scratch operand']
  %s0 = inlined_call_operand.vmem [shape: f32[2,136,128], index: 0, kind: input, shape index: {}]
  %s1 = inlined_call_operand.vmem [shape: bf16[5,128,256], index: 1, kind: input, shape index: {}]
  %s2 = inlined_call_operand.vmem [shape: f32[1,128], index: 2, kind: input, shape index: {}]
  %s3 = inlined_call_operand.vmem [shape: bf16[5,128,256], index: 3, kind: input, shape index: {}]
  %s4 = inlined_call_operand.vmem [shape: f32[1,128], index: 4, kind: input, shape index: {}]
  %s5 = inlined_call_operand.vmem [shape: bf16[5,128,128], index: 5, kind: input, shape index: {}]
  %s6 = inlined_call_operand.vmem [shape: f32[1,128], index: 6, kind: input, shape index: {}]
  %s7 = inlined_call_operand.vmem [shape: bf16[128,128], index: 7, kind: input, shape index: {}]
  %s8 = inlined_call_operand.vmem [shape: f32[1,128], index: 8, kind: input, shape index: {}]
  %s9 = inlined_call_operand.vmem [shape: bf16[128,128], index: 9, kind: input, shape index: {}]
  %s10 = inlined_call_operand.vmem [shape: f32[1,128], index: 10, kind: input, shape index: {}]
  %s11 = inlined_call_operand.vmem [shape: bf16[5,4,128], index: 11, kind: input, shape index: {}]
  %s12 = inlined_call_operand.vmem [shape: bf16[5,4,128], index: 12, kind: input, shape index: {}]
  %s13 = inlined_call_operand.hbm [shape: f32[2,4,128], index: 13, kind: output, shape index: {}]
  %s14 = sld [smem:[#allocation0]]
  $region85: #{cifar_model_forward.1} parent=0
    _
  %s16 = ssub.s32 1, %s14
  %s17 = scalar_select 0, %s16, %s14
  $region1: #{cifar_model_forward.1} parent=0
    #allocation4 [shape = 'u8[4096]{0}', space=vmem, size = 0x1000, scoped, tag = 'output window, operand 0']
    #allocation5 [shape = 's32[2]{0}', space=sflag, size = 0x8, scoped, tag = 'scoped memory for cifar_model_forward.1']
    %18 = vsyncpa [#allocation5], 0
    %s19 = scalar_lea.sflag [#allocation5], 1
    %20 = vsyncpa %s19, 0
    loop: start=0, step=1, limit=4
    $region2: #{cifar_model_forward.1} parent=1 // loop_pre_header
      _
    $region3: #{cifar_model_forward.1} parent=1 // loop_header
      %s22 = sphi 0, %s26
      %p23 = scmp.ge.s32.totalorder %s22, 4
      %s32 = sphi 0, %s34
      %s35 = sphi 0, %s32
      %s36 = sphi 0, %s35
      %s52 = sphi 0, %s36
      %s56 = sphi 0, %s56
      %s58 = sphi 0, %s56
      %s59 = sphi 0, %s58
      %s73 = sphi 0, %s59
      %s77 = sphi 0, %s77
      %s79 = sphi 0, %s77
      %s80 = sphi 0, %s79
      %s94 = sphi 0, %s80
      %s98 = sphi 0, %s98
      %s100 = sphi 0, %s98
      %s101 = sphi 0, %s100
      %s115 = sphi 0, %s101
      %s119 = sphi 0, %s119
      %s121 = sphi 0, %s119
      %s122 = sphi 0, %s121
      %s136 = sphi 0, %s122
      %s140 = sphi 0, %s140
      %s142 = sphi 0, %s140
      %s143 = sphi 0, %s142
      %s157 = sphi 0, %s143
      %s161 = sphi 0, %s161
      %s163 = sphi 0, %s161
      %s164 = sphi 0, %s163
      %s178 = sphi 0, %s164
      %s182 = sphi 0, %s182
      %s184 = sphi 0, %s182
      %s185 = sphi 0, %s184
      %s199 = sphi 0, %s185
      %s203 = sphi 0, %s203
      %s205 = sphi 0, %s203
      %s206 = sphi 0, %s205
      %s220 = sphi 0, %s206
      %s224 = sphi 0, %s224
      %s226 = sphi 0, %s224
      %s227 = sphi 0, %s226
      %s241 = sphi 0, %s227
      %s245 = sphi 0, %s245
      %s247 = sphi 0, %s245
      %s248 = sphi 0, %s247
      %s262 = sphi 0, %s248
      %s266 = sphi 0, %s266
      %s268 = sphi 0, %s266
      %s269 = sphi 0, %s268
      %s283 = sphi 0, %s269
      %s287 = sphi 0, %s287
      %s289 = sphi 0, %s287
      %s290 = sphi 0, %s289
      %s304 = sphi 0, %s290
      %s310 = sphi 0, %s312
      %s313 = sphi 0, %s310
      %s314 = sphi 0, %s313
      %s330 = sphi 0, %s314
    $region4: #{cifar_model_forward.1} parent=1 // loop_header_branch
      %25 = sbr.rel (%p23) target = $region8
    $region5: #{cifar_model_forward.1} parent=1 // loop_body
      %s27 = ssub.s32 %s22, 1
      %s28 = ssub.s32 %s22, 2
      %s29 = sadd.s32 %s22, 1
      %s30 = ssub.s32 %s22, %s29
      %p31 = scmp.eq.s32.totalorder %s30, 0
      %s33 = sadd.s32 %s32, 1
      %s34 = scalar_select %p31, %s32, %s33
      %p37 = pneg %p31
      %p38 = scmp.eq.s32.totalorder %s22, 1
      %p39 = por %p37, %p38
      %p40 = scmp.ne.s32.totalorder %s32, %s35
      %p41 = scmp.eq.s32.totalorder %s22, 0
      %p42 = por %p40, %p41
      %p43 = scmp.ne.s32.totalorder %s32, %s35
      %p44 = scmp.eq.s32.totalorder %s27, 1
      %p45 = por %p43, %p44
      %p46 = scmp.ne.s32.totalorder %s35, %s36
      %p47 = scmp.eq.s32.totalorder %s27, 0
      %p48 = por %p46, %p47
      %p49 = scmp.ne.s32.totalorder %s35, %s36
      %p50 = scmp.eq.s32.totalorder %s28, 1
      %p51 = por %p49, %p50
      %p53 = scmp.ne.s32.totalorder %s36, %s52
      %p54 = scmp.eq.s32.totalorder %s28, 0
      %p55 = por %p53, %p54
      %s57 = sadd.s32 %s56, 1
      %p60 = scmp.eq.s32.totalorder %s22, 1
      %p61 = scmp.ne.s32.totalorder %s56, %s58
      %p62 = scmp.eq.s32.totalorder %s22, 0
      %p63 = por %p61, %p62
      %p64 = scmp.ne.s32.totalorder %s56, %s58
      %p65 = scmp.eq.s32.totalorder %s27, 1
      %p66 = por %p64, %p65
      %p67 = scmp.ne.s32.totalorder %s58, %s59
      %p68 = scmp.eq.s32.totalorder %s27, 0
      %p69 = por %p67, %p68
      %p70 = scmp.ne.s32.totalorder %s58, %s59
      %p71 = scmp.eq.s32.totalorder %s28, 1
      %p72 = por %p70, %p71
      %p74 = scmp.ne.s32.totalorder %s59, %s73
      %p75 = scmp.eq.s32.totalorder %s28, 0
      %p76 = por %p74, %p75
      %s78 = sadd.s32 %s77, 1
      %p81 = scmp.eq.s32.totalorder %s22, 1
      %p82 = scmp.ne.s32.totalorder %s77, %s79
      %p83 = scmp.eq.s32.totalorder %s22, 0
      %p84 = por %p82, %p83
      %p85 = scmp.ne.s32.totalorder %s77, %s79
      %p86 = scmp.eq.s32.totalorder %s27, 1
      %p87 = por %p85, %p86
      %p88 = scmp.ne.s32.totalorder %s79, %s80
      %p89 = scmp.eq.s32.totalorder %s27, 0
      %p90 = por %p88, %p89
      %p91 = scmp.ne.s32.totalorder %s79, %s80
      %p92 = scmp.eq.s32.totalorder %s28, 1
      %p93 = por %p91, %p92
      %p95 = scmp.ne.s32.totalorder %s80, %s94
      %p96 = scmp.eq.s32.totalorder %s28, 0
      %p97 = por %p95, %p96
      %s99 = sadd.s32 %s98, 1
      %p102 = scmp.eq.s32.totalorder %s22, 1
      %p103 = scmp.ne.s32.totalorder %s98, %s100
      %p104 = scmp.eq.s32.totalorder %s22, 0
      %p105 = por %p103, %p104
      %p106 = scmp.ne.s32.totalorder %s98, %s100
      %p107 = scmp.eq.s32.totalorder %s27, 1
      %p108 = por %p106, %p107
      %p109 = scmp.ne.s32.totalorder %s100, %s101
      %p110 = scmp.eq.s32.totalorder %s27, 0
      %p111 = por %p109, %p110
      %p112 = scmp.ne.s32.totalorder %s100, %s101
      %p113 = scmp.eq.s32.totalorder %s28, 1
      %p114 = por %p112, %p113
      %p116 = scmp.ne.s32.totalorder %s101, %s115
      %p117 = scmp.eq.s32.totalorder %s28, 0
      %p118 = por %p116, %p117
      %s120 = sadd.s32 %s119, 1
      %p123 = scmp.eq.s32.totalorder %s22, 1
      %p124 = scmp.ne.s32.totalorder %s119, %s121
      %p125 = scmp.eq.s32.totalorder %s22, 0
      %p126 = por %p124, %p125
      %p127 = scmp.ne.s32.totalorder %s119, %s121
      %p128 = scmp.eq.s32.totalorder %s27, 1
      %p129 = por %p127, %p128
      %p130 = scmp.ne.s32.totalorder %s121, %s122
      %p131 = scmp.eq.s32.totalorder %s27, 0
      %p132 = por %p130, %p131
      %p133 = scmp.ne.s32.totalorder %s121, %s122
      %p134 = scmp.eq.s32.totalorder %s28, 1
      %p135 = por %p133, %p134
      %p137 = scmp.ne.s32.totalorder %s122, %s136
      %p138 = scmp.eq.s32.totalorder %s28, 0
      %p139 = por %p137, %p138
      %s141 = sadd.s32 %s140, 1
      %p144 = scmp.eq.s32.totalorder %s22, 1
      %p145 = scmp.ne.s32.totalorder %s140, %s142
      %p146 = scmp.eq.s32.totalorder %s22, 0
      %p147 = por %p145, %p146
      %p148 = scmp.ne.s32.totalorder %s140, %s142
      %p149 = scmp.eq.s32.totalorder %s27, 1
      %p150 = por %p148, %p149
      %p151 = scmp.ne.s32.totalorder %s142, %s143
      %p152 = scmp.eq.s32.totalorder %s27, 0
      %p153 = por %p151, %p152
      %p154 = scmp.ne.s32.totalorder %s142, %s143
      %p155 = scmp.eq.s32.totalorder %s28, 1
      %p156 = por %p154, %p155
      %p158 = scmp.ne.s32.totalorder %s143, %s157
      %p159 = scmp.eq.s32.totalorder %s28, 0
      %p160 = por %p158, %p159
      %s162 = sadd.s32 %s161, 1
      %p165 = scmp.eq.s32.totalorder %s22, 1
      %p166 = scmp.ne.s32.totalorder %s161, %s163
      %p167 = scmp.eq.s32.totalorder %s22, 0
      %p168 = por %p166, %p167
      %p169 = scmp.ne.s32.totalorder %s161, %s163
      %p170 = scmp.eq.s32.totalorder %s27, 1
      %p171 = por %p169, %p170
      %p172 = scmp.ne.s32.totalorder %s163, %s164
      %p173 = scmp.eq.s32.totalorder %s27, 0
      %p174 = por %p172, %p173
      %p175 = scmp.ne.s32.totalorder %s163, %s164
      %p176 = scmp.eq.s32.totalorder %s28, 1
      %p177 = por %p175, %p176
      %p179 = scmp.ne.s32.totalorder %s164, %s178
      %p180 = scmp.eq.s32.totalorder %s28, 0
      %p181 = por %p179, %p180
      %s183 = sadd.s32 %s182, 1
      %p186 = scmp.eq.s32.totalorder %s22, 1
      %p187 = scmp.ne.s32.totalorder %s182, %s184
      %p188 = scmp.eq.s32.totalorder %s22, 0
      %p189 = por %p187, %p188
      %p190 = scmp.ne.s32.totalorder %s182, %s184
      %p191 = scmp.eq.s32.totalorder %s27, 1
      %p192 = por %p190, %p191
      %p193 = scmp.ne.s32.totalorder %s184, %s185
      %p194 = scmp.eq.s32.totalorder %s27, 0
      %p195 = por %p193, %p194
      %p196 = scmp.ne.s32.totalorder %s184, %s185
      %p197 = scmp.eq.s32.totalorder %s28, 1
      %p198 = por %p196, %p197
      %p200 = scmp.ne.s32.totalorder %s185, %s199
      %p201 = scmp.eq.s32.totalorder %s28, 0
      %p202 = por %p200, %p201
      %s204 = sadd.s32 %s203, 1
      %p207 = scmp.eq.s32.totalorder %s22, 1
      %p208 = scmp.ne.s32.totalorder %s203, %s205
      %p209 = scmp.eq.s32.totalorder %s22, 0
      %p210 = por %p208, %p209
      %p211 = scmp.ne.s32.totalorder %s203, %s205
      %p212 = scmp.eq.s32.totalorder %s27, 1
      %p213 = por %p211, %p212
      %p214 = scmp.ne.s32.totalorder %s205, %s206
      %p215 = scmp.eq.s32.totalorder %s27, 0
      %p216 = por %p214, %p215
      %p217 = scmp.ne.s32.totalorder %s205, %s206
      %p218 = scmp.eq.s32.totalorder %s28, 1
      %p219 = por %p217, %p218
      %p221 = scmp.ne.s32.totalorder %s206, %s220
      %p222 = scmp.eq.s32.totalorder %s28, 0
      %p223 = por %p221, %p222
      %s225 = sadd.s32 %s224, 1
      %p228 = scmp.eq.s32.totalorder %s22, 1
      %p229 = scmp.ne.s32.totalorder %s224, %s226
      %p230 = scmp.eq.s32.totalorder %s22, 0
      %p231 = por %p229, %p230
      %p232 = scmp.ne.s32.totalorder %s224, %s226
      %p233 = scmp.eq.s32.totalorder %s27, 1
      %p234 = por %p232, %p233
      %p235 = scmp.ne.s32.totalorder %s226, %s227
      %p236 = scmp.eq.s32.totalorder %s27, 0
      %p237 = por %p235, %p236
      %p238 = scmp.ne.s32.totalorder %s226, %s227
      %p239 = scmp.eq.s32.totalorder %s28, 1
      %p240 = por %p238, %p239
      %p242 = scmp.ne.s32.totalorder %s227, %s241
      %p243 = scmp.eq.s32.totalorder %s28, 0
      %p244 = por %p242, %p243
      %s246 = sadd.s32 %s245, 1
      %p249 = scmp.eq.s32.totalorder %s22, 1
      %p250 = scmp.ne.s32.totalorder %s245, %s247
      %p251 = scmp.eq.s32.totalorder %s22, 0
      %p252 = por %p250, %p251
      %p253 = scmp.ne.s32.totalorder %s245, %s247
      %p254 = scmp.eq.s32.totalorder %s27, 1
      %p255 = por %p253, %p254
      %p256 = scmp.ne.s32.totalorder %s247, %s248
      %p257 = scmp.eq.s32.totalorder %s27, 0
      %p258 = por %p256, %p257
      %p259 = scmp.ne.s32.totalorder %s247, %s248
      %p260 = scmp.eq.s32.totalorder %s28, 1
      %p261 = por %p259, %p260
      %p263 = scmp.ne.s32.totalorder %s248, %s262
      %p264 = scmp.eq.s32.totalorder %s28, 0
      %p265 = por %p263, %p264
      %s267 = sadd.s32 %s266, 1
      %p270 = scmp.eq.s32.totalorder %s22, 1
      %p271 = scmp.ne.s32.totalorder %s266, %s268
      %p272 = scmp.eq.s32.totalorder %s22, 0
      %p273 = por %p271, %p272
      %p274 = scmp.ne.s32.totalorder %s266, %s268
      %p275 = scmp.eq.s32.totalorder %s27, 1
      %p276 = por %p274, %p275
      %p277 = scmp.ne.s32.totalorder %s268, %s269
      %p278 = scmp.eq.s32.totalorder %s27, 0
      %p279 = por %p277, %p278
      %p280 = scmp.ne.s32.totalorder %s268, %s269
      %p281 = scmp.eq.s32.totalorder %s28, 1
      %p282 = por %p280, %p281
      %p284 = scmp.ne.s32.totalorder %s269, %s283
      %p285 = scmp.eq.s32.totalorder %s28, 0
      %p286 = por %p284, %p285
      %s288 = sadd.s32 %s287, 1
      %p291 = scmp.eq.s32.totalorder %s22, 1
      %p292 = scmp.ne.s32.totalorder %s287, %s289
      %p293 = scmp.eq.s32.totalorder %s22, 0
      %p294 = por %p292, %p293
      %p295 = scmp.ne.s32.totalorder %s287, %s289
      %p296 = scmp.eq.s32.totalorder %s27, 1
      %p297 = por %p295, %p296
      %p298 = scmp.ne.s32.totalorder %s289, %s290
      %p299 = scmp.eq.s32.totalorder %s27, 0
      %p300 = por %p298, %p299
      %p301 = scmp.ne.s32.totalorder %s289, %s290
      %p302 = scmp.eq.s32.totalorder %s28, 1
      %p303 = por %p301, %p302
      %p305 = scmp.ne.s32.totalorder %s290, %s304
      %p306 = scmp.eq.s32.totalorder %s28, 0
      %p307 = por %p305, %p306
      %s308 = ssub.s32 %s22, %s29
      %p309 = scmp.eq.s32.totalorder %s308, 0
      %s311 = sadd.s32 %s310, 1
      %s312 = scalar_select %p309, %s310, %s311
      %p315 = pneg %p309
      %p316 = scmp.eq.s32.totalorder %s22, 1
      %p317 = por %p315, %p316
      %p318 = scmp.ne.s32.totalorder %s310, %s313
      %p319 = scmp.eq.s32.totalorder %s22, 0
      %p320 = por %p318, %p319
      %p321 = scmp.ne.s32.totalorder %s310, %s313
      %p322 = scmp.eq.s32.totalorder %s27, 1
      %p323 = por %p321, %p322
      %p324 = scmp.ne.s32.totalorder %s313, %s314
      %p325 = scmp.eq.s32.totalorder %s27, 0
      %p326 = por %p324, %p325
      %p327 = scmp.ne.s32.totalorder %s313, %s314
      %p328 = scmp.eq.s32.totalorder %s28, 1
      %p329 = por %p327, %p328
      %p331 = scmp.ne.s32.totalorder %s314, %s330
      %p332 = scmp.eq.s32.totalorder %s28, 0
      %p333 = por %p331, %p332
      %p334 = scmp.le.s32.totalorder 1, %s22
      %p335 = scmp.lt.s32.totalorder %s22, 3
      %p336 = pnand %p334, %p335
      %p337 = pneg %p336
      // Predicated region
      $region9: #{cifar_model_forward.1} parent=5 // pred_check
        _
      $region10: #{cifar_model_forward.1} parent=5 // pred_check_branch
        %339 = sbr.rel (%p336) target = $region12
      $region11: #{cifar_model_forward.1} parent=5 // pred_region
        %s340 = ssub.s32 %s22, 1
        // Predicated region
        $region13: #{cifar_model_forward.1} parent=11 // pred_check
          %p341 = pneg %p69
        $region14: #{cifar_model_forward.1} parent=11 // pred_check_branch
          %343 = sbr.rel (%p341) target = $region16
        $region15: #{cifar_model_forward.1} parent=11 // pred_region
          _
        $region16: #{cifar_model_forward.1} parent=11 // pred_fallthru
          _
        // Predicated region
        $region17: #{cifar_model_forward.1} parent=11 // pred_check
          %p344 = pneg %p90
        $region18: #{cifar_model_forward.1} parent=11 // pred_check_branch
          %346 = sbr.rel (%p344) target = $region20
        $region19: #{cifar_model_forward.1} parent=11 // pred_region
          _
        $region20: #{cifar_model_forward.1} parent=11 // pred_fallthru
          _
        // Predicated region
        $region21: #{cifar_model_forward.1} parent=11 // pred_check
          %p347 = pneg %p111
        $region22: #{cifar_model_forward.1} parent=11 // pred_check_branch
          %349 = sbr.rel (%p347) target = $region24
        $region23: #{cifar_model_forward.1} parent=11 // pred_region
          _
        $region24: #{cifar_model_forward.1} parent=11 // pred_fallthru
          _
        // Predicated region
        $region25: #{cifar_model_forward.1} parent=11 // pred_check
          %p350 = pneg %p132
        $region26: #{cifar_model_forward.1} parent=11 // pred_check_branch
          %352 = sbr.rel (%p350) target = $region28
        $region27: #{cifar_model_forward.1} parent=11 // pred_region
          _
        $region28: #{cifar_model_forward.1} parent=11 // pred_fallthru
          _
        // Predicated region
        $region29: #{cifar_model_forward.1} parent=11 // pred_check
          %p353 = pneg %p153
        $region30: #{cifar_model_forward.1} parent=11 // pred_check_branch
          %355 = sbr.rel (%p353) target = $region32
        $region31: #{cifar_model_forward.1} parent=11 // pred_region
          _
        $region32: #{cifar_model_forward.1} parent=11 // pred_fallthru
          _
        // Predicated region
        $region33: #{cifar_model_forward.1} parent=11 // pred_check
          %p356 = pneg %p174
        $region34: #{cifar_model_forward.1} parent=11 // pred_check_branch
          %358 = sbr.rel (%p356) target = $region36
        $region35: #{cifar_model_forward.1} parent=11 // pred_region
          _
        $region36: #{cifar_model_forward.1} parent=11 // pred_fallthru
          _
        // Predicated region
        $region37: #{cifar_model_forward.1} parent=11 // pred_check
          %p359 = pneg %p195
        $region38: #{cifar_model_forward.1} parent=11 // pred_check_branch
          %361 = sbr.rel (%p359) target = $region40
        $region39: #{cifar_model_forward.1} parent=11 // pred_region
          _
        $region40: #{cifar_model_forward.1} parent=11 // pred_fallthru
          _
        // Predicated region
        $region41: #{cifar_model_forward.1} parent=11 // pred_check
          %p362 = pneg %p216
        $region42: #{cifar_model_forward.1} parent=11 // pred_check_branch
          %364 = sbr.rel (%p362) target = $region44
        $region43: #{cifar_model_forward.1} parent=11 // pred_region
          _
        $region44: #{cifar_model_forward.1} parent=11 // pred_fallthru
          _
        // Predicated region
        $region45: #{cifar_model_forward.1} parent=11 // pred_check
          %p365 = pneg %p237
        $region46: #{cifar_model_forward.1} parent=11 // pred_check_branch
          %367 = sbr.rel (%p365) target = $region48
        $region47: #{cifar_model_forward.1} parent=11 // pred_region
          _
        $region48: #{cifar_model_forward.1} parent=11 // pred_fallthru
          _
        // Predicated region
        $region49: #{cifar_model_forward.1} parent=11 // pred_check
          %p368 = pneg %p258
        $region50: #{cifar_model_forward.1} parent=11 // pred_check_branch
          %370 = sbr.rel (%p368) target = $region52
        $region51: #{cifar_model_forward.1} parent=11 // pred_region
          _
        $region52: #{cifar_model_forward.1} parent=11 // pred_fallthru
          _
        // Predicated region
        $region53: #{cifar_model_forward.1} parent=11 // pred_check
          %p371 = pneg %p279
        $region54: #{cifar_model_forward.1} parent=11 // pred_check_branch
          %373 = sbr.rel (%p371) target = $region56
        $region55: #{cifar_model_forward.1} parent=11 // pred_region
          _
        $region56: #{cifar_model_forward.1} parent=11 // pred_fallthru
          _
        // Predicated region
        $region57: #{cifar_model_forward.1} parent=11 // pred_check
          %p374 = pneg %p300
        $region58: #{cifar_model_forward.1} parent=11 // pred_check_branch
          %376 = sbr.rel (%p374) target = $region60
        $region59: #{cifar_model_forward.1} parent=11 // pred_region
          _
        $region60: #{cifar_model_forward.1} parent=11 // pred_fallthru
          _
      $region12: #{cifar_model_forward.1} parent=5 // pred_fallthru
        _
      %p377 = scmp.lt.s32.totalorder %s22, 2
      // Predicated region
      $region61: #{cifar_model_forward.1} parent=5 // pred_check
        %p378 = pneg %p377
      $region62: #{cifar_model_forward.1} parent=5 // pred_check_branch
        %380 = sbr.rel (%p378) target = $region64
      $region63: #{cifar_model_forward.1} parent=5 // pred_region
        // Predicated region
        $region65: #{cifar_model_forward.1} parent=63 // pred_check
          %p381 = pneg %p42
        $region66: #{cifar_model_forward.1} parent=63 // pred_check_branch
          %383 = sbr.rel (%p381) target = $region68
        $region67: #{cifar_model_forward.1} parent=63 // pred_region
          %p384 = scmp.lt.s32.totalorder %s22, 1
          %s385 = scalar_select %p384, %s22, 1
          %s386 = smul.addr %s385, 17
          %s387 = smul.addr %s386, 8
          %s388 = scalar_lea.vmem %s0, %s387
        $region68: #{cifar_model_forward.1} parent=63 // pred_fallthru
          _
      $region64: #{cifar_model_forward.1} parent=5 // pred_fallthru
        _
      %p389 = scmp.le.s32.totalorder 1, %s22
      %p390 = scmp.lt.s32.totalorder %s22, 3
      %p391 = pnand %p389, %p390
      %p392 = pneg %p391
      // Predicated region
      $region69: #{cifar_model_forward.1} parent=5 // pred_check
        _
      $region70: #{cifar_model_forward.1} parent=5 // pred_check_branch
        %394 = sbr.rel (%p391) target = $region72
      $region71: #{cifar_model_forward.1} parent=5 // pred_region
        %s395 = ssub.s32 %s22, 1
        %p396 = scmp.lt.s32.totalorder %s27, 1
        %s397 = scalar_select %p396, %s27, 1
        %s398 = smul.addr %s397, 17
        %s399 = smul.addr %s398, 8
        %s400 = scalar_lea.vmem %s0, %s399
        %p401 = pneg %p48
        %p402 = pneg %p45
        %p403 = pneg %p69
        %p404 = pneg %p66
        %p405 = pneg %p90
        %p406 = pneg %p87
        %p407 = pneg %p111
        %p408 = pneg %p108
        %p409 = pneg %p132
        %p410 = pneg %p129
        %p411 = pneg %p153
        %p412 = pneg %p150
        %p413 = pneg %p174
        %p414 = pneg %p171
        %p415 = pneg %p195
        %p416 = pneg %p192
        %p417 = pneg %p216
        %p418 = pneg %p213
        %p419 = pneg %p237
        %p420 = pneg %p234
        %p421 = pneg %p258
        %p422 = pneg %p255
        %p423 = pneg %p279
        %p424 = pneg %p276
        %p425 = pneg %p300
        %p426 = pneg %p297
        %p427 = pneg %p326
        %p428 = pneg %p323
        %s429 = sand.u32 %s313, 1
        %s430 = scalar_lea.sflag [#allocation5], %s429
        %s431 = sand.u32 %s313, 1
        %s432 = smul.addr %s431, 4
        %s433 = scalar_lea.vmem [#allocation4], %s432
        %p434 = scmp.lt.s32.totalorder %s27, 1
        %s435 = scalar_select %p434, %s27, 1
        %s436 = smul.addr %s435, 17
        %s437 = smul.addr %s436, 8
        %s438 = scalar_lea.vmem %s0, %s437
        %v440 = vld [vmem:[%s438] sm:$0xff]
        %v441 = vld [vmem:[%s438 + $0x8] sm:$0xff]
        %v442 = vld [vmem:[%s438 + $0x10] sm:$0xff]
        %v443 = vld [vmem:[%s438 + $0x18] sm:$0xff]
        %v444 = vld [vmem:[%s438 + $0x20] sm:$0xff]
        %v445 = vld [vmem:[%s438 + $0x28] sm:$0xff]
        %v446 = vld [vmem:[%s438 + $0x30] sm:$0xff]
        %v447 = vld [vmem:[%s438 + $0x38] sm:$0xff]
        %v448 = vld [vmem:[%s438 + $0x40] sm:$0xff]
        %v449 = vld [vmem:[%s438 + $0x48] sm:$0xff]
        %v450 = vld [vmem:[%s438 + $0x50] sm:$0xff]
        %v451 = vld [vmem:[%s438 + $0x58] sm:$0xff]
        %v452 = vld [vmem:[%s438 + $0x60] sm:$0xff]
        %v453 = vld [vmem:[%s438 + $0x68] sm:$0xff]
        %v454 = vld [vmem:[%s438 + $0x70] sm:$0xff]
        %v455 = vld [vmem:[%s438 + $0x78] sm:$0xff]
        %v456 = vpack.c.bf16 %v441, %v440
        %v457 = vpack.c.bf16 %v443, %v442
        %v458 = vpack.c.bf16 %v445, %v444
        %v459 = vpack.c.bf16 %v447, %v446
        %v460 = vpack.c.bf16 %v449, %v448
        %v461 = vpack.c.bf16 %v451, %v450
        %v462 = vpack.c.bf16 %v453, %v452
        %v463 = vpack.c.bf16 %v455, %v454
        %v464 = vld [vmem:[%s1] sm:$0xff]
        %v465 = vld [vmem:[%s1 + $0x8] sm:$0xff]
        %v466 = vld [vmem:[%s1 + $0x10] sm:$0xff]
        %v467 = vld [vmem:[%s1 + $0x18] sm:$0xff]
        %v468 = vld [vmem:[%s1 + $0x20] sm:$0xff]
        %v469 = vld [vmem:[%s1 + $0x28] sm:$0xff]
        %v470 = vld [vmem:[%s1 + $0x30] sm:$0xff]
        %v471 = vld [vmem:[%s1 + $0x38] sm:$0xff]
        %v472 = vld [vmem:[%s1 + $0x40] sm:$0xff]
        %v473 = vld [vmem:[%s1 + $0x48] sm:$0xff]
        %v474 = vld [vmem:[%s1 + $0x50] sm:$0xff]
        %v475 = vld [vmem:[%s1 + $0x58] sm:$0xff]
        %v476 = vld [vmem:[%s1 + $0x60] sm:$0xff]
        %v477 = vld [vmem:[%s1 + $0x68] sm:$0xff]
        %v478 = vld [vmem:[%s1 + $0x70] sm:$0xff]
        %v479 = vld [vmem:[%s1 + $0x78] sm:$0xff]
        %v480 = vld [vmem:[%s438 + $0x1] sm:$0xff]
        %v481 = vld [vmem:[%s438 + $0x9] sm:$0xff]
        %v482 = vld [vmem:[%s438 + $0x11] sm:$0xff]
        %v483 = vld [vmem:[%s438 + $0x19] sm:$0xff]
        %v484 = vld [vmem:[%s438 + $0x21] sm:$0xff]
        %v485 = vld [vmem:[%s438 + $0x29] sm:$0xff]
        %v486 = vld [vmem:[%s438 + $0x31] sm:$0xff]
        %v487 = vld [vmem:[%s438 + $0x39] sm:$0xff]
        %v488 = vld [vmem:[%s438 + $0x41] sm:$0xff]
        %v489 = vld [vmem:[%s438 + $0x49] sm:$0xff]
        %v490 = vld [vmem:[%s438 + $0x51] sm:$0xff]
        %v491 = vld [vmem:[%s438 + $0x59] sm:$0xff]
        %v492 = vld [vmem:[%s438 + $0x61] sm:$0xff]
        %v493 = vld [vmem:[%s438 + $0x69] sm:$0xff]
        %v494 = vld [vmem:[%s438 + $0x71] sm:$0xff]
        %v495 = vld [vmem:[%s438 + $0x79] sm:$0xff]
        %v496 = vpack.c.bf16 %v481, %v480
        %v497 = vpack.c.bf16 %v483, %v482
        %v498 = vpack.c.bf16 %v485, %v484
        %v499 = vpack.c.bf16 %v487, %v486
        %v500 = vpack.c.bf16 %v489, %v488
        %v501 = vpack.c.bf16 %v491, %v490
        %v502 = vpack.c.bf16 %v493, %v492
        %v503 = vpack.c.bf16 %v495, %v494
        %s504 = scalar_lea.vmem %s1, 128
        %v505 = vld [vmem:[%s504] sm:$0xff]
        %v506 = vld [vmem:[%s504 + $0x8] sm:$0xff]
        %v507 = vld [vmem:[%s504 + $0x10] sm:$0xff]
        %v508 = vld [vmem:[%s504 + $0x18] sm:$0xff]
        %v509 = vld [vmem:[%s504 + $0x20] sm:$0xff]
        %v510 = vld [vmem:[%s504 + $0x28] sm:$0xff]
        %v511 = vld [vmem:[%s504 + $0x30] sm:$0xff]
        %v512 = vld [vmem:[%s504 + $0x38] sm:$0xff]
        %v513 = vld [vmem:[%s504 + $0x40] sm:$0xff]
        %v514 = vld [vmem:[%s504 + $0x48] sm:$0xff]
        %v515 = vld [vmem:[%s504 + $0x50] sm:$0xff]
        %v516 = vld [vmem:[%s504 + $0x58] sm:$0xff]
        %v517 = vld [vmem:[%s504 + $0x60] sm:$0xff]
        %v518 = vld [vmem:[%s504 + $0x68] sm:$0xff]
        %v519 = vld [vmem:[%s504 + $0x70] sm:$0xff]
        %v520 = vld [vmem:[%s504 + $0x78] sm:$0xff]
        %v537 = vunpack.c.l.b16 %v505
        %v538 = vunpack.c.h.b16 %v505
        %v539 = vunpack.c.l.b16 %v506
        %v540 = vunpack.c.h.b16 %v506
        %v541 = vunpack.c.l.b16 %v507
        %v542 = vunpack.c.h.b16 %v507
        %v543 = vunpack.c.l.b16 %v508
        %v544 = vunpack.c.h.b16 %v508
        %v545 = vunpack.c.l.b16 %v509
        %v546 = vunpack.c.h.b16 %v509
        %v547 = vunpack.c.l.b16 %v510
        %v548 = vunpack.c.h.b16 %v510
        %v549 = vunpack.c.l.b16 %v511
        %v550 = vunpack.c.h.b16 %v511
        %v551 = vunpack.c.l.b16 %v512
        %v552 = vunpack.c.h.b16 %v512
        %v553 = vunpack.c.l.b16 %v513
        %v554 = vunpack.c.h.b16 %v513
        %v555 = vunpack.c.l.b16 %v514
        %v556 = vunpack.c.h.b16 %v514
        %v557 = vunpack.c.l.b16 %v515
        %v558 = vunpack.c.h.b16 %v515
        %v559 = vunpack.c.l.b16 %v516
        %v560 = vunpack.c.h.b16 %v516
        %v561 = vunpack.c.l.b16 %v517
        %v562 = vunpack.c.h.b16 %v517
        %v563 = vunpack.c.l.b16 %v518
        %v564 = vunpack.c.h.b16 %v518
        %v565 = vunpack.c.l.b16 %v519
        %v566 = vunpack.c.h.b16 %v519
        %v567 = vunpack.c.l.b16 %v520
        %v568 = vunpack.c.h.b16 %v520
        %v569 = vpack.c.b16 %v539, %v537
        %v570 = vpack.c.b16 %v540, %v538
        %v571 = vpack.c.b16 %v543, %v541
        %v572 = vpack.c.b16 %v544, %v542
        %v573 = vpack.c.b16 %v547, %v545
        %v574 = vpack.c.b16 %v548, %v546
        %v575 = vpack.c.b16 %v551, %v549
        %v576 = vpack.c.b16 %v552, %v550
        %v577 = vpack.c.b16 %v555, %v553
        %v578 = vpack.c.b16 %v556, %v554
        %v579 = vpack.c.b16 %v559, %v557
        %v580 = vpack.c.b16 %v560, %v558
        %v581 = vpack.c.b16 %v563, %v561
        %v582 = vpack.c.b16 %v564, %v562
        %v583 = vpack.c.b16 %v567, %v565
        %v584 = vpack.c.b16 %v568, %v566
        %601 = vmatprep.subr.bf16.mxu0 %v570
        %602 = vmatpush1.bf16.msra.mxu0 %v569
        %603 = vmatprep.subr.bf16.mxu0 %v572
        %604 = vmatpush1.bf16.msra.mxu0 %v571
        %605 = vmatprep.subr.bf16.mxu0 %v574
        %606 = vmatpush1.bf16.msra.mxu0 %v573
        %607 = vmatprep.subr.bf16.mxu0 %v576
        %608 = vmatpush1.bf16.msra.mxu0 %v575
        %609 = vmatprep.subr.bf16.mxu0 %v578
        %610 = vmatpush1.bf16.msra.mxu0 %v577
        %611 = vmatprep.subr.bf16.mxu0 %v580
        %612 = vmatpush1.bf16.msra.mxu0 %v579
        %613 = vmatprep.subr.bf16.mxu0 %v582
        %614 = vmatpush1.bf16.msra.mxu0 %v581
        %615 = vmatprep.subr.bf16.mxu0 %v584
        %616 = vmatpush1.bf16.msra.mxu0 %v583
        %617 = vmatprep.subr.bf16.mxu0 0
        %618 = vmatpush1.bf16.msra.mxu0 0
        %619 = vmatprep.subr.bf16.mxu0 0
        %620 = vmatpush1.bf16.msra.mxu0 0
        %621 = vmatprep.subr.bf16.mxu0 0
        %622 = vmatpush1.bf16.msra.mxu0 0
        %623 = vmatprep.subr.bf16.mxu0 0
        %624 = vmatpush1.bf16.msra.mxu0 0
        %625 = vmatprep.subr.bf16.mxu0 0
        %626 = vmatpush1.bf16.msra.mxu0 0
        %627 = vmatprep.subr.bf16.mxu0 0
        %628 = vmatpush1.bf16.msra.mxu0 0
        %629 = vmatprep.subr.bf16.mxu0 0
        %630 = vmatpush1.bf16.msra.mxu0 0
        %631 = vmatprep.subr.bf16.mxu0 0
        %632 = vmatpush1.bf16.msra.mxu0 0
        %633 = vmatprep.mubr.bf16.mxu0 0
        %634 = vmatmul.mubr.bf16.gmra.mrb[0].mxu0 %v496
        %v635 = vpop.f32.mrb[0].mxu0
        %v636 = vadd.f32 0.0, %v635
        %v637 = vpop.f32.mrb[0].mxu0
        %v638 = vadd.f32 0.0, %v637
        %v639 = vpop.f32.mrb[0].mxu0
        %v640 = vadd.f32 0.0, %v639
        %v641 = vpop.f32.mrb[0].mxu0
        %v642 = vadd.f32 0.0, %v641
        %643 = vmatprep.mubr.bf16.mxu0 0
        %644 = vmatmul.mubr.bf16.gmra.mrb[0].mxu0 %v497
        %v645 = vpop.f32.mrb[0].mxu0
        %v646 = vadd.f32 0.0, %v645
        %v647 = vpop.f32.mrb[0].mxu0
        %v648 = vadd.f32 0.0, %v647
        %v649 = vpop.f32.mrb[0].mxu0
        %v650 = vadd.f32 0.0, %v649
        %v651 = vpop.f32.mrb[0].mxu0
        %v652 = vadd.f32 0.0, %v651
        %653 = vmatprep.mubr.bf16.mxu0 0
        %654 = vmatmul.mubr.bf16.gmra.mrb[0].mxu0 %v498
        %v655 = vpop.f32.mrb[0].mxu0
        %v656 = vadd.f32 0.0, %v655
        %v657 = vpop.f32.mrb[0].mxu0
        %v658 = vadd.f32 0.0, %v657
        %v659 = vpop.f32.mrb[0].mxu0
        %v660 = vadd.f32 0.0, %v659
        %v661 = vpop.f32.mrb[0].mxu0
        %v662 = vadd.f32 0.0, %v661
        %663 = vmatprep.mubr.bf16.mxu0 0
        %664 = vmatmul.mubr.bf16.gmra.mrb[0].mxu0 %v499
        %v665 = vpop.f32.mrb[0].mxu0
        %v666 = vadd.f32 0.0, %v665
        %v667 = vpop.f32.mrb[0].mxu0
        %v668 = vadd.f32 0.0, %v667
        %v669 = vpop.f32.mrb[0].mxu0
        %v670 = vadd.f32 0.0, %v669
        %v671 = vpop.f32.mrb[0].mxu0
        %v672 = vadd.f32 0.0, %v671
        %673 = vmatprep.mubr.bf16.mxu0 0
        %674 = vmatmul.mubr.bf16.gmra.mrb[0].mxu0 %v500
        %v675 = vpop.f32.mrb[0].mxu0
        %v676 = vadd.f32 0.0, %v675
        %v677 = vpop.f32.mrb[0].mxu0
        %v678 = vadd.f32 0.0, %v677
        %v679 = vpop.f32.mrb[0].mxu0
        %v680 = vadd.f32 0.0, %v679
        %v681 = vpop.f32.mrb[0].mxu0
        %v682 = vadd.f32 0.0, %v681
        %683 = vmatprep.mubr.bf16.mxu0 0
        %684 = vmatmul.mubr.bf16.gmra.mrb[0].mxu0 %v501
        %v685 = vpop.f32.mrb[0].mxu0
        %v686 = vadd.f32 0.0, %v685
        %v687 = vpop.f32.mrb[0].mxu0
        %v688 = vadd.f32 0.0, %v687
        %v689 = vpop.f32.mrb[0].mxu0
        %v690 = vadd.f32 0.0, %v689
        %v691 = vpop.f32.mrb[0].mxu0
        %v692 = vadd.f32 0.0, %v691
        %693 = vmatprep.mubr.bf16.mxu0 0
        %694 = vmatmul.mubr.bf16.gmra.mrb[0].mxu0 %v502
        %v695 = vpop.f32.mrb[0].mxu0
        %v696 = vadd.f32 0.0, %v695
        %v697 = vpop.f32.mrb[0].mxu0
        %v698 = vadd.f32 0.0, %v697
        %v699 = vpop.f32.mrb[0].mxu0
        %v700 = vadd.f32 0.0, %v699
        %v701 = vpop.f32.mrb[0].mxu0
        %v702 = vadd.f32 0.0, %v701
        %703 = vmatprep.mubr.bf16.mxu0 0
        %704 = vmatmul.mubr.bf16.gmra.mrb[0].mxu0 %v503
        %v705 = vpop.f32.mrb[0].mxu0
        %v706 = vadd.f32 0.0, %v705
        %v707 = vpop.f32.mrb[0].mxu0
        %v708 = vadd.f32 0.0, %v707
        %v709 = vpop.f32.mrb[0].mxu0
        %v710 = vadd.f32 0.0, %v709
        %v711 = vpop.f32.mrb[0].mxu0
        %v712 = vadd.f32 0.0, %v711
        %713 = vdwg.mxu0
        %v730 = vunpack.c.l.b16 %v464
        %v731 = vunpack.c.h.b16 %v464
        %v732 = vunpack.c.l.b16 %v465
        %v733 = vunpack.c.h.b16 %v465
        %v734 = vunpack.c.l.b16 %v466
        %v735 = vunpack.c.h.b16 %v466
        %v736 = vunpack.c.l.b16 %v467
        %v737 = vunpack.c.h.b16 %v467
        %v738 = vunpack.c.l.b16 %v468
        %v739 = vunpack.c.h.b16 %v468
        %v740 = vunpack.c.l.b16 %v469
        %v741 = vunpack.c.h.b16 %v469
        %v742 = vunpack.c.l.b16 %v470
        %v743 = vunpack.c.h.b16 %v470
        %v744 = vunpack.c.l.b16 %v471
        %v745 = vunpack.c.h.b16 %v471
        %v746 = vunpack.c.l.b16 %v472
        %v747 = vunpack.c.h.b16 %v472
        %v748 = vunpack.c.l.b16 %v473
        %v749 = vunpack.c.h.b16 %v473
        %v750 = vunpack.c.l.b16 %v474
        %v751 = vunpack.c.h.b16 %v474
        %v752 = vunpack.c.l.b16 %v475
        %v753 = vunpack.c.h.b16 %v475
        %v754 = vunpack.c.l.b16 %v476
        %v755 = vunpack.c.h.b16 %v476
        %v756 = vunpack.c.l.b16 %v477
        %v757 = vunpack.c.h.b16 %v477
        %v758 = vunpack.c.l.b16 %v478
        %v759 = vunpack.c.h.b16 %v478
        %v760 = vunpack.c.l.b16 %v479
        %v761 = vunpack.c.h.b16 %v479
        %v762 = vpack.c.b16 %v732, %v730
        %v763 = vpack.c.b16 %v733, %v731
        %v764 = vpack.c.b16 %v736, %v734
        %v765 = vpack.c.b16 %v737, %v735
        %v766 = vpack.c.b16 %v740, %v738
        %v767 = vpack.c.b16 %v741, %v739
        %v768 = vpack.c.b16 %v744, %v742
        %v769 = vpack.c.b16 %v745, %v743
        %v770 = vpack.c.b16 %v748, %v746
        %v771 = vpack.c.b16 %v749, %v747
        %v772 = vpack.c.b16 %v752, %v750
        %v773 = vpack.c.b16 %v753, %v751
        %v774 = vpack.c.b16 %v756, %v754
        %v775 = vpack.c.b16 %v757, %v755
        %v776 = vpack.c.b16 %v760, %v758
        %v777 = vpack.c.b16 %v761, %v759
        %794 = vmatprep.subr.bf16.mxu0 %v763
        %795 = vmatpush1.bf16.msra.mxu0 %v762
        %796 = vmatprep.subr.bf16.mxu0 %v765
        %797 = vmatpush1.bf16.msra.mxu0 %v764
        %798 = vmatprep.subr.bf16.mxu0 %v767
        %799 = vmatpush1.bf16.msra.mxu0 %v766
        %800 = vmatprep.subr.bf16.mxu0 %v769
        %801 = vmatpush1.bf16.msra.mxu0 %v768
        %802 = vmatprep.subr.bf16.mxu0 %v771
        %803 = vmatpush1.bf16.msra.mxu0 %v770
        %804 = vmatprep.subr.bf16.mxu0 %v773
        %805 = vmatpush1.bf16.msra.mxu0 %v772
        %806 = vmatprep.subr.bf16.mxu0 %v775
        %807 = vmatpush1.bf16.msra.mxu0 %v774
        %808 = vmatprep.subr.bf16.mxu0 %v777
        %809 = vmatpush1.bf16.msra.mxu0 %v776
        %810 = vmatprep.subr.bf16.mxu0 0
        %811 = vmatpush1.bf16.msra.mxu0 0
        %812 = vmatprep.subr.bf16.mxu0 0
        %813 = vmatpush1.bf16.msra.mxu0 0
        %814 = vmatprep.subr.bf16.mxu0 0
        %815 = vmatpush1.bf16.msra.mxu0 0
        %816 = vmatprep.subr.bf16.mxu0 0
        %817 = vmatpush1.bf16.msra.mxu0 0
        %818 = vmatprep.subr.bf16.mxu0 0
        %819 = vmatpush1.bf16.msra.mxu0 0
        %820 = vmatprep.subr.bf16.mxu0 0
        %821 = vmatpush1.bf16.msra.mxu0 0
        %822 = vmatprep.subr.bf16.mxu0 0
        %823 = vmatpush1.bf16.msra.mxu0 0
        %824 = vmatprep.subr.bf16.mxu0 0
        %825 = vmatpush1.bf16.msra.mxu0 0
        %826 = vmatprep.mubr.bf16.mxu0 0
        %827 = vmatmul.mubr.bf16.gmra.mrb[0].mxu0 %v456
        %v828 = vpop.f32.mrb[0].mxu0
        %v829 = vadd.f32 %v636, %v828
        %v830 = vpop.f32.mrb[0].mxu0
        %v831 = vadd.f32 %v638, %v830
        %v832 = vpop.f32.mrb[0].mxu0
        %v833 = vadd.f32 %v640, %v832
        %v834 = vpop.f32.mrb[0].mxu0
        %v835 = vadd.f32 %v642, %v834
        %836 = vmatprep.mubr.bf16.mxu0 0
        %837 = vmatmul.mubr.bf16.gmra.mrb[0].mxu0 %v457
        %v838 = vpop.f32.mrb[0].mxu0
        %v839 = vadd.f32 %v646, %v838
        %v840 = vpop.f32.mrb[0].mxu0
        %v841 = vadd.f32 %v648, %v840
        %v842 = vpop.f32.mrb[0].mxu0
        %v843 = vadd.f32 %v650, %v842
        %v844 = vpop.f32.mrb[0].mxu0
        %v845 = vadd.f32 %v652, %v844
        %846 = vmatprep.mubr.bf16.mxu0 0
        %847 = vmatmul.mubr.bf16.gmra.mrb[0].mxu0 %v458
        %v848 = vpop.f32.mrb[0].mxu0
        %v849 = vadd.f32 %v656, %v848
        %v850 = vpop.f32.mrb[0].mxu0
        %v851 = vadd.f32 %v658, %v850
        %v852 = vpop.f32.mrb[0].mxu0
        %v853 = vadd.f32 %v660, %v852
        %v854 = vpop.f32.mrb[0].mxu0
        %v855 = vadd.f32 %v662, %v854
        %856 = vmatprep.mubr.bf16.mxu0 0
        %857 = vmatmul.mubr.bf16.gmra.mrb[0].mxu0 %v459
        %v858 = vpop.f32.mrb[0].mxu0
        %v859 = vadd.f32 %v666, %v858
        %v860 = vpop.f32.mrb[0].mxu0
        %v861 = vadd.f32 %v668, %v860
        %v862 = vpop.f32.mrb[0].mxu0
        %v863 = vadd.f32 %v670, %v862
        %v864 = vpop.f32.mrb[0].mxu0
        %v865 = vadd.f32 %v672, %v864
        %866 = vmatprep.mubr.bf16.mxu0 0
        %867 = vmatmul.mubr.bf16.gmra.mrb[0].mxu0 %v460
        %v868 = vpop.f32.mrb[0].mxu0
        %v869 = vadd.f32 %v676, %v868
        %v870 = vpop.f32.mrb[0].mxu0
        %v871 = vadd.f32 %v678, %v870
        %v872 = vpop.f32.mrb[0].mxu0
        %v873 = vadd.f32 %v680, %v872
        %v874 = vpop.f32.mrb[0].mxu0
        %v875 = vadd.f32 %v682, %v874
        %876 = vmatprep.mubr.bf16.mxu0 0
        %877 = vmatmul.mubr.bf16.gmra.mrb[0].mxu0 %v461
        %v878 = vpop.f32.mrb[0].mxu0
        %v879 = vadd.f32 %v686, %v878
        %v880 = vpop.f32.mrb[0].mxu0
        %v881 = vadd.f32 %v688, %v880
        %v882 = vpop.f32.mrb[0].mxu0
        %v883 = vadd.f32 %v690, %v882
        %v884 = vpop.f32.mrb[0].mxu0
        %v885 = vadd.f32 %v692, %v884
        %886 = vmatprep.mubr.bf16.mxu0 0
        %887 = vmatmul.mubr.bf16.gmra.mrb[0].mxu0 %v462
        %v888 = vpop.f32.mrb[0].mxu0
        %v889 = vadd.f32 %v696, %v888
        %v890 = vpop.f32.mrb[0].mxu0
        %v891 = vadd.f32 %v698, %v890
        %v892 = vpop.f32.mrb[0].mxu0
        %v893 = vadd.f32 %v700, %v892
        %v894 = vpop.f32.mrb[0].mxu0
        %v895 = vadd.f32 %v702, %v894
        %896 = vmatprep.mubr.bf16.mxu0 0
        %897 = vmatmul.mubr.bf16.gmra.mrb[0].mxu0 %v463
        %v898 = vpop.f32.mrb[0].mxu0
        %v899 = vadd.f32 %v706, %v898
        %v900 = vpop.f32.mrb[0].mxu0
        %v901 = vadd.f32 %v708, %v900
        %v902 = vpop.f32.mrb[0].mxu0
        %v903 = vadd.f32 %v710, %v902
        %v904 = vpop.f32.mrb[0].mxu0
        %v905 = vadd.f32 %v712, %v904
        %906 = vdwg.mxu0
        %v907 = vld [vmem:[%s438 + $0x2] sm:$0xff]
        %v908 = vld [vmem:[%s438 + $0xa] sm:$0xff]
        %v909 = vld [vmem:[%s438 + $0x12] sm:$0xff]
        %v910 = vld [vmem:[%s438 + $0x1a] sm:$0xff]
        %v911 = vld [vmem:[%s438 + $0x22] sm:$0xff]
        %v912 = vld [vmem:[%s438 + $0x2a] sm:$0xff]
        %v913 = vld [vmem:[%s438 + $0x32] sm:$0xff]
        %v914 = vld [vmem:[%s438 + $0x3a] sm:$0xff]
        %v915 = vld [vmem:[%s438 + $0x42] sm:$0xff]
        %v916 = vld [vmem:[%s438 + $0x4a] sm:$0xff]
        %v917 = vld [vmem:[%s438 + $0x52] sm:$0xff]
        %v918 = vld [vmem:[%s438 + $0x5a] sm:$0xff]
        %v919 = vld [vmem:[%s438 + $0x62] sm:$0xff]
        %v920 = vld [vmem:[%s438 + $0x6a] sm:$0xff]
        %v921 = vld [vmem:[%s438 + $0x72] sm:$0xff]
        %v922 = vld [vmem:[%s438 + $0x7a] sm:$0xff]
        %v923 = vpack.c.bf16 %v908, %v907
        %v924 = vpack.c.bf16 %v910, %v909
        %v925 = vpack.c.bf16 %v912, %v911
        %v926 = vpack.c.bf16 %v914, %v913
        %v927 = vpack.c.bf16 %v916, %v915
        %v928 = vpack.c.bf16 %v918, %v917
        %v929 = vpack.c.bf16 %v920, %v919
        %v930 = vpack.c.bf16 %v922, %v921
        %s931 = scalar_lea.vmem %s1, 256
        %v932 = vld [vmem:[%s931] sm:$0xff]
        %v933 = vld [vmem:[%s931 + $0x8] sm:$0xff]
        %v934 = vld [vmem:[%s931 + $0x10] sm:$0xff]
        %v935 = vld [vmem:[%s931 + $0x18] sm:$0xff]
        %v936 = vld [vmem:[%s931 + $0x20] sm:$0xff]
        %v937 = vld [vmem:[%s931 + $0x28] sm:$0xff]
        %v938 = vld [vmem:[%s931 + $0x30] sm:$0xff]
        %v939 = vld [vmem:[%s931 + $0x38] sm:$0xff]
        %v940 = vld [vmem:[%s931 + $0x40] sm:$0xff]
        %v941 = vld [vmem:[%s931 + $0x48] sm:$0xff]
        %v942 = vld [vmem:[%s931 + $0x50] sm:$0xff]
        %v943 = vld [vmem:[%s931 + $0x58] sm:$0xff]
        %v944 = vld [vmem:[%s931 + $0x60] sm:$0xff]
        %v945 = vld [vmem:[%s931 + $0x68] sm:$0xff]
        %v946 = vld [vmem:[%s931 + $0x70] sm:$0xff]
        %v947 = vld [vmem:[%s931 + $0x78] sm:$0xff]
        %v964 = vunpack.c.l.b16 %v932
        %v965 = vunpack.c.h.b16 %v932
        %v966 = vunpack.c.l.b16 %v933
        %v967 = vunpack.c.h.b16 %v933
        %v968 = vunpack.c.l.b16 %v934
        %v969 = vunpack.c.h.b16 %v934
        %v970 = vunpack.c.l.b16 %v935
        %v971 = vunpack.c.h.b16 %v935
        %v972 = vunpack.c.l.b16 %v936
        %v973 = vunpack.c.h.b16 %v936
        %v974 = vunpack.c.l.b16 %v937
        %v975 = vunpack.c.h.b16 %v937
        %v976 = vunpack.c.l.b16 %v938
        %v977 = vunpack.c.h.b16 %v938
        %v978 = vunpack.c.l.b16 %v939
        %v979 = vunpack.c.h.b16 %v939
        %v980 = vunpack.c.l.b16 %v940
        %v981 = vunpack.c.h.b16 %v940
        %v982 = vunpack.c.l.b16 %v941
        %v983 = vunpack.c.h.b16 %v941
        %v984 = vunpack.c.l.b16 %v942
        %v985 = vunpack.c.h.b16 %v942
        %v986 = vunpack.c.l.b16 %v943
        %v987 = vunpack.c.h.b16 %v943
        %v988 = vunpack.c.l.b16 %v944
        %v989 = vunpack.c.h.b16 %v944
        %v990 = vunpack.c.l.b16 %v945
        %v991 = vunpack.c.h.b16 %v945
        %v992 = vunpack.c.l.b16 %v946
        %v993 = vunpack.c.h.b16 %v946
        %v994 = vunpack.c.l.b16 %v947
        %v995 = vunpack.c.h.b16 %v947
        %v996 = vpack.c.b16 %v966, %v964
        %v997 = vpack.c.b16 %v967, %v965
        %v998 = vpack.c.b16 %v970, %v968
        %v999 = vpack.c.b16 %v971, %v969
        %v1000 = vpack.c.b16 %v974, %v972
        %v1001 = vpack.c.b16 %v975, %v973
        %v1002 = vpack.c.b16 %v978, %v976
        %v1003 = vpack.c.b16 %v979, %v977
        %v1004 = vpack.c.b16 %v982, %v980
        %v1005 = vpack.c.b16 %v983, %v981
        %v1006 = vpack.c.b16 %v986, %v984
        %v1007 = vpack.c.b16 %v987, %v985
        %v1008 = vpack.c.b16 %v990, %v988
        %v1009 = vpack.c.b16 %v991, %v989
        %v1010 = vpack.c.b16 %v994, %v992
        %v1011 = vpack.c.b16 %v995, %v993
        %1028 = vmatprep.subr.bf16.mxu0 %v997
        %1029 = vmatpush1.bf16.msra.mxu0 %v996
        %1030 = vmatprep.subr.bf16.mxu0 %v999
        %1031 = vmatpush1.bf16.msra.mxu0 %v998
        %1032 = vmatprep.subr.bf16.mxu0 %v1001
        %1033 = vmatpush1.bf16.msra.mxu0 %v1000
        %1034 = vmatprep.subr.bf16.mxu0 %v1003
        %1035 = vmatpush1.bf16.msra.mxu0 %v1002
        %1036 = vmatprep.subr.bf16.mxu0 %v1005
        %1037 = vmatpush1.bf16.msra.mxu0 %v1004
        %1038 = vmatprep.subr.bf16.mxu0 %v1007
        %1039 = vmatpush1.bf16.msra.mxu0 %v1006
        %1040 = vmatprep.subr.bf16.mxu0 %v1009
        %1041 = vmatpush1.bf16.msra.mxu0 %v1008
        %1042 = vmatprep.subr.bf16.mxu0 %v1011
        %1043 = vmatpush1.bf16.msra.mxu0 %v1010
        %1044 = vmatprep.subr.bf16.mxu0 0
        %1045 = vmatpush1.bf16.msra.mxu0 0
        %1046 = vmatprep.subr.bf16.mxu0 0
        %1047 = vmatpush1.bf16.msra.mxu0 0
        %1048 = vmatprep.subr.bf16.mxu0 0
        %1049 = vmatpush1.bf16.msra.mxu0 0
        %1050 = vmatprep.subr.bf16.mxu0 0
        %1051 = vmatpush1.bf16.msra.mxu0 0
        %1052 = vmatprep.subr.bf16.mxu0 0
        %1053 = vmatpush1.bf16.msra.mxu0 0
        %1054 = vmatprep.subr.bf16.mxu0 0
        %1055 = vmatpush1.bf16.msra.mxu0 0
        %1056 = vmatprep.subr.bf16.mxu0 0
        %1057 = vmatpush1.bf16.msra.mxu0 0
        %1058 = vmatprep.subr.bf16.mxu0 0
        %1059 = vmatpush1.bf16.msra.mxu0 0
        %1060 = vmatprep.mubr.bf16.mxu0 0
        %1061 = vmatmul.mubr.bf16.gmra.mrb[0].mxu0 %v923
        %v1062 = vpop.f32.mrb[0].mxu0
        %v1063 = vadd.f32 0.0, %v1062
        %v1064 = vpop.f32.mrb[0].mxu0
        %v1065 = vadd.f32 0.0, %v1064
        %v1066 = vpop.f32.mrb[0].mxu0
        %v1067 = vadd.f32 0.0, %v1066
        %v1068 = vpop.f32.mrb[0].mxu0
        %v1069 = vadd.f32 0.0, %v1068
        %1070 = vmatprep.mubr.bf16.mxu0 0
        %1071 = vmatmul.mubr.bf16.gmra.mrb[0].mxu0 %v924
        %v1072 = vpop.f32.mrb[0].mxu0
        %v1073 = vadd.f32 0.0, %v1072
        %v1074 = vpop.f32.mrb[0].mxu0
        %v1075 = vadd.f32 0.0, %v1074
        %v1076 = vpop.f32.mrb[0].mxu0
        %v1077 = vadd.f32 0.0, %v1076
        %v1078 = vpop.f32.mrb[0].mxu0
        %v1079 = vadd.f32 0.0, %v1078
        %1080 = vmatprep.mubr.bf16.mxu0 0
        %1081 = vmatmul.mubr.bf16.gmra.mrb[0].mxu0 %v925
        %v1082 = vpop.f32.mrb[0].mxu0
        %v1083 = vadd.f32 0.0, %v1082
        %v1084 = vpop.f32.mrb[0].mxu0
        %v1085 = vadd.f32 0.0, %v1084
        %v1086 = vpop.f32.mrb[0].mxu0
        %v1087 = vadd.f32 0.0, %v1086
        %v1088 = vpop.f32.mrb[0].mxu0
        %v1089 = vadd.f32 0.0, %v1088
        %1090 = vmatprep.mubr.bf16.mxu0 0
        %1091 = vmatmul.mubr.bf16.gmra.mrb[0].mxu0 %v926
        %v1092 = vpop.f32.mrb[0].mxu0
        %v1093 = vadd.f32 0.0, %v1092
        %v1094 = vpop.f32.mrb[0].mxu0
        %v1095 = vadd.f32 0.0, %v1094
        %v1096 = vpop.f32.mrb[0].mxu0
        %v1097 = vadd.f32 0.0, %v1096
        %v1098 = vpop.f32.mrb[0].mxu0
        %v1099 = vadd.f32 0.0, %v1098
        %1100 = vmatprep.mubr.bf16.mxu0 0
        %1101 = vmatmul.mubr.bf16.gmra.mrb[0].mxu0 %v927
        %v1102 = vpop.f32.mrb[0].mxu0
        %v1103 = vadd.f32 0.0, %v1102
        %v1104 = vpop.f32.mrb[0].mxu0
        %v1105 = vadd.f32 0.0, %v1104
        %v1106 = vpop.f32.mrb[0].mxu0
        %v1107 = vadd.f32 0.0, %v1106
        %v1108 = vpop.f32.mrb[0].mxu0
        %v1109 = vadd.f32 0.0, %v1108
        %1110 = vmatprep.mubr.bf16.mxu0 0
        %1111 = vmatmul.mubr.bf16.gmra.mrb[0].mxu0 %v928
        %v1112 = vpop.f32.mrb[0].mxu0
        %v1113 = vadd.f32 0.0, %v1112
        %v1114 = vpop.f32.mrb[0].mxu0
        %v1115 = vadd.f32 0.0, %v1114
        %v1116 = vpop.f32.mrb[0].mxu0
        %v1117 = vadd.f32 0.0, %v1116
        %v1118 = vpop.f32.mrb[0].mxu0
        %v1119 = vadd.f32 0.0, %v1118
        %1120 = vmatprep.mubr.bf16.mxu0 0
        %1121 = vmatmul.mubr.bf16.gmra.mrb[0].mxu0 %v929
        %v1122 = vpop.f32.mrb[0].mxu0
        %v1123 = vadd.f32 0.0, %v1122
        %v1124 = vpop.f32.mrb[0].mxu0
        %v1125 = vadd.f32 0.0, %v1124
        %v1126 = vpop.f32.mrb[0].mxu0
        %v1127 = vadd.f32 0.0, %v1126
        %v1128 = vpop.f32.mrb[0].mxu0
        %v1129 = vadd.f32 0.0, %v1128
        %1130 = vmatprep.mubr.bf16.mxu0 0
        %1131 = vmatmul.mubr.bf16.gmra.mrb[0].mxu0 %v930
        %v1132 = vpop.f32.mrb[0].mxu0
        %v1133 = vadd.f32 0.0, %v1132
        %v1134 = vpop.f32.mrb[0].mxu0
        %v1135 = vadd.f32 0.0, %v1134
        %v1136 = vpop.f32.mrb[0].mxu0
        %v1137 = vadd.f32 0.0, %v1136
        %v1138 = vpop.f32.mrb[0].mxu0
        %v1139 = vadd.f32 0.0, %v1138
        %1140 = vdwg.mxu0
        %v1141 = vadd.f32 %v829, %v1063
        %v1142 = vadd.f32 %v831, %v1065
        %v1143 = vadd.f32 %v833, %v1067
        %v1144 = vadd.f32 %v835, %v1069
        %v1145 = vadd.f32 %v839, %v1073
        %v1146 = vadd.f32 %v841, %v1075
        %v1147 = vadd.f32 %v843, %v1077
        %v1148 = vadd.f32 %v845, %v1079
        %v1149 = vadd.f32 %v849, %v1083
        %v1150 = vadd.f32 %v851, %v1085
        %v1151 = vadd.f32 %v853, %v1087
        %v1152 = vadd.f32 %v855, %v1089
        %v1153 = vadd.f32 %v859, %v1093
        %v1154 = vadd.f32 %v861, %v1095
        %v1155 = vadd.f32 %v863, %v1097
        %v1156 = vadd.f32 %v865, %v1099
        %v1157 = vadd.f32 %v869, %v1103
        %v1158 = vadd.f32 %v871, %v1105
        %v1159 = vadd.f32 %v873, %v1107
        %v1160 = vadd.f32 %v875, %v1109
        %v1161 = vadd.f32 %v879, %v1113
        %v1162 = vadd.f32 %v881, %v1115
        %v1163 = vadd.f32 %v883, %v1117
        %v1164 = vadd.f32 %v885, %v1119
        %v1165 = vadd.f32 %v889, %v1123
        %v1166 = vadd.f32 %v891, %v1125
        %v1167 = vadd.f32 %v893, %v1127
        %v1168 = vadd.f32 %v895, %v1129
        %v1169 = vadd.f32 %v899, %v1133
        %v1170 = vadd.f32 %v901, %v1135
        %v1171 = vadd.f32 %v903, %v1137
        %v1172 = vadd.f32 %v905, %v1139
        %v1173 = vld [vmem:[%s438 + $0x3] sm:$0xff]
        %v1174 = vld [vmem:[%s438 + $0xb] sm:$0xff]
        %v1175 = vld [vmem:[%s438 + $0x13] sm:$0xff]
        %v1176 = vld [vmem:[%s438 + $0x1b] sm:$0xff]
        %v1177 = vld [vmem:[%s438 + $0x23] sm:$0xff]
        %v1178 = vld [vmem:[%s438 + $0x2b] sm:$0xff]
        %v1179 = vld [vmem:[%s438 + $0x33] sm:$0xff]
        %v1180 = vld [vmem:[%s438 + $0x3b] sm:$0xff]
        %v1181 = vld [vmem:[%s438 + $0x43] sm:$0xff]
        %v1182 = vld [vmem:[%s438 + $0x4b] sm:$0xff]
        %v1183 = vld [vmem:[%s438 + $0x53] sm:$0xff]
        %v1184 = vld [vmem:[%s438 + $0x5b] sm:$0xff]
        %v1185 = vld [vmem:[%s438 + $0x63] sm:$0xff]
        %v1186 = vld [vmem:[%s438 + $0x6b] sm:$0xff]
        %v1187 = vld [vmem:[%s438 + $0x73] sm:$0xff]
        %v1188 = vld [vmem:[%s438 + $0x7b] sm:$0xff]
        %v1189 = vpack.c.bf16 %v1174, %v1173
        %v1190 = vpack.c.bf16 %v1176, %v1175
        %v1191 = vpack.c.bf16 %v1178, %v1177
        %v1192 = vpack.c.bf16 %v1180, %v1179
        %v1193 = vpack.c.bf16 %v1182, %v1181
        %v1194 = vpack.c.bf16 %v1184, %v1183
        %v1195 = vpack.c.bf16 %v1186, %v1185
        %v1196 = vpack.c.bf16 %v1188, %v1187
        %s1197 = scalar_lea.vmem %s1, 384
        %v1198 = vld [vmem:[%s1197] sm:$0xff]
        %v1199 = vld [vmem:[%s1197 + $0x8] sm:$0xff]
        %v1200 = vld [vmem:[%s1197 + $0x10] sm:$0xff]
        %v1201 = vld [vmem:[%s1197 + $0x18] sm:$0xff]
        %v1202 = vld [vmem:[%s1197 + $0x20] sm:$0xff]
        %v1203 = vld [vmem:[%s1197 + $0x28] sm:$0xff]
        %v1204 = vld [vmem:[%s1197 + $0x30] sm:$0xff]
        %v1205 = vld [vmem:[%s1197 + $0x38] sm:$0xff]
        %v1206 = vld [vmem:[%s1197 + $0x40] sm:$0xff]
        %v1207 = vld [vmem:[%s1197 + $0x48] sm:$0xff]
        %v1208 = vld [vmem:[%s1197 + $0x50] sm:$0xff]
        %v1209 = vld [vmem:[%s1197 + $0x58] sm:$0xff]
        %v1210 = vld [vmem:[%s1197 + $0x60] sm:$0xff]
        %v1211 = vld [vmem:[%s1197 + $0x68] sm:$0xff]
        %v1212 = vld [vmem:[%s1197 + $0x70] sm:$0xff]
        %v1213 = vld [vmem:[%s1197 + $0x78] sm:$0xff]
        %v1230 = vunpack.c.l.b16 %v1198
        %v1231 = vunpack.c.h.b16 %v1198
        %v1232 = vunpack.c.l.b16 %v1199
        %v1233 = vunpack.c.h.b16 %v1199
        %v1234 = vunpack.c.l.b16 %v1200
        %v1235 = vunpack.c.h.b16 %v1200
        %v1236 = vunpack.c.l.b16 %v1201
        %v1237 = vunpack.c.h.b16 %v1201
        %v1238 = vunpack.c.l.b16 %v1202
        %v1239 = vunpack.c.h.b16 %v1202
        %v1240 = vunpack.c.l.b16 %v1203
        %v1241 = vunpack.c.h.b16 %v1203
        %v1242 = vunpack.c.l.b16 %v1204
        %v1243 = vunpack.c.h.b16 %v1204
        %v1244 = vunpack.c.l.b16 %v1205
        %v1245 = vunpack.c.h.b16 %v1205
        %v1246 = vunpack.c.l.b16 %v1206
        %v1247 = vunpack.c.h.b16 %v1206
        %v1248 = vunpack.c.l.b16 %v1207
        %v1249 = vunpack.c.h.b16 %v1207
        %v1250 = vunpack.c.l.b16 %v1208
        %v1251 = vunpack.c.h.b16 %v1208
        %v1252 = vunpack.c.l.b16 %v1209
        %v1253 = vunpack.c.h.b16 %v1209
        %v1254 = vunpack.c.l.b16 %v1210
        %v1255 = vunpack.c.h.b16 %v1210
        %v1256 = vunpack.c.l.b16 %v1211
        %v1257 = vunpack.c.h.b16 %v1211
        %v1258 = vunpack.c.l.b16 %v1212
        %v1259 = vunpack.c.h.b16 %v1212
        %v1260 = vunpack.c.l.b16 %v1213
        %v1261 = vunpack.c.h.b16 %v1213
        %v1262 = vpack.c.b16 %v1232, %v1230
        %v1263 = vpack.c.b16 %v1233, %v1231
        %v1264 = vpack.c.b16 %v1236, %v1234
        %v1265 = vpack.c.b16 %v1237, %v1235
        %v1266 = vpack.c.b16 %v1240, %v1238
        %v1267 = vpack.c.b16 %v1241, %v1239
        %v1268 = vpack.c.b16 %v1244, %v1242
        %v1269 = vpack.c.b16 %v1245, %v1243
        %v1270 = vpack.c.b16 %v1248, %v1246
        %v1271 = vpack.c.b16 %v1249, %v1247
        %v1272 = vpack.c.b16 %v1252, %v1250
        %v1273 = vpack.c.b16 %v1253, %v1251
        %v1274 = vpack.c.b16 %v1256, %v1254
        %v1275 = vpack.c.b16 %v1257, %v1255
        %v1276 = vpack.c.b16 %v1260, %v1258
        %v1277 = vpack.c.b16 %v1261, %v1259
        %1294 = vmatprep.subr.bf16.mxu0 %v1263
        %1295 = vmatpush1.bf16.msra.mxu0 %v1262
        %1296 = vmatprep.subr.bf16.mxu0 %v1265
        %1297 = vmatpush1.bf16.msra.mxu0 %v1264
        %1298 = vmatprep.subr.bf16.mxu0 %v1267
        %1299 = vmatpush1.bf16.msra.mxu0 %v1266
        %1300 = vmatprep.subr.bf16.mxu0 %v1269
        %1301 = vmatpush1.bf16.msra.mxu0 %v1268
        %1302 = vmatprep.subr.bf16.mxu0 %v1271
        %1303 = vmatpush1.bf16.msra.mxu0 %v1270
        %1304 = vmatprep.subr.bf16.mxu0 %v1273
        %1305 = vmatpush1.bf16.msra.mxu0 %v1272
        %1306 = vmatprep.subr.bf16.mxu0 %v1275
        %1307 = vmatpush1.bf16.msra.mxu0 %v1274
        %1308 = vmatprep.subr.bf16.mxu0 %v1277
        %1309 = vmatpush1.bf16.msra.mxu0 %v1276
        %1310 = vmatprep.subr.bf16.mxu0 0
        %1311 = vmatpush1.bf16.msra.mxu0 0
        %1312 = vmatprep.subr.bf16.mxu0 0
        %1313 = vmatpush1.bf16.msra.mxu0 0
        %1314 = vmatprep.subr.bf16.mxu0 0
        %1315 = vmatpush1.bf16.msra.mxu0 0
        %1316 = vmatprep.subr.bf16.mxu0 0
        %1317 = vmatpush1.bf16.msra.mxu0 0
        %1318 = vmatprep.subr.bf16.mxu0 0
        %1319 = vmatpush1.bf16.msra.mxu0 0
        %1320 = vmatprep.subr.bf16.mxu0 0
        %1321 = vmatpush1.bf16.msra.mxu0 0
        %1322 = vmatprep.subr.bf16.mxu0 0
        %1323 = vmatpush1.bf16.msra.mxu0 0
        %1324 = vmatprep.subr.bf16.mxu0 0
        %1325 = vmatpush1.bf16.msra.mxu0 0
        %1326 = vmatprep.mubr.bf16.mxu0 0
        %1327 = vmatmul.mubr.bf16.gmra.mrb[0].mxu0 %v1189
        %v1328 = vpop.f32.mrb[0].mxu0
        %v1329 = vadd.f32 0.0, %v1328
        %v1330 = vpop.f32.mrb[0].mxu0
        %v1331 = vadd.f32 0.0, %v1330
        %v1332 = vpop.f32.mrb[0].mxu0
        %v1333 = vadd.f32 0.0, %v1332
        %v1334 = vpop.f32.mrb[0].mxu0
        %v1335 = vadd.f32 0.0, %v1334
        %1336 = vmatprep.mubr.bf16.mxu0 0
        %1337 = vmatmul.mubr.bf16.gmra.mrb[0].mxu0 %v1190
        %v1338 = vpop.f32.mrb[0].mxu0
        %v1339 = vadd.f32 0.0, %v1338
        %v1340 = vpop.f32.mrb[0].mxu0
        %v1341 = vadd.f32 0.0, %v1340
        %v1342 = vpop.f32.mrb[0].mxu0
        %v1343 = vadd.f32 0.0, %v1342
        %v1344 = vpop.f32.mrb[0].mxu0
        %v1345 = vadd.f32 0.0, %v1344
        %1346 = vmatprep.mubr.bf16.mxu0 0
        %1347 = vmatmul.mubr.bf16.gmra.mrb[0].mxu0 %v1191
        %v1348 = vpop.f32.mrb[0].mxu0
        %v1349 = vadd.f32 0.0, %v1348
        %v1350 = vpop.f32.mrb[0].mxu0
        %v1351 = vadd.f32 0.0, %v1350
        %v1352 = vpop.f32.mrb[0].mxu0
        %v1353 = vadd.f32 0.0, %v1352
        %v1354 = vpop.f32.mrb[0].mxu0
        %v1355 = vadd.f32 0.0, %v1354
        %1356 = vmatprep.mubr.bf16.mxu0 0
        %1357 = vmatmul.mubr.bf16.gmra.mrb[0].mxu0 %v1192
        %v1358 = vpop.f32.mrb[0].mxu0
        %v1359 = vadd.f32 0.0, %v1358
        %v1360 = vpop.f32.mrb[0].mxu0
        %v1361 = vadd.f32 0.0, %v1360
        %v1362 = vpop.f32.mrb[0].mxu0
        %v1363 = vadd.f32 0.0, %v1362
        %v1364 = vpop.f32.mrb[0].mxu0
        %v1365 = vadd.f32 0.0, %v1364
        %1366 = vmatprep.mubr.bf16.mxu0 0
        %1367 = vmatmul.mubr.bf16.gmra.mrb[0].mxu0 %v1193
        %v1368 = vpop.f32.mrb[0].mxu0
        %v1369 = vadd.f32 0.0, %v1368
        %v1370 = vpop.f32.mrb[0].mxu0
        %v1371 = vadd.f32 0.0, %v1370
        %v1372 = vpop.f32.mrb[0].mxu0
        %v1373 = vadd.f32 0.0, %v1372
        %v1374 = vpop.f32.mrb[0].mxu0
        %v1375 = vadd.f32 0.0, %v1374
        %1376 = vmatprep.mubr.bf16.mxu0 0
        %1377 = vmatmul.mubr.bf16.gmra.mrb[0].mxu0 %v1194
        %v1378 = vpop.f32.mrb[0].mxu0
        %v1379 = vadd.f32 0.0, %v1378
        %v1380 = vpop.f32.mrb[0].mxu0
        %v1381 = vadd.f32 0.0, %v1380
        %v1382 = vpop.f32.mrb[0].mxu0
        %v1383 = vadd.f32 0.0, %v1382
        %v1384 = vpop.f32.mrb[0].mxu0
        %v1385 = vadd.f32 0.0, %v1384
        %1386 = vmatprep.mubr.bf16.mxu0 0
        %1387 = vmatmul.mubr.bf16.gmra.mrb[0].mxu0 %v1195
        %v1388 = vpop.f32.mrb[0].mxu0
        %v1389 = vadd.f32 0.0, %v1388
        %v1390 = vpop.f32.mrb[0].mxu0
        %v1391 = vadd.f32 0.0, %v1390
        %v1392 = vpop.f32.mrb[0].mxu0
        %v1393 = vadd.f32 0.0, %v1392
        %v1394 = vpop.f32.mrb[0].mxu0
        %v1395 = vadd.f32 0.0, %v1394
        %1396 = vmatprep.mubr.bf16.mxu0 0
        %1397 = vmatmul.mubr.bf16.gmra.mrb[0].mxu0 %v1196
        %v1398 = vpop.f32.mrb[0].mxu0
        %v1399 = vadd.f32 0.0, %v1398
        %v1400 = vpop.f32.mrb[0].mxu0
        %v1401 = vadd.f32 0.0, %v1400
        %v1402 = vpop.f32.mrb[0].mxu0
        %v1403 = vadd.f32 0.0, %v1402
        %v1404 = vpop.f32.mrb[0].mxu0
        %v1405 = vadd.f32 0.0, %v1404
        %1406 = vdwg.mxu0
        %v1407 = vadd.f32 %v1141, %v1329
        %v1408 = vadd.f32 %v1142, %v1331
        %v1409 = vadd.f32 %v1143, %v1333
        %v1410 = vadd.f32 %v1144, %v1335
        %v1411 = vadd.f32 %v1145, %v1339
        %v1412 = vadd.f32 %v1146, %v1341
        %v1413 = vadd.f32 %v1147, %v1343
        %v1414 = vadd.f32 %v1148, %v1345
        %v1415 = vadd.f32 %v1149, %v1349
        %v1416 = vadd.f32 %v1150, %v1351
        %v1417 = vadd.f32 %v1151, %v1353
        %v1418 = vadd.f32 %v1152, %v1355
        %v1419 = vadd.f32 %v1153, %v1359
        %v1420 = vadd.f32 %v1154, %v1361
        %v1421 = vadd.f32 %v1155, %v1363
        %v1422 = vadd.f32 %v1156, %v1365
        %v1423 = vadd.f32 %v1157, %v1369
        %v1424 = vadd.f32 %v1158, %v1371
        %v1425 = vadd.f32 %v1159, %v1373
        %v1426 = vadd.f32 %v1160, %v1375
        %v1427 = vadd.f32 %v1161, %v1379
        %v1428 = vadd.f32 %v1162, %v1381
        %v1429 = vadd.f32 %v1163, %v1383
        %v1430 = vadd.f32 %v1164, %v1385
        %v1431 = vadd.f32 %v1165, %v1389
        %v1432 = vadd.f32 %v1166, %v1391
        %v1433 = vadd.f32 %v1167, %v1393
        %v1434 = vadd.f32 %v1168, %v1395
        %v1435 = vadd.f32 %v1169, %v1399
        %v1436 = vadd.f32 %v1170, %v1401
        %v1437 = vadd.f32 %v1171, %v1403
        %v1438 = vadd.f32 %v1172, %v1405
        %v1439 = vld [vmem:[%s438 + $0x4] sm:$0xff]
        %v1440 = vld [vmem:[%s438 + $0xc] sm:$0xff]
        %v1441 = vld [vmem:[%s438 + $0x14] sm:$0xff]
        %v1442 = vld [vmem:[%s438 + $0x1c] sm:$0xff]
        %v1443 = vld [vmem:[%s438 + $0x24] sm:$0xff]
        %v1444 = vld [vmem:[%s438 + $0x2c] sm:$0xff]
        %v1445 = vld [vmem:[%s438 + $0x34] sm:$0xff]
        %v1446 = vld [vmem:[%s438 + $0x3c] sm:$0xff]
        %v1447 = vld [vmem:[%s438 + $0x44] sm:$0xff]
        %v1448 = vld [vmem:[%s438 + $0x4c] sm:$0xff]
        %v1449 = vld [vmem:[%s438 + $0x54] sm:$0xff]
        %v1450 = vld [vmem:[%s438 + $0x5c] sm:$0xff]
        %v1451 = vld [vmem:[%s438 + $0x64] sm:$0xff]
        %v1452 = vld [vmem:[%s438 + $0x6c] sm:$0xff]
        %v1453 = vld [vmem:[%s438 + $0x74] sm:$0xff]
        %v1454 = vld [vmem:[%s438 + $0x7c] sm:$0xff]
        %v1455 = vpack.c.bf16 %v1440, %v1439
        %v1456 = vpack.c.bf16 %v1442, %v1441
        %v1457 = vpack.c.bf16 %v1444, %v1443
        %v1458 = vpack.c.bf16 %v1446, %v1445
        %v1459 = vpack.c.bf16 %v1448, %v1447
        %v1460 = vpack.c.bf16 %v1450, %v1449
        %v1461 = vpack.c.bf16 %v1452, %v1451
        %v1462 = vpack.c.bf16 %v1454, %v1453
        %s1463 = scalar_lea.vmem %s1, 512
        %v1464 = vld [vmem:[%s1463] sm:$0xff]
        %v1465 = vld [vmem:[%s1463 + $0x8] sm:$0xff]
        %v1466 = vld [vmem:[%s1463 + $0x10] sm:$0xff]
        %v1467 = vld [vmem:[%s1463 + $0x18] sm:$0xff]
        %v1468 = vld [vmem:[%s1463 + $0x20] sm:$0xff]
        %v1469 = vld [vmem:[%s1463 + $0x28] sm:$0xff]
        %v1470 = vld [vmem:[%s1463 + $0x30] sm:$0xff]
        %v1471 = vld [vmem:[%s1463 + $0x38] sm:$0xff]
        %v1472 = vld [vmem:[%s1463 + $0x40] sm:$0xff]
        %v1473 = vld [vmem:[%s1463 + $0x48] sm:$0xff]
        %v1474 = vld [vmem:[%s1463 + $0x50] sm:$0xff]
        %v1475 = vld [vmem:[%s1463 + $0x58] sm:$0xff]
        %v1476 = vld [vmem:[%s1463 + $0x60] sm:$0xff]
        %v1477 = vld [vmem:[%s1463 + $0x68] sm:$0xff]
        %v1478 = vld [vmem:[%s1463 + $0x70] sm:$0xff]
        %v1479 = vld [vmem:[%s1463 + $0x78] sm:$0xff]
        %v1496 = vunpack.c.l.b16 %v1464
        %v1497 = vunpack.c.h.b16 %v1464
        %v1498 = vunpack.c.l.b16 %v1465
        %v1499 = vunpack.c.h.b16 %v1465
        %v1500 = vunpack.c.l.b16 %v1466
        %v1501 = vunpack.c.h.b16 %v1466
        %v1502 = vunpack.c.l.b16 %v1467
        %v1503 = vunpack.c.h.b16 %v1467
        %v1504 = vunpack.c.l.b16 %v1468
        %v1505 = vunpack.c.h.b16 %v1468
        %v1506 = vunpack.c.l.b16 %v1469
        %v1507 = vunpack.c.h.b16 %v1469
        %v1508 = vunpack.c.l.b16 %v1470
        %v1509 = vunpack.c.h.b16 %v1470
        %v1510 = vunpack.c.l.b16 %v1471
        %v1511 = vunpack.c.h.b16 %v1471
        %v1512 = vunpack.c.l.b16 %v1472
        %v1513 = vunpack.c.h.b16 %v1472
        %v1514 = vunpack.c.l.b16 %v1473
        %v1515 = vunpack.c.h.b16 %v1473
        %v1516 = vunpack.c.l.b16 %v1474
        %v1517 = vunpack.c.h.b16 %v1474
        %v1518 = vunpack.c.l.b16 %v1475
        %v1519 = vunpack.c.h.b16 %v1475
        %v1520 = vunpack.c.l.b16 %v1476
        %v1521 = vunpack.c.h.b16 %v1476
        %v1522 = vunpack.c.l.b16 %v1477
        %v1523 = vunpack.c.h.b16 %v1477
        %v1524 = vunpack.c.l.b16 %v1478
        %v1525 = vunpack.c.h.b16 %v1478
        %v1526 = vunpack.c.l.b16 %v1479
        %v1527 = vunpack.c.h.b16 %v1479
        %v1528 = vpack.c.b16 %v1498, %v1496
        %v1529 = vpack.c.b16 %v1499, %v1497
        %v1530 = vpack.c.b16 %v1502, %v1500
        %v1531 = vpack.c.b16 %v1503, %v1501
        %v1532 = vpack.c.b16 %v1506, %v1504
        %v1533 = vpack.c.b16 %v1507, %v1505
        %v1534 = vpack.c.b16 %v1510, %v1508
        %v1535 = vpack.c.b16 %v1511, %v1509
        %v1536 = vpack.c.b16 %v1514, %v1512
        %v1537 = vpack.c.b16 %v1515, %v1513
        %v1538 = vpack.c.b16 %v1518, %v1516
        %v1539 = vpack.c.b16 %v1519, %v1517
        %v1540 = vpack.c.b16 %v1522, %v1520
        %v1541 = vpack.c.b16 %v1523, %v1521
        %v1542 = vpack.c.b16 %v1526, %v1524
        %v1543 = vpack.c.b16 %v1527, %v1525
        %1560 = vmatprep.subr.bf16.mxu0 %v1529
        %1561 = vmatpush1.bf16.msra.mxu0 %v1528
        %1562 = vmatprep.subr.bf16.mxu0 %v1531
        %1563 = vmatpush1.bf16.msra.mxu0 %v1530
        %1564 = vmatprep.subr.bf16.mxu0 %v1533
        %1565 = vmatpush1.bf16.msra.mxu0 %v1532
        %1566 = vmatprep.subr.bf16.mxu0 %v1535
        %1567 = vmatpush1.bf16.msra.mxu0 %v1534
        %1568 = vmatprep.subr.bf16.mxu0 %v1537
        %1569 = vmatpush1.bf16.msra.mxu0 %v1536
        %1570 = vmatprep.subr.bf16.mxu0 %v1539
        %1571 = vmatpush1.bf16.msra.mxu0 %v1538
        %1572 = vmatprep.subr.bf16.mxu0 %v1541
        %1573 = vmatpush1.bf16.msra.mxu0 %v1540
        %1574 = vmatprep.subr.bf16.mxu0 %v1543
        %1575 = vmatpush1.bf16.msra.mxu0 %v1542
        %1576 = vmatprep.subr.bf16.mxu0 0
        %1577 = vmatpush1.bf16.msra.mxu0 0
        %1578 = vmatprep.subr.bf16.mxu0 0
        %1579 = vmatpush1.bf16.msra.mxu0 0
        %1580 = vmatprep.subr.bf16.mxu0 0
        %1581 = vmatpush1.bf16.msra.mxu0 0
        %1582 = vmatprep.subr.bf16.mxu0 0
        %1583 = vmatpush1.bf16.msra.mxu0 0
        %1584 = vmatprep.subr.bf16.mxu0 0
        %1585 = vmatpush1.bf16.msra.mxu0 0
        %1586 = vmatprep.subr.bf16.mxu0 0
        %1587 = vmatpush1.bf16.msra.mxu0 0
        %1588 = vmatprep.subr.bf16.mxu0 0
        %1589 = vmatpush1.bf16.msra.mxu0 0
        %1590 = vmatprep.subr.bf16.mxu0 0
        %1591 = vmatpush1.bf16.msra.mxu0 0
        %1592 = vmatprep.mubr.bf16.mxu0 0
        %1593 = vmatmul.mubr.bf16.gmra.mrb[0].mxu0 %v1455
        %v1594 = vpop.f32.mrb[0].mxu0
        %v1595 = vadd.f32 0.0, %v1594
        %v1596 = vpop.f32.mrb[0].mxu0
        %v1597 = vadd.f32 0.0, %v1596
        %v1598 = vpop.f32.mrb[0].mxu0
        %v1599 = vadd.f32 0.0, %v1598
        %v1600 = vpop.f32.mrb[0].mxu0
        %v1601 = vadd.f32 0.0, %v1600
        %1602 = vmatprep.mubr.bf16.mxu0 0
        %1603 = vmatmul.mubr.bf16.gmra.mrb[0].mxu0 %v1456
        %v1604 = vpop.f32.mrb[0].mxu0
        %v1605 = vadd.f32 0.0, %v1604
        %v1606 = vpop.f32.mrb[0].mxu0
        %v1607 = vadd.f32 0.0, %v1606
        %v1608 = vpop.f32.mrb[0].mxu0
        %v1609 = vadd.f32 0.0, %v1608
        %v1610 = vpop.f32.mrb[0].mxu0
        %v1611 = vadd.f32 0.0, %v1610
        %1612 = vmatprep.mubr.bf16.mxu0 0
        %1613 = vmatmul.mubr.bf16.gmra.mrb[0].mxu0 %v1457
        %v1614 = vpop.f32.mrb[0].mxu0
        %v1615 = vadd.f32 0.0, %v1614
        %v1616 = vpop.f32.mrb[0].mxu0
        %v1617 = vadd.f32 0.0, %v1616
        %v1618 = vpop.f32.mrb[0].mxu0
        %v1619 = vadd.f32 0.0, %v1618
        %v1620 = vpop.f32.mrb[0].mxu0
        %v1621 = vadd.f32 0.0, %v1620
        %1622 = vmatprep.mubr.bf16.mxu0 0
        %1623 = vmatmul.mubr.bf16.gmra.mrb[0].mxu0 %v1458
        %v1624 = vpop.f32.mrb[0].mxu0
        %v1625 = vadd.f32 0.0, %v1624
        %v1626 = vpop.f32.mrb[0].mxu0
        %v1627 = vadd.f32 0.0, %v1626
        %v1628 = vpop.f32.mrb[0].mxu0
        %v1629 = vadd.f32 0.0, %v1628
        %v1630 = vpop.f32.mrb[0].mxu0
        %v1631 = vadd.f32 0.0, %v1630
        %1632 = vmatprep.mubr.bf16.mxu0 0
        %1633 = vmatmul.mubr.bf16.gmra.mrb[0].mxu0 %v1459
        %v1634 = vpop.f32.mrb[0].mxu0
        %v1635 = vadd.f32 0.0, %v1634
        %v1636 = vpop.f32.mrb[0].mxu0
        %v1637 = vadd.f32 0.0, %v1636
        %v1638 = vpop.f32.mrb[0].mxu0
        %v1639 = vadd.f32 0.0, %v1638
        %v1640 = vpop.f32.mrb[0].mxu0
        %v1641 = vadd.f32 0.0, %v1640
        %1642 = vmatprep.mubr.bf16.mxu0 0
        %1643 = vmatmul.mubr.bf16.gmra.mrb[0].mxu0 %v1460
        %v1644 = vpop.f32.mrb[0].mxu0
        %v1645 = vadd.f32 0.0, %v1644
        %v1646 = vpop.f32.mrb[0].mxu0
        %v1647 = vadd.f32 0.0, %v1646
        %v1648 = vpop.f32.mrb[0].mxu0
        %v1649 = vadd.f32 0.0, %v1648
        %v1650 = vpop.f32.mrb[0].mxu0
        %v1651 = vadd.f32 0.0, %v1650
        %1652 = vmatprep.mubr.bf16.mxu0 0
        %1653 = vmatmul.mubr.bf16.gmra.mrb[0].mxu0 %v1461
        %v1654 = vpop.f32.mrb[0].mxu0
        %v1655 = vadd.f32 0.0, %v1654
        %v1656 = vpop.f32.mrb[0].mxu0
        %v1657 = vadd.f32 0.0, %v1656
        %v1658 = vpop.f32.mrb[0].mxu0
        %v1659 = vadd.f32 0.0, %v1658
        %v1660 = vpop.f32.mrb[0].mxu0
        %v1661 = vadd.f32 0.0, %v1660
        %1662 = vmatprep.mubr.bf16.mxu0 0
        %1663 = vmatmul.mubr.bf16.gmra.mrb[0].mxu0 %v1462
        %v1664 = vpop.f32.mrb[0].mxu0
        %v1665 = vadd.f32 0.0, %v1664
        %v1666 = vpop.f32.mrb[0].mxu0
        %v1667 = vadd.f32 0.0, %v1666
        %v1668 = vpop.f32.mrb[0].mxu0
        %v1669 = vadd.f32 0.0, %v1668
        %v1670 = vpop.f32.mrb[0].mxu0
        %v1671 = vadd.f32 0.0, %v1670
        %1672 = vdwg.mxu0
        %v1673 = vadd.f32 %v1407, %v1595
        %v1674 = vadd.f32 %v1408, %v1597
        %v1675 = vadd.f32 %v1409, %v1599
        %v1676 = vadd.f32 %v1410, %v1601
        %v1677 = vadd.f32 %v1411, %v1605
        %v1678 = vadd.f32 %v1412, %v1607
        %v1679 = vadd.f32 %v1413, %v1609
        %v1680 = vadd.f32 %v1414, %v1611
        %v1681 = vadd.f32 %v1415, %v1615
        %v1682 = vadd.f32 %v1416, %v1617
        %v1683 = vadd.f32 %v1417, %v1619
        %v1684 = vadd.f32 %v1418, %v1621
        %v1685 = vadd.f32 %v1419, %v1625
        %v1686 = vadd.f32 %v1420, %v1627
        %v1687 = vadd.f32 %v1421, %v1629
        %v1688 = vadd.f32 %v1422, %v1631
        %v1689 = vadd.f32 %v1423, %v1635
        %v1690 = vadd.f32 %v1424, %v1637
        %v1691 = vadd.f32 %v1425, %v1639
        %v1692 = vadd.f32 %v1426, %v1641
        %v1693 = vadd.f32 %v1427, %v1645
        %v1694 = vadd.f32 %v1428, %v1647
        %v1695 = vadd.f32 %v1429, %v1649
        %v1696 = vadd.f32 %v1430, %v1651
        %v1697 = vadd.f32 %v1431, %v1655
        %v1698 = vadd.f32 %v1432, %v1657
        %v1699 = vadd.f32 %v1433, %v1659
        %v1700 = vadd.f32 %v1434, %v1661
        %v1701 = vadd.f32 %v1435, %v1665
        %v1702 = vadd.f32 %v1436, %v1667
        %v1703 = vadd.f32 %v1437, %v1669
        %v1704 = vadd.f32 %v1438, %v1671
        %v1705 = vmax.f32 %v1673, %v1674
        %v1706 = vmax.f32 %v1675, %v1676
        %v1707 = vmax.f32 %v1677, %v1678
        %v1708 = vmax.f32 %v1679, %v1680
        %v1709 = vmax.f32 %v1681, %v1682
        %v1710 = vmax.f32 %v1683, %v1684
        %v1711 = vmax.f32 %v1685, %v1686
        %v1712 = vmax.f32 %v1687, %v1688
        %v1713 = vmax.f32 %v1689, %v1690
        %v1714 = vmax.f32 %v1691, %v1692
        %v1715 = vmax.f32 %v1693, %v1694
        %v1716 = vmax.f32 %v1695, %v1696
        %v1717 = vmax.f32 %v1697, %v1698
        %v1718 = vmax.f32 %v1699, %v1700
        %v1719 = vmax.f32 %v1701, %v1702
        %v1720 = vmax.f32 %v1703, %v1704
        %v1721 = vld [vmem:[%s2] sm:$0x1]
        %v1723 = vlaneseq
        %v1724 = vshrl.u32 %v1723, 7
        %v1725 = vsub.s32 0, %v1724
        %v1726 = vrot.slane %v1721, %v1725
        %v1728 = vadd.f32 %v1705, %v1726
        %v1729 = vadd.f32 %v1706, %v1726
        %v1730 = vadd.f32 %v1707, %v1726
        %v1731 = vadd.f32 %v1708, %v1726
        %v1732 = vadd.f32 %v1709, %v1726
        %v1733 = vadd.f32 %v1710, %v1726
        %v1734 = vadd.f32 %v1711, %v1726
        %v1735 = vadd.f32 %v1712, %v1726
        %v1736 = vadd.f32 %v1713, %v1726
        %v1737 = vadd.f32 %v1714, %v1726
        %v1738 = vadd.f32 %v1715, %v1726
        %v1739 = vadd.f32 %v1716, %v1726
        %v1740 = vadd.f32 %v1717, %v1726
        %v1741 = vadd.f32 %v1718, %v1726
        %v1742 = vadd.f32 %v1719, %v1726
        %v1743 = vadd.f32 %v1720, %v1726
        %v1744 = vmax.f32 %v1728, 0.0
        %v1745 = vmax.f32 %v1729, 0.0
        %v1746 = vmax.f32 %v1730, 0.0
        %v1747 = vmax.f32 %v1731, 0.0
        %v1748 = vmax.f32 %v1732, 0.0
        %v1749 = vmax.f32 %v1733, 0.0
        %v1750 = vmax.f32 %v1734, 0.0
        %v1751 = vmax.f32 %v1735, 0.0
        %v1752 = vmax.f32 %v1736, 0.0
        %v1753 = vmax.f32 %v1737, 0.0
        %v1754 = vmax.f32 %v1738, 0.0
        %v1755 = vmax.f32 %v1739, 0.0
        %v1756 = vmax.f32 %v1740, 0.0
        %v1757 = vmax.f32 %v1741, 0.0
        %v1758 = vmax.f32 %v1742, 0.0
        %v1759 = vmax.f32 %v1743, 0.0
        %1760 = vst [vmem:[#allocation2] sm:$0xff] %v1744
        %1761 = vst [vmem:[#allocation2 + $0x8] sm:$0xff] %v1745
        %1762 = vst [vmem:[#allocation2 + $0x10] sm:$0xff] %v1746
        %1763 = vst [vmem:[#allocation2 + $0x18] sm:$0xff] %v1747
        %1764 = vst [vmem:[#allocation2 + $0x20] sm:$0xff] %v1748
        %1765 = vst [vmem:[#allocation2 + $0x28] sm:$0xff] %v1749
        %1766 = vst [vmem:[#allocation2 + $0x30] sm:$0xff] %v1750
        %1767 = vst [vmem:[#allocation2 + $0x38] sm:$0xff] %v1751
        %1768 = vst [vmem:[#allocation2 + $0x40] sm:$0xff] %v1752
        %1769 = vst [vmem:[#allocation2 + $0x48] sm:$0xff] %v1753
        %1770 = vst [vmem:[#allocation2 + $0x50] sm:$0xff] %v1754
        %1771 = vst [vmem:[#allocation2 + $0x58] sm:$0xff] %v1755
        %1772 = vst [vmem:[#allocation2 + $0x60] sm:$0xff] %v1756
        %1773 = vst [vmem:[#allocation2 + $0x68] sm:$0xff] %v1757
        %1774 = vst [vmem:[#allocation2 + $0x70] sm:$0xff] %v1758
        %1775 = vst [vmem:[#allocation2 + $0x78] sm:$0xff] %v1759
        %1776 = vst [vmem:[#allocation2 + $0x80] sm:$0xff] 0.0
        %v1777 = vld [vmem:[#allocation2] sm:$0xff]
        %v1778 = vld [vmem:[#allocation2 + $0x8] sm:$0xff]
        %v1779 = vld [vmem:[#allocation2 + $0x10] sm:$0xff]
        %v1780 = vld [vmem:[#allocation2 + $0x18] sm:$0xff]
        %v1781 = vld [vmem:[#allocation2 + $0x20] sm:$0xff]
        %v1782 = vld [vmem:[#allocation2 + $0x28] sm:$0xff]
        %v1783 = vld [vmem:[#allocation2 + $0x30] sm:$0xff]
        %v1784 = vld [vmem:[#allocation2 + $0x38] sm:$0xff]
        %v1785 = vld [vmem:[#allocation2 + $0x40] sm:$0xff]
        %v1786 = vld [vmem:[#allocation2 + $0x48] sm:$0xff]
        %v1787 = vld [vmem:[#allocation2 + $0x50] sm:$0xff]
        %v1788 = vld [vmem:[#allocation2 + $0x58] sm:$0xff]
        %v1789 = vld [vmem:[#allocation2 + $0x60] sm:$0xff]
        %v1790 = vld [vmem:[#allocation2 + $0x68] sm:$0xff]
        %v1791 = vld [vmem:[#allocation2 + $0x70] sm:$0xff]
        %v1792 = vld [vmem:[#allocation2 + $0x78] sm:$0xff]
        %v1793 = vld [vmem:[#allocation2 + $0x1] sm:$0xff]
        %v1794 = vld [vmem:[#allocation2 + $0x9] sm:$0xff]
        %v1795 = vld [vmem:[#allocation2 + $0x11] sm:$0xff]
        %v1796 = vld [vmem:[#allocation2 + $0x19] sm:$0xff]
        %v1797 = vld [vmem:[#allocation2 + $0x21] sm:$0xff]
        %v1798 = vld [vmem:[#allocation2 + $0x29] sm:$0xff]
        %v1799 = vld [vmem:[#allocation2 + $0x31] sm:$0xff]
        %v1800 = vld [vmem:[#allocation2 + $0x39] sm:$0xff]
        %v1801 = vld [vmem:[#allocation2 + $0x41] sm:$0xff]
        %v1802 = vld [vmem:[#allocation2 + $0x49] sm:$0xff]
        %v1803 = vld [vmem:[#allocation2 + $0x51] sm:$0xff]
        %v1804 = vld [vmem:[#allocation2 + $0x59] sm:$0xff]
        %v1805 = vld [vmem:[#allocation2 + $0x61] sm:$0xff]
        %v1806 = vld [vmem:[#allocation2 + $0x69] sm:$0xff]
        %v1807 = vld [vmem:[#allocation2 + $0x71] sm:$0xff]
        %v1808 = vld [vmem:[#allocation2 + $0x79] sm:$0xff]
        %v1809 = vmax.f32 %v1777, %v1793
        %v1810 = vmax.f32 %v1778, %v1794
        %v1811 = vmax.f32 %v1779, %v1795
        %v1812 = vmax.f32 %v1780, %v1796
        %v1813 = vmax.f32 %v1781, %v1797
        %v1814 = vmax.f32 %v1782, %v1798
        %v1815 = vmax.f32 %v1783, %v1799
        %v1816 = vmax.f32 %v1784, %v1800
        %v1817 = vmax.f32 %v1785, %v1801
        %v1818 = vmax.f32 %v1786, %v1802
        %v1819 = vmax.f32 %v1787, %v1803
        %v1820 = vmax.f32 %v1788, %v1804
        %v1821 = vmax.f32 %v1789, %v1805
        %v1822 = vmax.f32 %v1790, %v1806
        %v1823 = vmax.f32 %v1791, %v1807
        %v1824 = vmax.f32 %v1792, %v1808
        %1825 = vst [vmem:[#allocation3] sm:$0xff] %v1809
        %1826 = vst [vmem:[#allocation3 + $0x8] sm:$0xff] %v1810
        %1827 = vst [vmem:[#allocation3 + $0x10] sm:$0xff] %v1811
        %1828 = vst [vmem:[#allocation3 + $0x18] sm:$0xff] %v1812
        %1829 = vst [vmem:[#allocation3 + $0x20] sm:$0xff] %v1813
        %1830 = vst [vmem:[#allocation3 + $0x28] sm:$0xff] %v1814
        %1831 = vst [vmem:[#allocation3 + $0x30] sm:$0xff] %v1815
        %1832 = vst [vmem:[#allocation3 + $0x38] sm:$0xff] %v1816
        %1833 = vst [vmem:[#allocation3 + $0x40] sm:$0xff] %v1817
        %1834 = vst [vmem:[#allocation3 + $0x48] sm:$0xff] %v1818
        %1835 = vst [vmem:[#allocation3 + $0x50] sm:$0xff] %v1819
        %1836 = vst [vmem:[#allocation3 + $0x58] sm:$0xff] %v1820
        %1837 = vst [vmem:[#allocation3 + $0x60] sm:$0xff] %v1821
        %1838 = vst [vmem:[#allocation3 + $0x68] sm:$0xff] %v1822
        %1839 = vst [vmem:[#allocation3 + $0x70] sm:$0xff] %v1823
        %1840 = vst [vmem:[#allocation3 + $0x78] sm:$0xff] %v1824
        %1841 = vst [vmem:[#allocation3 + $0x80] sm:$0xff] 0.0
        %v1842 = vld [vmem:[#allocation3] sm:$0xff]
        %v1843 = vld [vmem:[#allocation3 + $0x8] sm:$0xff]
        %v1844 = vld [vmem:[#allocation3 + $0x10] sm:$0xff]
        %v1845 = vld [vmem:[#allocation3 + $0x18] sm:$0xff]
        %v1846 = vld [vmem:[#allocation3 + $0x20] sm:$0xff]
        %v1847 = vld [vmem:[#allocation3 + $0x28] sm:$0xff]
        %v1848 = vld [vmem:[#allocation3 + $0x30] sm:$0xff]
        %v1849 = vld [vmem:[#allocation3 + $0x38] sm:$0xff]
        %v1850 = vld [vmem:[#allocation3 + $0x40] sm:$0xff]
        %v1851 = vld [vmem:[#allocation3 + $0x48] sm:$0xff]
        %v1852 = vld [vmem:[#allocation3 + $0x50] sm:$0xff]
        %v1853 = vld [vmem:[#allocation3 + $0x58] sm:$0xff]
        %v1854 = vld [vmem:[#allocation3 + $0x60] sm:$0xff]
        %v1855 = vld [vmem:[#allocation3 + $0x68] sm:$0xff]
        %v1856 = vld [vmem:[#allocation3 + $0x70] sm:$0xff]
        %v1857 = vld [vmem:[#allocation3 + $0x78] sm:$0xff]
        %v1858 = vpack.c.bf16 %v1843, %v1842
        %v1859 = vpack.c.bf16 %v1845, %v1844
        %v1860 = vpack.c.bf16 %v1847, %v1846
        %v1861 = vpack.c.bf16 %v1849, %v1848
        %v1862 = vpack.c.bf16 %v1851, %v1850
        %v1863 = vpack.c.bf16 %v1853, %v1852
        %v1864 = vpack.c.bf16 %v1855, %v1854
        %v1865 = vpack.c.bf16 %v1857, %v1856
        %v1866 = vld [vmem:[%s3] sm:$0xff]
        %v1867 = vld [vmem:[%s3 + $0x8] sm:$0xff]
        %v1868 = vld [vmem:[%s3 + $0x10] sm:$0xff]
        %v1869 = vld [vmem:[%s3 + $0x18] sm:$0xff]
        %v1870 = vld [vmem:[%s3 + $0x20] sm:$0xff]
        %v1871 = vld [vmem:[%s3 + $0x28] sm:$0xff]
        %v1872 = vld [vmem:[%s3 + $0x30] sm:$0xff]
        %v1873 = vld [vmem:[%s3 + $0x38] sm:$0xff]
        %v1874 = vld [vmem:[%s3 + $0x40] sm:$0xff]
        %v1875 = vld [vmem:[%s3 + $0x48] sm:$0xff]
        %v1876 = vld [vmem:[%s3 + $0x50] sm:$0xff]
        %v1877 = vld [vmem:[%s3 + $0x58] sm:$0xff]
        %v1878 = vld [vmem:[%s3 + $0x60] sm:$0xff]
        %v1879 = vld [vmem:[%s3 + $0x68] sm:$0xff]
        %v1880 = vld [vmem:[%s3 + $0x70] sm:$0xff]
        %v1881 = vld [vmem:[%s3 + $0x78] sm:$0xff]
        %v1882 = vld [vmem:[#allocation3 + $0x2] sm:$0xff]
        %v1883 = vld [vmem:[#allocation3 + $0xa] sm:$0xff]
        %v1884 = vld [vmem:[#allocation3 + $0x12] sm:$0xff]
        %v1885 = vld [vmem:[#allocation3 + $0x1a] sm:$0xff]
        %v1886 = vld [vmem:[#allocation3 + $0x22] sm:$0xff]
        %v1887 = vld [vmem:[#allocation3 + $0x2a] sm:$0xff]
        %v1888 = vld [vmem:[#allocation3 + $0x32] sm:$0xff]
        %v1889 = vld [vmem:[#allocation3 + $0x3a] sm:$0xff]
        %v1890 = vld [vmem:[#allocation3 + $0x42] sm:$0xff]
        %v1891 = vld [vmem:[#allocation3 + $0x4a] sm:$0xff]
        %v1892 = vld [vmem:[#allocation3 + $0x52] sm:$0xff]
        %v1893 = vld [vmem:[#allocation3 + $0x5a] sm:$0xff]
        %v1894 = vld [vmem:[#allocation3 + $0x62] sm:$0xff]
        %v1895 = vld [vmem:[#allocation3 + $0x6a] sm:$0xff]
        %v1896 = vld [vmem:[#allocation3 + $0x72] sm:$0xff]
        %v1897 = vld [vmem:[#allocation3 + $0x7a] sm:$0xff]
        %v1898 = vpack.c.bf16 %v1883, %v1882
        %v1899 = vpack.c.bf16 %v1885, %v1884
        %v1900 = vpack.c.bf16 %v1887, %v1886
        %v1901 = vpack.c.bf16 %v1889, %v1888
        %v1902 = vpack.c.bf16 %v1891, %v1890
        %v1903 = vpack.c.bf16 %v1893, %v1892
        %v1904 = vpack.c.bf16 %v1895, %v1894
        %v1905 = vpack.c.bf16 %v1897, %v1896
        %s1906 = scalar_lea.vmem %s3, 128
        %v1907 = vld [vmem:[%s1906] sm:$0xff]
        %v1908 = vld [vmem:[%s1906 + $0x8] sm:$0xff]
        %v1909 = vld [vmem:[%s1906 + $0x10] sm:$0xff]
        %v1910 = vld [vmem:[%s1906 + $0x18] sm:$0xff]
        %v1911 = vld [vmem:[%s1906 + $0x20] sm:$0xff]
        %v1912 = vld [vmem:[%s1906 + $0x28] sm:$0xff]
        %v1913 = vld [vmem:[%s1906 + $0x30] sm:$0xff]
        %v1914 = vld [vmem:[%s1906 + $0x38] sm:$0xff]
        %v1915 = vld [vmem:[%s1906 + $0x40] sm:$0xff]
        %v1916 = vld [vmem:[%s1906 + $0x48] sm:$0xff]
        %v1917 = vld [vmem:[%s1906 + $0x50] sm:$0xff]
        %v1918 = vld [vmem:[%s1906 + $0x58] sm:$0xff]
        %v1919 = vld [vmem:[%s1906 + $0x60] sm:$0xff]
        %v1920 = vld [vmem:[%s1906 + $0x68] sm:$0xff]
        %v1921 = vld [vmem:[%s1906 + $0x70] sm:$0xff]
        %v1922 = vld [vmem:[%s1906 + $0x78] sm:$0xff]
        %v1939 = vunpack.c.l.b16 %v1907
        %v1940 = vunpack.c.h.b16 %v1907
        %v1941 = vunpack.c.l.b16 %v1908
        %v1942 = vunpack.c.h.b16 %v1908
        %v1943 = vunpack.c.l.b16 %v1909
        %v1944 = vunpack.c.h.b16 %v1909
        %v1945 = vunpack.c.l.b16 %v1910
        %v1946 = vunpack.c.h.b16 %v1910
        %v1947 = vunpack.c.l.b16 %v1911
        %v1948 = vunpack.c.h.b16 %v1911
        %v1949 = vunpack.c.l.b16 %v1912
        %v1950 = vunpack.c.h.b16 %v1912
        %v1951 = vunpack.c.l.b16 %v1913
        %v1952 = vunpack.c.h.b16 %v1913
        %v1953 = vunpack.c.l.b16 %v1914
        %v1954 = vunpack.c.h.b16 %v1914
        %v1955 = vunpack.c.l.b16 %v1915
        %v1956 = vunpack.c.h.b16 %v1915
        %v1957 = vunpack.c.l.b16 %v1916
        %v1958 = vunpack.c.h.b16 %v1916
        %v1959 = vunpack.c.l.b16 %v1917
        %v1960 = vunpack.c.h.b16 %v1917
        %v1961 = vunpack.c.l.b16 %v1918
        %v1962 = vunpack.c.h.b16 %v1918
        %v1963 = vunpack.c.l.b16 %v1919
        %v1964 = vunpack.c.h.b16 %v1919
        %v1965 = vunpack.c.l.b16 %v1920
        %v1966 = vunpack.c.h.b16 %v1920
        %v1967 = vunpack.c.l.b16 %v1921
        %v1968 = vunpack.c.h.b16 %v1921
        %v1969 = vunpack.c.l.b16 %v1922
        %v1970 = vunpack.c.h.b16 %v1922
        %v1971 = vpack.c.b16 %v1941, %v1939
        %v1972 = vpack.c.b16 %v1942, %v1940
        %v1973 = vpack.c.b16 %v1945, %v1943
        %v1974 = vpack.c.b16 %v1946, %v1944
        %v1975 = vpack.c.b16 %v1949, %v1947
        %v1976 = vpack.c.b16 %v1950, %v1948
        %v1977 = vpack.c.b16 %v1953, %v1951
        %v1978 = vpack.c.b16 %v1954, %v1952
        %v1979 = vpack.c.b16 %v1957, %v1955
        %v1980 = vpack.c.b16 %v1958, %v1956
        %v1981 = vpack.c.b16 %v1961, %v1959
        %v1982 = vpack.c.b16 %v1962, %v1960
        %v1983 = vpack.c.b16 %v1965, %v1963
        %v1984 = vpack.c.b16 %v1966, %v1964
        %v1985 = vpack.c.b16 %v1969, %v1967
        %v1986 = vpack.c.b16 %v1970, %v1968
        %2003 = vmatprep.subr.bf16.mxu0 %v1972
        %2004 = vmatpush1.bf16.msra.mxu0 %v1971
        %2005 = vmatprep.subr.bf16.mxu0 %v1974
        %2006 = vmatpush1.bf16.msra.mxu0 %v1973
        %2007 = vmatprep.subr.bf16.mxu0 %v1976
        %2008 = vmatpush1.bf16.msra.mxu0 %v1975
        %2009 = vmatprep.subr.bf16.mxu0 %v1978
        %2010 = vmatpush1.bf16.msra.mxu0 %v1977
        %2011 = vmatprep.subr.bf16.mxu0 %v1980
        %2012 = vmatpush1.bf16.msra.mxu0 %v1979
        %2013 = vmatprep.subr.bf16.mxu0 %v1982
        %2014 = vmatpush1.bf16.msra.mxu0 %v1981
        %2015 = vmatprep.subr.bf16.mxu0 %v1984
        %2016 = vmatpush1.bf16.msra.mxu0 %v1983
        %2017 = vmatprep.subr.bf16.mxu0 %v1986
        %2018 = vmatpush1.bf16.msra.mxu0 %v1985
        %2019 = vmatprep.subr.bf16.mxu0 0
        %2020 = vmatpush1.bf16.msra.mxu0 0
        %2021 = vmatprep.subr.bf16.mxu0 0
        %2022 = vmatpush1.bf16.msra.mxu0 0
        %2023 = vmatprep.subr.bf16.mxu0 0
        %2024 = vmatpush1.bf16.msra.mxu0 0
        %2025 = vmatprep.subr.bf16.mxu0 0
        %2026 = vmatpush1.bf16.msra.mxu0 0
        %2027 = vmatprep.subr.bf16.mxu0 0
        %2028 = vmatpush1.bf16.msra.mxu0 0
        %2029 = vmatprep.subr.bf16.mxu0 0
        %2030 = vmatpush1.bf16.msra.mxu0 0
        %2031 = vmatprep.subr.bf16.mxu0 0
        %2032 = vmatpush1.bf16.msra.mxu0 0
        %2033 = vmatprep.subr.bf16.mxu0 0
        %2034 = vmatpush1.bf16.msra.mxu0 0
        %2035 = vmatprep.mubr.bf16.mxu0 0
        %2036 = vmatmul.mubr.bf16.gmra.mrb[0].mxu0 %v1898
        %v2037 = vpop.f32.mrb[0].mxu0
        %v2038 = vadd.f32 0.0, %v2037
        %v2039 = vpop.f32.mrb[0].mxu0
        %v2040 = vadd.f32 0.0, %v2039
        %v2041 = vpop.f32.mrb[0].mxu0
        %v2042 = vadd.f32 0.0, %v2041
        %v2043 = vpop.f32.mrb[0].mxu0
        %v2044 = vadd.f32 0.0, %v2043
        %2045 = vmatprep.mubr.bf16.mxu0 0
        %2046 = vmatmul.mubr.bf16.gmra.mrb[0].mxu0 %v1899
        %v2047 = vpop.f32.mrb[0].mxu0
        %v2048 = vadd.f32 0.0, %v2047
        %v2049 = vpop.f32.mrb[0].mxu0
        %v2050 = vadd.f32 0.0, %v2049
        %v2051 = vpop.f32.mrb[0].mxu0
        %v2052 = vadd.f32 0.0, %v2051
        %v2053 = vpop.f32.mrb[0].mxu0
        %v2054 = vadd.f32 0.0, %v2053
        %2055 = vmatprep.mubr.bf16.mxu0 0
        %2056 = vmatmul.mubr.bf16.gmra.mrb[0].mxu0 %v1900
        %v2057 = vpop.f32.mrb[0].mxu0
        %v2058 = vadd.f32 0.0, %v2057
        %v2059 = vpop.f32.mrb[0].mxu0
        %v2060 = vadd.f32 0.0, %v2059
        %v2061 = vpop.f32.mrb[0].mxu0
        %v2062 = vadd.f32 0.0, %v2061
        %v2063 = vpop.f32.mrb[0].mxu0
        %v2064 = vadd.f32 0.0, %v2063
        %2065 = vmatprep.mubr.bf16.mxu0 0
        %2066 = vmatmul.mubr.bf16.gmra.mrb[0].mxu0 %v1901
        %v2067 = vpop.f32.mrb[0].mxu0
        %v2068 = vadd.f32 0.0, %v2067
        %v2069 = vpop.f32.mrb[0].mxu0
        %v2070 = vadd.f32 0.0, %v2069
        %v2071 = vpop.f32.mrb[0].mxu0
        %v2072 = vadd.f32 0.0, %v2071
        %v2073 = vpop.f32.mrb[0].mxu0
        %v2074 = vadd.f32 0.0, %v2073
        %2075 = vmatprep.mubr.bf16.mxu0 0
        %2076 = vmatmul.mubr.bf16.gmra.mrb[0].mxu0 %v1902
        %v2077 = vpop.f32.mrb[0].mxu0
        %v2078 = vadd.f32 0.0, %v2077
        %v2079 = vpop.f32.mrb[0].mxu0
        %v2080 = vadd.f32 0.0, %v2079
        %v2081 = vpop.f32.mrb[0].mxu0
        %v2082 = vadd.f32 0.0, %v2081
        %v2083 = vpop.f32.mrb[0].mxu0
        %v2084 = vadd.f32 0.0, %v2083
        %2085 = vmatprep.mubr.bf16.mxu0 0
        %2086 = vmatmul.mubr.bf16.gmra.mrb[0].mxu0 %v1903
        %v2087 = vpop.f32.mrb[0].mxu0
        %v2088 = vadd.f32 0.0, %v2087
        %v2089 = vpop.f32.mrb[0].mxu0
        %v2090 = vadd.f32 0.0, %v2089
        %v2091 = vpop.f32.mrb[0].mxu0
        %v2092 = vadd.f32 0.0, %v2091
        %v2093 = vpop.f32.mrb[0].mxu0
        %v2094 = vadd.f32 0.0, %v2093
        %2095 = vmatprep.mubr.bf16.mxu0 0
        %2096 = vmatmul.mubr.bf16.gmra.mrb[0].mxu0 %v1904
        %v2097 = vpop.f32.mrb[0].mxu0
        %v2098 = vadd.f32 0.0, %v2097
        %v2099 = vpop.f32.mrb[0].mxu0
        %v2100 = vadd.f32 0.0, %v2099
        %v2101 = vpop.f32.mrb[0].mxu0
        %v2102 = vadd.f32 0.0, %v2101
        %v2103 = vpop.f32.mrb[0].mxu0
        %v2104 = vadd.f32 0.0, %v2103
        %2105 = vmatprep.mubr.bf16.mxu0 0
        %2106 = vmatmul.mubr.bf16.gmra.mrb[0].mxu0 %v1905
        %v2107 = vpop.f32.mrb[0].mxu0
        %v2108 = vadd.f32 0.0, %v2107
        %v2109 = vpop.f32.mrb[0].mxu0
        %v2110 = vadd.f32 0.0, %v2109
        %v2111 = vpop.f32.mrb[0].mxu0
        %v2112 = vadd.f32 0.0, %v2111
        %v2113 = vpop.f32.mrb[0].mxu0
        %v2114 = vadd.f32 0.0, %v2113
        %2115 = vdwg.mxu0
        %v2132 = vunpack.c.l.b16 %v1866
        %v2133 = vunpack.c.h.b16 %v1866
        %v2134 = vunpack.c.l.b16 %v1867
        %v2135 = vunpack.c.h.b16 %v1867
        %v2136 = vunpack.c.l.b16 %v1868
        %v2137 = vunpack.c.h.b16 %v1868
        %v2138 = vunpack.c.l.b16 %v1869
        %v2139 = vunpack.c.h.b16 %v1869
        %v2140 = vunpack.c.l.b16 %v1870
        %v2141 = vunpack.c.h.b16 %v1870
        %v2142 = vunpack.c.l.b16 %v1871
        %v2143 = vunpack.c.h.b16 %v1871
        %v2144 = vunpack.c.l.b16 %v1872
        %v2145 = vunpack.c.h.b16 %v1872
        %v2146 = vunpack.c.l.b16 %v1873
        %v2147 = vunpack.c.h.b16 %v1873
        %v2148 = vunpack.c.l.b16 %v1874
        %v2149 = vunpack.c.h.b16 %v1874
        %v2150 = vunpack.c.l.b16 %v1875
        %v2151 = vunpack.c.h.b16 %v1875
        %v2152 = vunpack.c.l.b16 %v1876
        %v2153 = vunpack.c.h.b16 %v1876
        %v2154 = vunpack.c.l.b16 %v1877
        %v2155 = vunpack.c.h.b16 %v1877
        %v2156 = vunpack.c.l.b16 %v1878
        %v2157 = vunpack.c.h.b16 %v1878
        %v2158 = vunpack.c.l.b16 %v1879
        %v2159 = vunpack.c.h.b16 %v1879
        %v2160 = vunpack.c.l.b16 %v1880
        %v2161 = vunpack.c.h.b16 %v1880
        %v2162 = vunpack.c.l.b16 %v1881
        %v2163 = vunpack.c.h.b16 %v1881
        %v2164 = vpack.c.b16 %v2134, %v2132
        %v2165 = vpack.c.b16 %v2135, %v2133
        %v2166 = vpack.c.b16 %v2138, %v2136
        %v2167 = vpack.c.b16 %v2139, %v2137
        %v2168 = vpack.c.b16 %v2142, %v2140
        %v2169 = vpack.c.b16 %v2143, %v2141
        %v2170 = vpack.c.b16 %v2146, %v2144
        %v2171 = vpack.c.b16 %v2147, %v2145
        %v2172 = vpack.c.b16 %v2150, %v2148
        %v2173 = vpack.c.b16 %v2151, %v2149
        %v2174 = vpack.c.b16 %v2154, %v2152
        %v2175 = vpack.c.b16 %v2155, %v2153
        %v2176 = vpack.c.b16 %v2158, %v2156
        %v2177 = vpack.c.b16 %v2159, %v2157
        %v2178 = vpack.c.b16 %v2162, %v2160
        %v2179 = vpack.c.b16 %v2163, %v2161
        %2196 = vmatprep.subr.bf16.mxu0 %v2165
        %2197 = vmatpush1.bf16.msra.mxu0 %v2164
        %2198 = vmatprep.subr.bf16.mxu0 %v2167
        %2199 = vmatpush1.bf16.msra.mxu0 %v2166
        %2200 = vmatprep.subr.bf16.mxu0 %v2169
        %2201 = vmatpush1.bf16.msra.mxu0 %v2168
        %2202 = vmatprep.subr.bf16.mxu0 %v2171
        %2203 = vmatpush1.bf16.msra.mxu0 %v2170
        %2204 = vmatprep.subr.bf16.mxu0 %v2173
        %2205 = vmatpush1.bf16.msra.mxu0 %v2172
        %2206 = vmatprep.subr.bf16.mxu0 %v2175
        %2207 = vmatpush1.bf16.msra.mxu0 %v2174
        %2208 = vmatprep.subr.bf16.mxu0 %v2177
        %2209 = vmatpush1.bf16.msra.mxu0 %v2176
        %2210 = vmatprep.subr.bf16.mxu0 %v2179
        %2211 = vmatpush1.bf16.msra.mxu0 %v2178
        %2212 = vmatprep.subr.bf16.mxu0 0
        %2213 = vmatpush1.bf16.msra.mxu0 0
        %2214 = vmatprep.subr.bf16.mxu0 0
        %2215 = vmatpush1.bf16.msra.mxu0 0
        %2216 = vmatprep.subr.bf16.mxu0 0
        %2217 = vmatpush1.bf16.msra.mxu0 0
        %2218 = vmatprep.subr.bf16.mxu0 0
        %2219 = vmatpush1.bf16.msra.mxu0 0
        %2220 = vmatprep.subr.bf16.mxu0 0
        %2221 = vmatpush1.bf16.msra.mxu0 0
        %2222 = vmatprep.subr.bf16.mxu0 0
        %2223 = vmatpush1.bf16.msra.mxu0 0
        %2224 = vmatprep.subr.bf16.mxu0 0
        %2225 = vmatpush1.bf16.msra.mxu0 0
        %2226 = vmatprep.subr.bf16.mxu0 0
        %2227 = vmatpush1.bf16.msra.mxu0 0
        %2228 = vmatprep.mubr.bf16.mxu0 0
        %2229 = vmatmul.mubr.bf16.gmra.mrb[0].mxu0 %v1858
        %v2230 = vpop.f32.mrb[0].mxu0
        %v2231 = vadd.f32 %v2038, %v2230
        %v2232 = vpop.f32.mrb[0].mxu0
        %v2233 = vadd.f32 %v2040, %v2232
        %v2234 = vpop.f32.mrb[0].mxu0
        %v2235 = vadd.f32 %v2042, %v2234
        %v2236 = vpop.f32.mrb[0].mxu0
        %v2237 = vadd.f32 %v2044, %v2236
        %2238 = vmatprep.mubr.bf16.mxu0 0
        %2239 = vmatmul.mubr.bf16.gmra.mrb[0].mxu0 %v1859
        %v2240 = vpop.f32.mrb[0].mxu0
        %v2241 = vadd.f32 %v2048, %v2240
        %v2242 = vpop.f32.mrb[0].mxu0
        %v2243 = vadd.f32 %v2050, %v2242
        %v2244 = vpop.f32.mrb[0].mxu0
        %v2245 = vadd.f32 %v2052, %v2244
        %v2246 = vpop.f32.mrb[0].mxu0
        %v2247 = vadd.f32 %v2054, %v2246
        %2248 = vmatprep.mubr.bf16.mxu0 0
        %2249 = vmatmul.mubr.bf16.gmra.mrb[0].mxu0 %v1860
        %v2250 = vpop.f32.mrb[0].mxu0
        %v2251 = vadd.f32 %v2058, %v2250
        %v2252 = vpop.f32.mrb[0].mxu0
        %v2253 = vadd.f32 %v2060, %v2252
        %v2254 = vpop.f32.mrb[0].mxu0
        %v2255 = vadd.f32 %v2062, %v2254
        %v2256 = vpop.f32.mrb[0].mxu0
        %v2257 = vadd.f32 %v2064, %v2256
        %2258 = vmatprep.mubr.bf16.mxu0 0
        %2259 = vmatmul.mubr.bf16.gmra.mrb[0].mxu0 %v1861
        %v2260 = vpop.f32.mrb[0].mxu0
        %v2261 = vadd.f32 %v2068, %v2260
        %v2262 = vpop.f32.mrb[0].mxu0
        %v2263 = vadd.f32 %v2070, %v2262
        %v2264 = vpop.f32.mrb[0].mxu0
        %v2265 = vadd.f32 %v2072, %v2264
        %v2266 = vpop.f32.mrb[0].mxu0
        %v2267 = vadd.f32 %v2074, %v2266
        %2268 = vmatprep.mubr.bf16.mxu0 0
        %2269 = vmatmul.mubr.bf16.gmra.mrb[0].mxu0 %v1862
        %v2270 = vpop.f32.mrb[0].mxu0
        %v2271 = vadd.f32 %v2078, %v2270
        %v2272 = vpop.f32.mrb[0].mxu0
        %v2273 = vadd.f32 %v2080, %v2272
        %v2274 = vpop.f32.mrb[0].mxu0
        %v2275 = vadd.f32 %v2082, %v2274
        %v2276 = vpop.f32.mrb[0].mxu0
        %v2277 = vadd.f32 %v2084, %v2276
        %2278 = vmatprep.mubr.bf16.mxu0 0
        %2279 = vmatmul.mubr.bf16.gmra.mrb[0].mxu0 %v1863
        %v2280 = vpop.f32.mrb[0].mxu0
        %v2281 = vadd.f32 %v2088, %v2280
        %v2282 = vpop.f32.mrb[0].mxu0
        %v2283 = vadd.f32 %v2090, %v2282
        %v2284 = vpop.f32.mrb[0].mxu0
        %v2285 = vadd.f32 %v2092, %v2284
        %v2286 = vpop.f32.mrb[0].mxu0
        %v2287 = vadd.f32 %v2094, %v2286
        %2288 = vmatprep.mubr.bf16.mxu0 0
        %2289 = vmatmul.mubr.bf16.gmra.mrb[0].mxu0 %v1864
        %v2290 = vpop.f32.mrb[0].mxu0
        %v2291 = vadd.f32 %v2098, %v2290
        %v2292 = vpop.f32.mrb[0].mxu0
        %v2293 = vadd.f32 %v2100, %v2292
        %v2294 = vpop.f32.mrb[0].mxu0
        %v2295 = vadd.f32 %v2102, %v2294
        %v2296 = vpop.f32.mrb[0].mxu0
        %v2297 = vadd.f32 %v2104, %v2296
        %2298 = vmatprep.mubr.bf16.mxu0 0
        %2299 = vmatmul.mubr.bf16.gmra.mrb[0].mxu0 %v1865
        %v2300 = vpop.f32.mrb[0].mxu0
        %v2301 = vadd.f32 %v2108, %v2300
        %v2302 = vpop.f32.mrb[0].mxu0
        %v2303 = vadd.f32 %v2110, %v2302
        %v2304 = vpop.f32.mrb[0].mxu0
        %v2305 = vadd.f32 %v2112, %v2304
        %v2306 = vpop.f32.mrb[0].mxu0
        %v2307 = vadd.f32 %v2114, %v2306
        %2308 = vdwg.mxu0
        %v2309 = vld [vmem:[#allocation3 + $0x4] sm:$0xff]
        %v2310 = vld [vmem:[#allocation3 + $0xc] sm:$0xff]
        %v2311 = vld [vmem:[#allocation3 + $0x14] sm:$0xff]
        %v2312 = vld [vmem:[#allocation3 + $0x1c] sm:$0xff]
        %v2313 = vld [vmem:[#allocation3 + $0x24] sm:$0xff]
        %v2314 = vld [vmem:[#allocation3 + $0x2c] sm:$0xff]
        %v2315 = vld [vmem:[#allocation3 + $0x34] sm:$0xff]
        %v2316 = vld [vmem:[#allocation3 + $0x3c] sm:$0xff]
        %v2317 = vld [vmem:[#allocation3 + $0x44] sm:$0xff]
        %v2318 = vld [vmem:[#allocation3 + $0x4c] sm:$0xff]
        %v2319 = vld [vmem:[#allocation3 + $0x54] sm:$0xff]
        %v2320 = vld [vmem:[#allocation3 + $0x5c] sm:$0xff]
        %v2321 = vld [vmem:[#allocation3 + $0x64] sm:$0xff]
        %v2322 = vld [vmem:[#allocation3 + $0x6c] sm:$0xff]
        %v2323 = vld [vmem:[#allocation3 + $0x74] sm:$0xff]
        %v2324 = vld [vmem:[#allocation3 + $0x7c] sm:$0xff]
        %v2325 = vpack.c.bf16 %v2310, %v2309
        %v2326 = vpack.c.bf16 %v2312, %v2311
        %v2327 = vpack.c.bf16 %v2314, %v2313
        %v2328 = vpack.c.bf16 %v2316, %v2315
        %v2329 = vpack.c.bf16 %v2318, %v2317
        %v2330 = vpack.c.bf16 %v2320, %v2319
        %v2331 = vpack.c.bf16 %v2322, %v2321
        %v2332 = vpack.c.bf16 %v2324, %v2323
        %s2333 = scalar_lea.vmem %s3, 256
        %v2334 = vld [vmem:[%s2333] sm:$0xff]
        %v2335 = vld [vmem:[%s2333 + $0x8] sm:$0xff]
        %v2336 = vld [vmem:[%s2333 + $0x10] sm:$0xff]
        %v2337 = vld [vmem:[%s2333 + $0x18] sm:$0xff]
        %v2338 = vld [vmem:[%s2333 + $0x20] sm:$0xff]
        %v2339 = vld [vmem:[%s2333 + $0x28] sm:$0xff]
        %v2340 = vld [vmem:[%s2333 + $0x30] sm:$0xff]
        %v2341 = vld [vmem:[%s2333 + $0x38] sm:$0xff]
        %v2342 = vld [vmem:[%s2333 + $0x40] sm:$0xff]
        %v2343 = vld [vmem:[%s2333 + $0x48] sm:$0xff]
        %v2344 = vld [vmem:[%s2333 + $0x50] sm:$0xff]
        %v2345 = vld [vmem:[%s2333 + $0x58] sm:$0xff]
        %v2346 = vld [vmem:[%s2333 + $0x60] sm:$0xff]
        %v2347 = vld [vmem:[%s2333 + $0x68] sm:$0xff]
        %v2348 = vld [vmem:[%s2333 + $0x70] sm:$0xff]
        %v2349 = vld [vmem:[%s2333 + $0x78] sm:$0xff]
        %v2366 = vunpack.c.l.b16 %v2334
        %v2367 = vunpack.c.h.b16 %v2334
        %v2368 = vunpack.c.l.b16 %v2335
        %v2369 = vunpack.c.h.b16 %v2335
        %v2370 = vunpack.c.l.b16 %v2336
        %v2371 = vunpack.c.h.b16 %v2336
        %v2372 = vunpack.c.l.b16 %v2337
        %v2373 = vunpack.c.h.b16 %v2337
        %v2374 = vunpack.c.l.b16 %v2338
        %v2375 = vunpack.c.h.b16 %v2338
        %v2376 = vunpack.c.l.b16 %v2339
        %v2377 = vunpack.c.h.b16 %v2339
        %v2378 = vunpack.c.l.b16 %v2340
        %v2379 = vunpack.c.h.b16 %v2340
        %v2380 = vunpack.c.l.b16 %v2341
        %v2381 = vunpack.c.h.b16 %v2341
        %v2382 = vunpack.c.l.b16 %v2342
        %v2383 = vunpack.c.h.b16 %v2342
        %v2384 = vunpack.c.l.b16 %v2343
        %v2385 = vunpack.c.h.b16 %v2343
        %v2386 = vunpack.c.l.b16 %v2344
        %v2387 = vunpack.c.h.b16 %v2344
        %v2388 = vunpack.c.l.b16 %v2345
        %v2389 = vunpack.c.h.b16 %v2345
        %v2390 = vunpack.c.l.b16 %v2346
        %v2391 = vunpack.c.h.b16 %v2346
        %v2392 = vunpack.c.l.b16 %v2347
        %v2393 = vunpack.c.h.b16 %v2347
        %v2394 = vunpack.c.l.b16 %v2348
        %v2395 = vunpack.c.h.b16 %v2348
        %v2396 = vunpack.c.l.b16 %v2349
        %v2397 = vunpack.c.h.b16 %v2349
        %v2398 = vpack.c.b16 %v2368, %v2366
        %v2399 = vpack.c.b16 %v2369, %v2367
        %v2400 = vpack.c.b16 %v2372, %v2370
        %v2401 = vpack.c.b16 %v2373, %v2371
        %v2402 = vpack.c.b16 %v2376, %v2374
        %v2403 = vpack.c.b16 %v2377, %v2375
        %v2404 = vpack.c.b16 %v2380, %v2378
        %v2405 = vpack.c.b16 %v2381, %v2379
        %v2406 = vpack.c.b16 %v2384, %v2382
        %v2407 = vpack.c.b16 %v2385, %v2383
        %v2408 = vpack.c.b16 %v2388, %v2386
        %v2409 = vpack.c.b16 %v2389, %v2387
        %v2410 = vpack.c.b16 %v2392, %v2390
        %v2411 = vpack.c.b16 %v2393, %v2391
        %v2412 = vpack.c.b16 %v2396, %v2394
        %v2413 = vpack.c.b16 %v2397, %v2395
        %2430 = vmatprep.subr.bf16.mxu0 %v2399
        %2431 = vmatpush1.bf16.msra.mxu0 %v2398
        %2432 = vmatprep.subr.bf16.mxu0 %v2401
        %2433 = vmatpush1.bf16.msra.mxu0 %v2400
        %2434 = vmatprep.subr.bf16.mxu0 %v2403
        %2435 = vmatpush1.bf16.msra.mxu0 %v2402
        %2436 = vmatprep.subr.bf16.mxu0 %v2405
        %2437 = vmatpush1.bf16.msra.mxu0 %v2404
        %2438 = vmatprep.subr.bf16.mxu0 %v2407
        %2439 = vmatpush1.bf16.msra.mxu0 %v2406
        %2440 = vmatprep.subr.bf16.mxu0 %v2409
        %2441 = vmatpush1.bf16.msra.mxu0 %v2408
        %2442 = vmatprep.subr.bf16.mxu0 %v2411
        %2443 = vmatpush1.bf16.msra.mxu0 %v2410
        %2444 = vmatprep.subr.bf16.mxu0 %v2413
        %2445 = vmatpush1.bf16.msra.mxu0 %v2412
        %2446 = vmatprep.subr.bf16.mxu0 0
        %2447 = vmatpush1.bf16.msra.mxu0 0
        %2448 = vmatprep.subr.bf16.mxu0 0
        %2449 = vmatpush1.bf16.msra.mxu0 0
        %2450 = vmatprep.subr.bf16.mxu0 0
        %2451 = vmatpush1.bf16.msra.mxu0 0
        %2452 = vmatprep.subr.bf16.mxu0 0
        %2453 = vmatpush1.bf16.msra.mxu0 0
        %2454 = vmatprep.subr.bf16.mxu0 0
        %2455 = vmatpush1.bf16.msra.mxu0 0
        %2456 = vmatprep.subr.bf16.mxu0 0
        %2457 = vmatpush1.bf16.msra.mxu0 0
        %2458 = vmatprep.subr.bf16.mxu0 0
        %2459 = vmatpush1.bf16.msra.mxu0 0
        %2460 = vmatprep.subr.bf16.mxu0 0
        %2461 = vmatpush1.bf16.msra.mxu0 0
        %2462 = vmatprep.mubr.bf16.mxu0 0
        %2463 = vmatmul.mubr.bf16.gmra.mrb[0].mxu0 %v2325
        %v2464 = vpop.f32.mrb[0].mxu0
        %v2465 = vadd.f32 0.0, %v2464
        %v2466 = vpop.f32.mrb[0].mxu0
        %v2467 = vadd.f32 0.0, %v2466
        %v2468 = vpop.f32.mrb[0].mxu0
        %v2469 = vadd.f32 0.0, %v2468
        %v2470 = vpop.f32.mrb[0].mxu0
        %v2471 = vadd.f32 0.0, %v2470
        %2472 = vmatprep.mubr.bf16.mxu0 0
        %2473 = vmatmul.mubr.bf16.gmra.mrb[0].mxu0 %v2326
        %v2474 = vpop.f32.mrb[0].mxu0
        %v2475 = vadd.f32 0.0, %v2474
        %v2476 = vpop.f32.mrb[0].mxu0
        %v2477 = vadd.f32 0.0, %v2476
        %v2478 = vpop.f32.mrb[0].mxu0
        %v2479 = vadd.f32 0.0, %v2478
        %v2480 = vpop.f32.mrb[0].mxu0
        %v2481 = vadd.f32 0.0, %v2480
        %2482 = vmatprep.mubr.bf16.mxu0 0
        %2483 = vmatmul.mubr.bf16.gmra.mrb[0].mxu0 %v2327
        %v2484 = vpop.f32.mrb[0].mxu0
        %v2485 = vadd.f32 0.0, %v2484
        %v2486 = vpop.f32.mrb[0].mxu0
        %v2487 = vadd.f32 0.0, %v2486
        %v2488 = vpop.f32.mrb[0].mxu0
        %v2489 = vadd.f32 0.0, %v2488
        %v2490 = vpop.f32.mrb[0].mxu0
        %v2491 = vadd.f32 0.0, %v2490
        %2492 = vmatprep.mubr.bf16.mxu0 0
        %2493 = vmatmul.mubr.bf16.gmra.mrb[0].mxu0 %v2328
        %v2494 = vpop.f32.mrb[0].mxu0
        %v2495 = vadd.f32 0.0, %v2494
        %v2496 = vpop.f32.mrb[0].mxu0
        %v2497 = vadd.f32 0.0, %v2496
        %v2498 = vpop.f32.mrb[0].mxu0
        %v2499 = vadd.f32 0.0, %v2498
        %v2500 = vpop.f32.mrb[0].mxu0
        %v2501 = vadd.f32 0.0, %v2500
        %2502 = vmatprep.mubr.bf16.mxu0 0
        %2503 = vmatmul.mubr.bf16.gmra.mrb[0].mxu0 %v2329
        %v2504 = vpop.f32.mrb[0].mxu0
        %v2505 = vadd.f32 0.0, %v2504
        %v2506 = vpop.f32.mrb[0].mxu0
        %v2507 = vadd.f32 0.0, %v2506
        %v2508 = vpop.f32.mrb[0].mxu0
        %v2509 = vadd.f32 0.0, %v2508
        %v2510 = vpop.f32.mrb[0].mxu0
        %v2511 = vadd.f32 0.0, %v2510
        %2512 = vmatprep.mubr.bf16.mxu0 0
        %2513 = vmatmul.mubr.bf16.gmra.mrb[0].mxu0 %v2330
        %v2514 = vpop.f32.mrb[0].mxu0
        %v2515 = vadd.f32 0.0, %v2514
        %v2516 = vpop.f32.mrb[0].mxu0
        %v2517 = vadd.f32 0.0, %v2516
        %v2518 = vpop.f32.mrb[0].mxu0
        %v2519 = vadd.f32 0.0, %v2518
        %v2520 = vpop.f32.mrb[0].mxu0
        %v2521 = vadd.f32 0.0, %v2520
        %2522 = vmatprep.mubr.bf16.mxu0 0
        %2523 = vmatmul.mubr.bf16.gmra.mrb[0].mxu0 %v2331
        %v2524 = vpop.f32.mrb[0].mxu0
        %v2525 = vadd.f32 0.0, %v2524
        %v2526 = vpop.f32.mrb[0].mxu0
        %v2527 = vadd.f32 0.0, %v2526
        %v2528 = vpop.f32.mrb[0].mxu0
        %v2529 = vadd.f32 0.0, %v2528
        %v2530 = vpop.f32.mrb[0].mxu0
        %v2531 = vadd.f32 0.0, %v2530
        %2532 = vmatprep.mubr.bf16.mxu0 0
        %2533 = vmatmul.mubr.bf16.gmra.mrb[0].mxu0 %v2332
        %v2534 = vpop.f32.mrb[0].mxu0
        %v2535 = vadd.f32 0.0, %v2534
        %v2536 = vpop.f32.mrb[0].mxu0
        %v2537 = vadd.f32 0.0, %v2536
        %v2538 = vpop.f32.mrb[0].mxu0
        %v2539 = vadd.f32 0.0, %v2538
        %v2540 = vpop.f32.mrb[0].mxu0
        %v2541 = vadd.f32 0.0, %v2540
        %2542 = vdwg.mxu0
        %v2543 = vadd.f32 %v2231, %v2465
        %v2544 = vadd.f32 %v2233, %v2467
        %v2545 = vadd.f32 %v2235, %v2469
        %v2546 = vadd.f32 %v2237, %v2471
        %v2547 = vadd.f32 %v2241, %v2475
        %v2548 = vadd.f32 %v2243, %v2477
        %v2549 = vadd.f32 %v2245, %v2479
        %v2550 = vadd.f32 %v2247, %v2481
        %v2551 = vadd.f32 %v2251, %v2485
        %v2552 = vadd.f32 %v2253, %v2487
        %v2553 = vadd.f32 %v2255, %v2489
        %v2554 = vadd.f32 %v2257, %v2491
        %v2555 = vadd.f32 %v2261, %v2495
        %v2556 = vadd.f32 %v2263, %v2497
        %v2557 = vadd.f32 %v2265, %v2499
        %v2558 = vadd.f32 %v2267, %v2501
        %v2559 = vadd.f32 %v2271, %v2505
        %v2560 = vadd.f32 %v2273, %v2507
        %v2561 = vadd.f32 %v2275, %v2509
        %v2562 = vadd.f32 %v2277, %v2511
        %v2563 = vadd.f32 %v2281, %v2515
        %v2564 = vadd.f32 %v2283, %v2517
        %v2565 = vadd.f32 %v2285, %v2519
        %v2566 = vadd.f32 %v2287, %v2521
        %v2567 = vadd.f32 %v2291, %v2525
        %v2568 = vadd.f32 %v2293, %v2527
        %v2569 = vadd.f32 %v2295, %v2529
        %v2570 = vadd.f32 %v2297, %v2531
        %v2571 = vadd.f32 %v2301, %v2535
        %v2572 = vadd.f32 %v2303, %v2537
        %v2573 = vadd.f32 %v2305, %v2539
        %v2574 = vadd.f32 %v2307, %v2541
        %v2575 = vld [vmem:[#allocation3 + $0x6] sm:$0xff]
        %v2576 = vld [vmem:[#allocation3 + $0xe] sm:$0xff]
        %v2577 = vld [vmem:[#allocation3 + $0x16] sm:$0xff]
        %v2578 = vld [vmem:[#allocation3 + $0x1e] sm:$0xff]
        %v2579 = vld [vmem:[#allocation3 + $0x26] sm:$0xff]
        %v2580 = vld [vmem:[#allocation3 + $0x2e] sm:$0xff]
        %v2581 = vld [vmem:[#allocation3 + $0x36] sm:$0xff]
        %v2582 = vld [vmem:[#allocation3 + $0x3e] sm:$0xff]
        %v2583 = vld [vmem:[#allocation3 + $0x46] sm:$0xff]
        %v2584 = vld [vmem:[#allocation3 + $0x4e] sm:$0xff]
        %v2585 = vld [vmem:[#allocation3 + $0x56] sm:$0xff]
        %v2586 = vld [vmem:[#allocation3 + $0x5e] sm:$0xff]
        %v2587 = vld [vmem:[#allocation3 + $0x66] sm:$0xff]
        %v2588 = vld [vmem:[#allocation3 + $0x6e] sm:$0xff]
        %v2589 = vld [vmem:[#allocation3 + $0x76] sm:$0xff]
        %v2590 = vld [vmem:[#allocation3 + $0x7e] sm:$0xff]
        %v2591 = vpack.c.bf16 %v2576, %v2575
        %v2592 = vpack.c.bf16 %v2578, %v2577
        %v2593 = vpack.c.bf16 %v2580, %v2579
        %v2594 = vpack.c.bf16 %v2582, %v2581
        %v2595 = vpack.c.bf16 %v2584, %v2583
        %v2596 = vpack.c.bf16 %v2586, %v2585
        %v2597 = vpack.c.bf16 %v2588, %v2587
        %v2598 = vpack.c.bf16 %v2590, %v2589
        %s2599 = scalar_lea.vmem %s3, 384
        %v2600 = vld [vmem:[%s2599] sm:$0xff]
        %v2601 = vld [vmem:[%s2599 + $0x8] sm:$0xff]
        %v2602 = vld [vmem:[%s2599 + $0x10] sm:$0xff]
        %v2603 = vld [vmem:[%s2599 + $0x18] sm:$0xff]
        %v2604 = vld [vmem:[%s2599 + $0x20] sm:$0xff]
        %v2605 = vld [vmem:[%s2599 + $0x28] sm:$0xff]
        %v2606 = vld [vmem:[%s2599 + $0x30] sm:$0xff]
        %v2607 = vld [vmem:[%s2599 + $0x38] sm:$0xff]
        %v2608 = vld [vmem:[%s2599 + $0x40] sm:$0xff]
        %v2609 = vld [vmem:[%s2599 + $0x48] sm:$0xff]
        %v2610 = vld [vmem:[%s2599 + $0x50] sm:$0xff]
        %v2611 = vld [vmem:[%s2599 + $0x58] sm:$0xff]
        %v2612 = vld [vmem:[%s2599 + $0x60] sm:$0xff]
        %v2613 = vld [vmem:[%s2599 + $0x68] sm:$0xff]
        %v2614 = vld [vmem:[%s2599 + $0x70] sm:$0xff]
        %v2615 = vld [vmem:[%s2599 + $0x78] sm:$0xff]
        %v2632 = vunpack.c.l.b16 %v2600
        %v2633 = vunpack.c.h.b16 %v2600
        %v2634 = vunpack.c.l.b16 %v2601
        %v2635 = vunpack.c.h.b16 %v2601
        %v2636 = vunpack.c.l.b16 %v2602
        %v2637 = vunpack.c.h.b16 %v2602
        %v2638 = vunpack.c.l.b16 %v2603
        %v2639 = vunpack.c.h.b16 %v2603
        %v2640 = vunpack.c.l.b16 %v2604
        %v2641 = vunpack.c.h.b16 %v2604
        %v2642 = vunpack.c.l.b16 %v2605
        %v2643 = vunpack.c.h.b16 %v2605
        %v2644 = vunpack.c.l.b16 %v2606
        %v2645 = vunpack.c.h.b16 %v2606
        %v2646 = vunpack.c.l.b16 %v2607
        %v2647 = vunpack.c.h.b16 %v2607
        %v2648 = vunpack.c.l.b16 %v2608
        %v2649 = vunpack.c.h.b16 %v2608
        %v2650 = vunpack.c.l.b16 %v2609
        %v2651 = vunpack.c.h.b16 %v2609
        %v2652 = vunpack.c.l.b16 %v2610
        %v2653 = vunpack.c.h.b16 %v2610
        %v2654 = vunpack.c.l.b16 %v2611
        %v2655 = vunpack.c.h.b16 %v2611
        %v2656 = vunpack.c.l.b16 %v2612
        %v2657 = vunpack.c.h.b16 %v2612
        %v2658 = vunpack.c.l.b16 %v2613
        %v2659 = vunpack.c.h.b16 %v2613
        %v2660 = vunpack.c.l.b16 %v2614
        %v2661 = vunpack.c.h.b16 %v2614
        %v2662 = vunpack.c.l.b16 %v2615
        %v2663 = vunpack.c.h.b16 %v2615
        %v2664 = vpack.c.b16 %v2634, %v2632
        %v2665 = vpack.c.b16 %v2635, %v2633
        %v2666 = vpack.c.b16 %v2638, %v2636
        %v2667 = vpack.c.b16 %v2639, %v2637
        %v2668 = vpack.c.b16 %v2642, %v2640
        %v2669 = vpack.c.b16 %v2643, %v2641
        %v2670 = vpack.c.b16 %v2646, %v2644
        %v2671 = vpack.c.b16 %v2647, %v2645
        %v2672 = vpack.c.b16 %v2650, %v2648
        %v2673 = vpack.c.b16 %v2651, %v2649
        %v2674 = vpack.c.b16 %v2654, %v2652
        %v2675 = vpack.c.b16 %v2655, %v2653
        %v2676 = vpack.c.b16 %v2658, %v2656
        %v2677 = vpack.c.b16 %v2659, %v2657
        %v2678 = vpack.c.b16 %v2662, %v2660
        %v2679 = vpack.c.b16 %v2663, %v2661
        %2696 = vmatprep.subr.bf16.mxu0 %v2665
        %2697 = vmatpush1.bf16.msra.mxu0 %v2664
        %2698 = vmatprep.subr.bf16.mxu0 %v2667
        %2699 = vmatpush1.bf16.msra.mxu0 %v2666
        %2700 = vmatprep.subr.bf16.mxu0 %v2669
        %2701 = vmatpush1.bf16.msra.mxu0 %v2668
        %2702 = vmatprep.subr.bf16.mxu0 %v2671
        %2703 = vmatpush1.bf16.msra.mxu0 %v2670
        %2704 = vmatprep.subr.bf16.mxu0 %v2673
        %2705 = vmatpush1.bf16.msra.mxu0 %v2672
        %2706 = vmatprep.subr.bf16.mxu0 %v2675
        %2707 = vmatpush1.bf16.msra.mxu0 %v2674
        %2708 = vmatprep.subr.bf16.mxu0 %v2677
        %2709 = vmatpush1.bf16.msra.mxu0 %v2676
        %2710 = vmatprep.subr.bf16.mxu0 %v2679
        %2711 = vmatpush1.bf16.msra.mxu0 %v2678
        %2712 = vmatprep.subr.bf16.mxu0 0
        %2713 = vmatpush1.bf16.msra.mxu0 0
        %2714 = vmatprep.subr.bf16.mxu0 0
        %2715 = vmatpush1.bf16.msra.mxu0 0
        %2716 = vmatprep.subr.bf16.mxu0 0
        %2717 = vmatpush1.bf16.msra.mxu0 0
        %2718 = vmatprep.subr.bf16.mxu0 0
        %2719 = vmatpush1.bf16.msra.mxu0 0
        %2720 = vmatprep.subr.bf16.mxu0 0
        %2721 = vmatpush1.bf16.msra.mxu0 0
        %2722 = vmatprep.subr.bf16.mxu0 0
        %2723 = vmatpush1.bf16.msra.mxu0 0
        %2724 = vmatprep.subr.bf16.mxu0 0
        %2725 = vmatpush1.bf16.msra.mxu0 0
        %2726 = vmatprep.subr.bf16.mxu0 0
        %2727 = vmatpush1.bf16.msra.mxu0 0
        %2728 = vmatprep.mubr.bf16.mxu0 0
        %2729 = vmatmul.mubr.bf16.gmra.mrb[0].mxu0 %v2591
        %v2730 = vpop.f32.mrb[0].mxu0
        %v2731 = vadd.f32 0.0, %v2730
        %v2732 = vpop.f32.mrb[0].mxu0
        %v2733 = vadd.f32 0.0, %v2732
        %v2734 = vpop.f32.mrb[0].mxu0
        %v2735 = vadd.f32 0.0, %v2734
        %v2736 = vpop.f32.mrb[0].mxu0
        %v2737 = vadd.f32 0.0, %v2736
        %2738 = vmatprep.mubr.bf16.mxu0 0
        %2739 = vmatmul.mubr.bf16.gmra.mrb[0].mxu0 %v2592
        %v2740 = vpop.f32.mrb[0].mxu0
        %v2741 = vadd.f32 0.0, %v2740
        %v2742 = vpop.f32.mrb[0].mxu0
        %v2743 = vadd.f32 0.0, %v2742
        %v2744 = vpop.f32.mrb[0].mxu0
        %v2745 = vadd.f32 0.0, %v2744
        %v2746 = vpop.f32.mrb[0].mxu0
        %v2747 = vadd.f32 0.0, %v2746
        %2748 = vmatprep.mubr.bf16.mxu0 0
        %2749 = vmatmul.mubr.bf16.gmra.mrb[0].mxu0 %v2593
        %v2750 = vpop.f32.mrb[0].mxu0
        %v2751 = vadd.f32 0.0, %v2750
        %v2752 = vpop.f32.mrb[0].mxu0
        %v2753 = vadd.f32 0.0, %v2752
        %v2754 = vpop.f32.mrb[0].mxu0
        %v2755 = vadd.f32 0.0, %v2754
        %v2756 = vpop.f32.mrb[0].mxu0
        %v2757 = vadd.f32 0.0, %v2756
        %2758 = vmatprep.mubr.bf16.mxu0 0
        %2759 = vmatmul.mubr.bf16.gmra.mrb[0].mxu0 %v2594
        %v2760 = vpop.f32.mrb[0].mxu0
        %v2761 = vadd.f32 0.0, %v2760
        %v2762 = vpop.f32.mrb[0].mxu0
        %v2763 = vadd.f32 0.0, %v2762
        %v2764 = vpop.f32.mrb[0].mxu0
        %v2765 = vadd.f32 0.0, %v2764
        %v2766 = vpop.f32.mrb[0].mxu0
        %v2767 = vadd.f32 0.0, %v2766
        %2768 = vmatprep.mubr.bf16.mxu0 0
        %2769 = vmatmul.mubr.bf16.gmra.mrb[0].mxu0 %v2595
        %v2770 = vpop.f32.mrb[0].mxu0
        %v2771 = vadd.f32 0.0, %v2770
        %v2772 = vpop.f32.mrb[0].mxu0
        %v2773 = vadd.f32 0.0, %v2772
        %v2774 = vpop.f32.mrb[0].mxu0
        %v2775 = vadd.f32 0.0, %v2774
        %v2776 = vpop.f32.mrb[0].mxu0
        %v2777 = vadd.f32 0.0, %v2776
        %2778 = vmatprep.mubr.bf16.mxu0 0
        %2779 = vmatmul.mubr.bf16.gmra.mrb[0].mxu0 %v2596
        %v2780 = vpop.f32.mrb[0].mxu0
        %v2781 = vadd.f32 0.0, %v2780
        %v2782 = vpop.f32.mrb[0].mxu0
        %v2783 = vadd.f32 0.0, %v2782
        %v2784 = vpop.f32.mrb[0].mxu0
        %v2785 = vadd.f32 0.0, %v2784
        %v2786 = vpop.f32.mrb[0].mxu0
        %v2787 = vadd.f32 0.0, %v2786
        %2788 = vmatprep.mubr.bf16.mxu0 0
        %2789 = vmatmul.mubr.bf16.gmra.mrb[0].mxu0 %v2597
        %v2790 = vpop.f32.mrb[0].mxu0
        %v2791 = vadd.f32 0.0, %v2790
        %v2792 = vpop.f32.mrb[0].mxu0
        %v2793 = vadd.f32 0.0, %v2792
        %v2794 = vpop.f32.mrb[0].mxu0
        %v2795 = vadd.f32 0.0, %v2794
        %v2796 = vpop.f32.mrb[0].mxu0
        %v2797 = vadd.f32 0.0, %v2796
        %2798 = vmatprep.mubr.bf16.mxu0 0
        %2799 = vmatmul.mubr.bf16.gmra.mrb[0].mxu0 %v2598
        %v2800 = vpop.f32.mrb[0].mxu0
        %v2801 = vadd.f32 0.0, %v2800
        %v2802 = vpop.f32.mrb[0].mxu0
        %v2803 = vadd.f32 0.0, %v2802
        %v2804 = vpop.f32.mrb[0].mxu0
        %v2805 = vadd.f32 0.0, %v2804
        %v2806 = vpop.f32.mrb[0].mxu0
        %v2807 = vadd.f32 0.0, %v2806
        %2808 = vdwg.mxu0
        %v2809 = vadd.f32 %v2543, %v2731
        %v2810 = vadd.f32 %v2544, %v2733
        %v2811 = vadd.f32 %v2545, %v2735
        %v2812 = vadd.f32 %v2546, %v2737
        %v2813 = vadd.f32 %v2547, %v2741
        %v2814 = vadd.f32 %v2548, %v2743
        %v2815 = vadd.f32 %v2549, %v2745
        %v2816 = vadd.f32 %v2550, %v2747
        %v2817 = vadd.f32 %v2551, %v2751
        %v2818 = vadd.f32 %v2552, %v2753
        %v2819 = vadd.f32 %v2553, %v2755
        %v2820 = vadd.f32 %v2554, %v2757
        %v2821 = vadd.f32 %v2555, %v2761
        %v2822 = vadd.f32 %v2556, %v2763
        %v2823 = vadd.f32 %v2557, %v2765
        %v2824 = vadd.f32 %v2558, %v2767
        %v2825 = vadd.f32 %v2559, %v2771
        %v2826 = vadd.f32 %v2560, %v2773
        %v2827 = vadd.f32 %v2561, %v2775
        %v2828 = vadd.f32 %v2562, %v2777
        %v2829 = vadd.f32 %v2563, %v2781
        %v2830 = vadd.f32 %v2564, %v2783
        %v2831 = vadd.f32 %v2565, %v2785
        %v2832 = vadd.f32 %v2566, %v2787
        %v2833 = vadd.f32 %v2567, %v2791
        %v2834 = vadd.f32 %v2568, %v2793
        %v2835 = vadd.f32 %v2569, %v2795
        %v2836 = vadd.f32 %v2570, %v2797
        %v2837 = vadd.f32 %v2571, %v2801
        %v2838 = vadd.f32 %v2572, %v2803
        %v2839 = vadd.f32 %v2573, %v2805
        %v2840 = vadd.f32 %v2574, %v2807
        %v2841 = vld [vmem:[#allocation3 + $0x8] sm:$0xff]
        %v2842 = vld [vmem:[#allocation3 + $0x10] sm:$0xff]
        %v2843 = vld [vmem:[#allocation3 + $0x18] sm:$0xff]
        %v2844 = vld [vmem:[#allocation3 + $0x20] sm:$0xff]
        %v2845 = vld [vmem:[#allocation3 + $0x28] sm:$0xff]
        %v2846 = vld [vmem:[#allocation3 + $0x30] sm:$0xff]
        %v2847 = vld [vmem:[#allocation3 + $0x38] sm:$0xff]
        %v2848 = vld [vmem:[#allocation3 + $0x40] sm:$0xff]
        %v2849 = vld [vmem:[#allocation3 + $0x48] sm:$0xff]
        %v2850 = vld [vmem:[#allocation3 + $0x50] sm:$0xff]
        %v2851 = vld [vmem:[#allocation3 + $0x58] sm:$0xff]
        %v2852 = vld [vmem:[#allocation3 + $0x60] sm:$0xff]
        %v2853 = vld [vmem:[#allocation3 + $0x68] sm:$0xff]
        %v2854 = vld [vmem:[#allocation3 + $0x70] sm:$0xff]
        %v2855 = vld [vmem:[#allocation3 + $0x78] sm:$0xff]
        %v2856 = vld [vmem:[#allocation3 + $0x80] sm:$0xff]
        %v2857 = vpack.c.bf16 %v2842, %v2841
        %v2858 = vpack.c.bf16 %v2844, %v2843
        %v2859 = vpack.c.bf16 %v2846, %v2845
        %v2860 = vpack.c.bf16 %v2848, %v2847
        %v2861 = vpack.c.bf16 %v2850, %v2849
        %v2862 = vpack.c.bf16 %v2852, %v2851
        %v2863 = vpack.c.bf16 %v2854, %v2853
        %v2864 = vpack.c.bf16 %v2856, %v2855
        %s2865 = scalar_lea.vmem %s3, 512
        %v2866 = vld [vmem:[%s2865] sm:$0xff]
        %v2867 = vld [vmem:[%s2865 + $0x8] sm:$0xff]
        %v2868 = vld [vmem:[%s2865 + $0x10] sm:$0xff]
        %v2869 = vld [vmem:[%s2865 + $0x18] sm:$0xff]
        %v2870 = vld [vmem:[%s2865 + $0x20] sm:$0xff]
        %v2871 = vld [vmem:[%s2865 + $0x28] sm:$0xff]
        %v2872 = vld [vmem:[%s2865 + $0x30] sm:$0xff]
        %v2873 = vld [vmem:[%s2865 + $0x38] sm:$0xff]
        %v2874 = vld [vmem:[%s2865 + $0x40] sm:$0xff]
        %v2875 = vld [vmem:[%s2865 + $0x48] sm:$0xff]
        %v2876 = vld [vmem:[%s2865 + $0x50] sm:$0xff]
        %v2877 = vld [vmem:[%s2865 + $0x58] sm:$0xff]
        %v2878 = vld [vmem:[%s2865 + $0x60] sm:$0xff]
        %v2879 = vld [vmem:[%s2865 + $0x68] sm:$0xff]
        %v2880 = vld [vmem:[%s2865 + $0x70] sm:$0xff]
        %v2881 = vld [vmem:[%s2865 + $0x78] sm:$0xff]
        %v2898 = vunpack.c.l.b16 %v2866
        %v2899 = vunpack.c.h.b16 %v2866
        %v2900 = vunpack.c.l.b16 %v2867
        %v2901 = vunpack.c.h.b16 %v2867
        %v2902 = vunpack.c.l.b16 %v2868
        %v2903 = vunpack.c.h.b16 %v2868
        %v2904 = vunpack.c.l.b16 %v2869
        %v2905 = vunpack.c.h.b16 %v2869
        %v2906 = vunpack.c.l.b16 %v2870
        %v2907 = vunpack.c.h.b16 %v2870
        %v2908 = vunpack.c.l.b16 %v2871
        %v2909 = vunpack.c.h.b16 %v2871
        %v2910 = vunpack.c.l.b16 %v2872
        %v2911 = vunpack.c.h.b16 %v2872
        %v2912 = vunpack.c.l.b16 %v2873
        %v2913 = vunpack.c.h.b16 %v2873
        %v2914 = vunpack.c.l.b16 %v2874
        %v2915 = vunpack.c.h.b16 %v2874
        %v2916 = vunpack.c.l.b16 %v2875
        %v2917 = vunpack.c.h.b16 %v2875
        %v2918 = vunpack.c.l.b16 %v2876
        %v2919 = vunpack.c.h.b16 %v2876
        %v2920 = vunpack.c.l.b16 %v2877
        %v2921 = vunpack.c.h.b16 %v2877
        %v2922 = vunpack.c.l.b16 %v2878
        %v2923 = vunpack.c.h.b16 %v2878
        %v2924 = vunpack.c.l.b16 %v2879
        %v2925 = vunpack.c.h.b16 %v2879
        %v2926 = vunpack.c.l.b16 %v2880
        %v2927 = vunpack.c.h.b16 %v2880
        %v2928 = vunpack.c.l.b16 %v2881
        %v2929 = vunpack.c.h.b16 %v2881
        %v2930 = vpack.c.b16 %v2900, %v2898
        %v2931 = vpack.c.b16 %v2901, %v2899
        %v2932 = vpack.c.b16 %v2904, %v2902
        %v2933 = vpack.c.b16 %v2905, %v2903
        %v2934 = vpack.c.b16 %v2908, %v2906
        %v2935 = vpack.c.b16 %v2909, %v2907
        %v2936 = vpack.c.b16 %v2912, %v2910
        %v2937 = vpack.c.b16 %v2913, %v2911
        %v2938 = vpack.c.b16 %v2916, %v2914
        %v2939 = vpack.c.b16 %v2917, %v2915
        %v2940 = vpack.c.b16 %v2920, %v2918
        %v2941 = vpack.c.b16 %v2921, %v2919
        %v2942 = vpack.c.b16 %v2924, %v2922
        %v2943 = vpack.c.b16 %v2925, %v2923
        %v2944 = vpack.c.b16 %v2928, %v2926
        %v2945 = vpack.c.b16 %v2929, %v2927
        %2962 = vmatprep.subr.bf16.mxu0 %v2931
        %2963 = vmatpush1.bf16.msra.mxu0 %v2930
        %2964 = vmatprep.subr.bf16.mxu0 %v2933
        %2965 = vmatpush1.bf16.msra.mxu0 %v2932
        %2966 = vmatprep.subr.bf16.mxu0 %v2935
        %2967 = vmatpush1.bf16.msra.mxu0 %v2934
        %2968 = vmatprep.subr.bf16.mxu0 %v2937
        %2969 = vmatpush1.bf16.msra.mxu0 %v2936
        %2970 = vmatprep.subr.bf16.mxu0 %v2939
        %2971 = vmatpush1.bf16.msra.mxu0 %v2938
        %2972 = vmatprep.subr.bf16.mxu0 %v2941
        %2973 = vmatpush1.bf16.msra.mxu0 %v2940
        %2974 = vmatprep.subr.bf16.mxu0 %v2943
        %2975 = vmatpush1.bf16.msra.mxu0 %v2942
        %2976 = vmatprep.subr.bf16.mxu0 %v2945
        %2977 = vmatpush1.bf16.msra.mxu0 %v2944
        %2978 = vmatprep.subr.bf16.mxu0 0
        %2979 = vmatpush1.bf16.msra.mxu0 0
        %2980 = vmatprep.subr.bf16.mxu0 0
        %2981 = vmatpush1.bf16.msra.mxu0 0
        %2982 = vmatprep.subr.bf16.mxu0 0
        %2983 = vmatpush1.bf16.msra.mxu0 0
        %2984 = vmatprep.subr.bf16.mxu0 0
        %2985 = vmatpush1.bf16.msra.mxu0 0
        %2986 = vmatprep.subr.bf16.mxu0 0
        %2987 = vmatpush1.bf16.msra.mxu0 0
        %2988 = vmatprep.subr.bf16.mxu0 0
        %2989 = vmatpush1.bf16.msra.mxu0 0
        %2990 = vmatprep.subr.bf16.mxu0 0
        %2991 = vmatpush1.bf16.msra.mxu0 0
        %2992 = vmatprep.subr.bf16.mxu0 0
        %2993 = vmatpush1.bf16.msra.mxu0 0
        %2994 = vmatprep.mubr.bf16.mxu0 0
        %2995 = vmatmul.mubr.bf16.gmra.mrb[0].mxu0 %v2857
        %v2996 = vpop.f32.mrb[0].mxu0
        %v2997 = vadd.f32 0.0, %v2996
        %v2998 = vpop.f32.mrb[0].mxu0
        %v2999 = vadd.f32 0.0, %v2998
        %v3000 = vpop.f32.mrb[0].mxu0
        %v3001 = vadd.f32 0.0, %v3000
        %v3002 = vpop.f32.mrb[0].mxu0
        %v3003 = vadd.f32 0.0, %v3002
        %3004 = vmatprep.mubr.bf16.mxu0 0
        %3005 = vmatmul.mubr.bf16.gmra.mrb[0].mxu0 %v2858
        %v3006 = vpop.f32.mrb[0].mxu0
        %v3007 = vadd.f32 0.0, %v3006
        %v3008 = vpop.f32.mrb[0].mxu0
        %v3009 = vadd.f32 0.0, %v3008
        %v3010 = vpop.f32.mrb[0].mxu0
        %v3011 = vadd.f32 0.0, %v3010
        %v3012 = vpop.f32.mrb[0].mxu0
        %v3013 = vadd.f32 0.0, %v3012
        %3014 = vmatprep.mubr.bf16.mxu0 0
        %3015 = vmatmul.mubr.bf16.gmra.mrb[0].mxu0 %v2859
        %v3016 = vpop.f32.mrb[0].mxu0
        %v3017 = vadd.f32 0.0, %v3016
        %v3018 = vpop.f32.mrb[0].mxu0
        %v3019 = vadd.f32 0.0, %v3018
        %v3020 = vpop.f32.mrb[0].mxu0
        %v3021 = vadd.f32 0.0, %v3020
        %v3022 = vpop.f32.mrb[0].mxu0
        %v3023 = vadd.f32 0.0, %v3022
        %3024 = vmatprep.mubr.bf16.mxu0 0
        %3025 = vmatmul.mubr.bf16.gmra.mrb[0].mxu0 %v2860
        %v3026 = vpop.f32.mrb[0].mxu0
        %v3027 = vadd.f32 0.0, %v3026
        %v3028 = vpop.f32.mrb[0].mxu0
        %v3029 = vadd.f32 0.0, %v3028
        %v3030 = vpop.f32.mrb[0].mxu0
        %v3031 = vadd.f32 0.0, %v3030
        %v3032 = vpop.f32.mrb[0].mxu0
        %v3033 = vadd.f32 0.0, %v3032
        %3034 = vmatprep.mubr.bf16.mxu0 0
        %3035 = vmatmul.mubr.bf16.gmra.mrb[0].mxu0 %v2861
        %v3036 = vpop.f32.mrb[0].mxu0
        %v3037 = vadd.f32 0.0, %v3036
        %v3038 = vpop.f32.mrb[0].mxu0
        %v3039 = vadd.f32 0.0, %v3038
        %v3040 = vpop.f32.mrb[0].mxu0
        %v3041 = vadd.f32 0.0, %v3040
        %v3042 = vpop.f32.mrb[0].mxu0
        %v3043 = vadd.f32 0.0, %v3042
        %3044 = vmatprep.mubr.bf16.mxu0 0
        %3045 = vmatmul.mubr.bf16.gmra.mrb[0].mxu0 %v2862
        %v3046 = vpop.f32.mrb[0].mxu0
        %v3047 = vadd.f32 0.0, %v3046
        %v3048 = vpop.f32.mrb[0].mxu0
        %v3049 = vadd.f32 0.0, %v3048
        %v3050 = vpop.f32.mrb[0].mxu0
        %v3051 = vadd.f32 0.0, %v3050
        %v3052 = vpop.f32.mrb[0].mxu0
        %v3053 = vadd.f32 0.0, %v3052
        %3054 = vmatprep.mubr.bf16.mxu0 0
        %3055 = vmatmul.mubr.bf16.gmra.mrb[0].mxu0 %v2863
        %v3056 = vpop.f32.mrb[0].mxu0
        %v3057 = vadd.f32 0.0, %v3056
        %v3058 = vpop.f32.mrb[0].mxu0
        %v3059 = vadd.f32 0.0, %v3058
        %v3060 = vpop.f32.mrb[0].mxu0
        %v3061 = vadd.f32 0.0, %v3060
        %v3062 = vpop.f32.mrb[0].mxu0
        %v3063 = vadd.f32 0.0, %v3062
        %3064 = vmatprep.mubr.bf16.mxu0 0
        %3065 = vmatmul.mubr.bf16.gmra.mrb[0].mxu0 %v2864
        %v3066 = vpop.f32.mrb[0].mxu0
        %v3067 = vadd.f32 0.0, %v3066
        %v3068 = vpop.f32.mrb[0].mxu0
        %v3069 = vadd.f32 0.0, %v3068
        %v3070 = vpop.f32.mrb[0].mxu0
        %v3071 = vadd.f32 0.0, %v3070
        %v3072 = vpop.f32.mrb[0].mxu0
        %v3073 = vadd.f32 0.0, %v3072
        %3074 = vdwg.mxu0
        %v3075 = vadd.f32 %v2809, %v2997
        %v3076 = vadd.f32 %v2810, %v2999
        %v3077 = vadd.f32 %v2811, %v3001
        %v3078 = vadd.f32 %v2812, %v3003
        %v3079 = vadd.f32 %v2813, %v3007
        %v3080 = vadd.f32 %v2814, %v3009
        %v3081 = vadd.f32 %v2815, %v3011
        %v3082 = vadd.f32 %v2816, %v3013
        %v3083 = vadd.f32 %v2817, %v3017
        %v3084 = vadd.f32 %v2818, %v3019
        %v3085 = vadd.f32 %v2819, %v3021
        %v3086 = vadd.f32 %v2820, %v3023
        %v3087 = vadd.f32 %v2821, %v3027
        %v3088 = vadd.f32 %v2822, %v3029
        %v3089 = vadd.f32 %v2823, %v3031
        %v3090 = vadd.f32 %v2824, %v3033
        %v3091 = vadd.f32 %v2825, %v3037
        %v3092 = vadd.f32 %v2826, %v3039
        %v3093 = vadd.f32 %v2827, %v3041
        %v3094 = vadd.f32 %v2828, %v3043
        %v3095 = vadd.f32 %v2829, %v3047
        %v3096 = vadd.f32 %v2830, %v3049
        %v3097 = vadd.f32 %v2831, %v3051
        %v3098 = vadd.f32 %v2832, %v3053
        %v3099 = vadd.f32 %v2833, %v3057
        %v3100 = vadd.f32 %v2834, %v3059
        %v3101 = vadd.f32 %v2835, %v3061
        %v3102 = vadd.f32 %v2836, %v3063
        %v3103 = vadd.f32 %v2837, %v3067
        %v3104 = vadd.f32 %v2838, %v3069
        %v3105 = vadd.f32 %v2839, %v3071
        %v3106 = vadd.f32 %v2840, %v3073
        %v3107 = vmax.f32 %v3075, %v3076
        %v3108 = vmax.f32 %v3077, %v3078
        %v3109 = vmax.f32 %v3079, %v3080
        %v3110 = vmax.f32 %v3081, %v3082
        %v3111 = vmax.f32 %v3083, %v3084
        %v3112 = vmax.f32 %v3085, %v3086
        %v3113 = vmax.f32 %v3087, %v3088
        %v3114 = vmax.f32 %v3089, %v3090
        %v3115 = vmax.f32 %v3091, %v3092
        %v3116 = vmax.f32 %v3093, %v3094
        %v3117 = vmax.f32 %v3095, %v3096
        %v3118 = vmax.f32 %v3097, %v3098
        %v3119 = vmax.f32 %v3099, %v3100
        %v3120 = vmax.f32 %v3101, %v3102
        %v3121 = vmax.f32 %v3103, %v3104
        %v3122 = vmax.f32 %v3105, %v3106
        %v3123 = vld [vmem:[%s4] sm:$0x1]
        %v3125 = vlaneseq
        %v3126 = vshrl.u32 %v3125, 7
        %v3127 = vsub.s32 0, %v3126
        %v3128 = vrot.slane %v3123, %v3127
        %v3130 = vadd.f32 %v3107, %v3128
        %v3131 = vadd.f32 %v3108, %v3128
        %v3132 = vadd.f32 %v3109, %v3128
        %v3133 = vadd.f32 %v3110, %v3128
        %v3134 = vadd.f32 %v3111, %v3128
        %v3135 = vadd.f32 %v3112, %v3128
        %v3136 = vadd.f32 %v3113, %v3128
        %v3137 = vadd.f32 %v3114, %v3128
        %v3138 = vadd.f32 %v3115, %v3128
        %v3139 = vadd.f32 %v3116, %v3128
        %v3140 = vadd.f32 %v3117, %v3128
        %v3141 = vadd.f32 %v3118, %v3128
        %v3142 = vadd.f32 %v3119, %v3128
        %v3143 = vadd.f32 %v3120, %v3128
        %v3144 = vadd.f32 %v3121, %v3128
        %v3145 = vadd.f32 %v3122, %v3128
        %v3146 = vmax.f32 %v3130, 0.0
        %v3147 = vmax.f32 %v3131, 0.0
        %v3148 = vmax.f32 %v3132, 0.0
        %v3149 = vmax.f32 %v3133, 0.0
        %v3150 = vmax.f32 %v3134, 0.0
        %v3151 = vmax.f32 %v3135, 0.0
        %v3152 = vmax.f32 %v3136, 0.0
        %v3153 = vmax.f32 %v3137, 0.0
        %v3154 = vmax.f32 %v3138, 0.0
        %v3155 = vmax.f32 %v3139, 0.0
        %v3156 = vmax.f32 %v3140, 0.0
        %v3157 = vmax.f32 %v3141, 0.0
        %v3158 = vmax.f32 %v3142, 0.0
        %v3159 = vmax.f32 %v3143, 0.0
        %v3160 = vmax.f32 %v3144, 0.0
        %v3161 = vmax.f32 %v3145, 0.0
        %v3162 = vpack.c.bf16 %v3147, %v3146
        %v3163 = vpack.c.bf16 %v3149, %v3148
        %v3164 = vpack.c.bf16 %v3151, %v3150
        %v3165 = vpack.c.bf16 %v3153, %v3152
        %v3166 = vpack.c.bf16 %v3155, %v3154
        %v3167 = vpack.c.bf16 %v3157, %v3156
        %v3168 = vpack.c.bf16 %v3159, %v3158
        %v3169 = vpack.c.bf16 %v3161, %v3160
        %v3170 = vld [vmem:[%s11] sm:$0x3]
        %3171 = vmatprep.subr.bf16.mxu0 0
        %3172 = vmatpush1.bf16.msra.mxu0 %v3162
        %3173 = vmatprep.subr.bf16.mxu0 0
        %3174 = vmatpush1.bf16.msra.mxu0 %v3163
        %3175 = vmatprep.subr.bf16.mxu0 0
        %3176 = vmatpush1.bf16.msra.mxu0 %v3164
        %3177 = vmatprep.subr.bf16.mxu0 0
        %3178 = vmatpush1.bf16.msra.mxu0 %v3165
        %3179 = vmatprep.subr.bf16.mxu0 0
        %3180 = vmatpush1.bf16.msra.mxu0 %v3166
        %3181 = vmatprep.subr.bf16.mxu0 0
        %3182 = vmatpush1.bf16.msra.mxu0 %v3167
        %3183 = vmatprep.subr.bf16.mxu0 0
        %3184 = vmatpush1.bf16.msra.mxu0 %v3168
        %3185 = vmatprep.subr.bf16.mxu0 0
        %3186 = vmatpush1.bf16.msra.mxu0 %v3169
        %3187 = vmatprep.subr.bf16.mxu0 0
        %3188 = vmatpush1.bf16.msra.mxu0 0
        %3189 = vmatprep.subr.bf16.mxu0 0
        %3190 = vmatpush1.bf16.msra.mxu0 0
        %3191 = vmatprep.subr.bf16.mxu0 0
        %3192 = vmatpush1.bf16.msra.mxu0 0
        %3193 = vmatprep.subr.bf16.mxu0 0
        %3194 = vmatpush1.bf16.msra.mxu0 0
        %3195 = vmatprep.subr.bf16.mxu0 0
        %3196 = vmatpush1.bf16.msra.mxu0 0
        %3197 = vmatprep.subr.bf16.mxu0 0
        %3198 = vmatpush1.bf16.msra.mxu0 0
        %3199 = vmatprep.subr.bf16.mxu0 0
        %3200 = vmatpush1.bf16.msra.mxu0 0
        %3201 = vmatprep.subr.bf16.mxu0 0
        %3202 = vmatpush1.bf16.msra.mxu0 0
        %3203 = vmatprep.mubr.bf16.mxu0 0
        %3204 = vmatmul.mubr.bf16.gmra.mrb[0].mxu0 %v3170
        %v3205 = vpop.f32.mrb[0].mxu0
        %v3206 = vadd.f32 0.0, %v3205
        %v3207 = vpop.f32.mrb[0].mxu0
        %v3208 = vpop.f32.mrb[0].mxu0
        %v3209 = vpop.f32.mrb[0].mxu0
        %3210 = vdwg.mxu0
        %v3211 = vld [vmem:[%s12] sm:$0x3]
        %3212 = vmatprep.subr.bf16.mxu0 0
        %3213 = vmatpush1.bf16.msra.mxu0 %v3162
        %3214 = vmatprep.subr.bf16.mxu0 0
        %3215 = vmatpush1.bf16.msra.mxu0 %v3163
        %3216 = vmatprep.subr.bf16.mxu0 0
        %3217 = vmatpush1.bf16.msra.mxu0 %v3164
        %3218 = vmatprep.subr.bf16.mxu0 0
        %3219 = vmatpush1.bf16.msra.mxu0 %v3165
        %3220 = vmatprep.subr.bf16.mxu0 0
        %3221 = vmatpush1.bf16.msra.mxu0 %v3166
        %3222 = vmatprep.subr.bf16.mxu0 0
        %3223 = vmatpush1.bf16.msra.mxu0 %v3167
        %3224 = vmatprep.subr.bf16.mxu0 0
        %3225 = vmatpush1.bf16.msra.mxu0 %v3168
        %3226 = vmatprep.subr.bf16.mxu0 0
        %3227 = vmatpush1.bf16.msra.mxu0 %v3169
        %3228 = vmatprep.subr.bf16.mxu0 0
        %3229 = vmatpush1.bf16.msra.mxu0 0
        %3230 = vmatprep.subr.bf16.mxu0 0
        %3231 = vmatpush1.bf16.msra.mxu0 0
        %3232 = vmatprep.subr.bf16.mxu0 0
        %3233 = vmatpush1.bf16.msra.mxu0 0
        %3234 = vmatprep.subr.bf16.mxu0 0
        %3235 = vmatpush1.bf16.msra.mxu0 0
        %3236 = vmatprep.subr.bf16.mxu0 0
        %3237 = vmatpush1.bf16.msra.mxu0 0
        %3238 = vmatprep.subr.bf16.mxu0 0
        %3239 = vmatpush1.bf16.msra.mxu0 0
        %3240 = vmatprep.subr.bf16.mxu0 0
        %3241 = vmatpush1.bf16.msra.mxu0 0
        %3242 = vmatprep.subr.bf16.mxu0 0
        %3243 = vmatpush1.bf16.msra.mxu0 0
        %3244 = vmatprep.mubr.bf16.mxu0 0
        %3245 = vmatmul.mubr.bf16.gmra.mrb[0].mxu0 %v3211
        %v3246 = vpop.f32.mrb[0].mxu0
        %v3247 = vadd.f32 0.0, %v3246
        %v3248 = vpop.f32.mrb[0].mxu0
        %v3249 = vpop.f32.mrb[0].mxu0
        %v3250 = vpop.f32.mrb[0].mxu0
        %3251 = vdwg.mxu0
        %v3252 = vmax.f32 %v3206, %v3247
        %v3253 = vpack.c.bf16 %v3252, %v3252
        %v3254 = vld [vmem:[%s5] sm:$0xf]
        %v3255 = vld [vmem:[%s5 + $0x4] sm:$0xf]
        %v3256 = vld [vmem:[%s5 + $0x8] sm:$0xf]
        %v3257 = vld [vmem:[%s5 + $0xc] sm:$0xf]
        %v3258 = vld [vmem:[%s5 + $0x10] sm:$0xf]
        %v3259 = vld [vmem:[%s5 + $0x14] sm:$0xf]
        %v3260 = vld [vmem:[%s5 + $0x18] sm:$0xf]
        %v3261 = vld [vmem:[%s5 + $0x1c] sm:$0xf]
        %v3262 = vld [vmem:[%s5 + $0x20] sm:$0xf]
        %v3263 = vld [vmem:[%s5 + $0x24] sm:$0xf]
        %v3264 = vld [vmem:[%s5 + $0x28] sm:$0xf]
        %v3265 = vld [vmem:[%s5 + $0x2c] sm:$0xf]
        %v3266 = vld [vmem:[%s5 + $0x30] sm:$0xf]
        %v3267 = vld [vmem:[%s5 + $0x34] sm:$0xf]
        %v3268 = vld [vmem:[%s5 + $0x38] sm:$0xf]
        %v3269 = vld [vmem:[%s5 + $0x3c] sm:$0xf]
        %s3270 = scalar_lea.vmem %s11, 2
        %v3271 = vld [vmem:[%s3270] sm:$0x3]
        %3272 = vmatprep.subr.bf16.mxu0 0
        %3273 = vmatpush1.bf16.msra.mxu0 %v3162
        %3274 = vmatprep.subr.bf16.mxu0 0
        %3275 = vmatpush1.bf16.msra.mxu0 %v3163
        %3276 = vmatprep.subr.bf16.mxu0 0
        %3277 = vmatpush1.bf16.msra.mxu0 %v3164
        %3278 = vmatprep.subr.bf16.mxu0 0
        %3279 = vmatpush1.bf16.msra.mxu0 %v3165
        %3280 = vmatprep.subr.bf16.mxu0 0
        %3281 = vmatpush1.bf16.msra.mxu0 %v3166
        %3282 = vmatprep.subr.bf16.mxu0 0
        %3283 = vmatpush1.bf16.msra.mxu0 %v3167
        %3284 = vmatprep.subr.bf16.mxu0 0
        %3285 = vmatpush1.bf16.msra.mxu0 %v3168
        %3286 = vmatprep.subr.bf16.mxu0 0
        %3287 = vmatpush1.bf16.msra.mxu0 %v3169
        %3288 = vmatprep.subr.bf16.mxu0 0
        %3289 = vmatpush1.bf16.msra.mxu0 0
        %3290 = vmatprep.subr.bf16.mxu0 0
        %3291 = vmatpush1.bf16.msra.mxu0 0
        %3292 = vmatprep.subr.bf16.mxu0 0
        %3293 = vmatpush1.bf16.msra.mxu0 0
        %3294 = vmatprep.subr.bf16.mxu0 0
        %3295 = vmatpush1.bf16.msra.mxu0 0
        %3296 = vmatprep.subr.bf16.mxu0 0
        %3297 = vmatpush1.bf16.msra.mxu0 0
        %3298 = vmatprep.subr.bf16.mxu0 0
        %3299 = vmatpush1.bf16.msra.mxu0 0
        %3300 = vmatprep.subr.bf16.mxu0 0
        %3301 = vmatpush1.bf16.msra.mxu0 0
        %3302 = vmatprep.subr.bf16.mxu0 0
        %3303 = vmatpush1.bf16.msra.mxu0 0
        %3304 = vmatprep.mubr.bf16.mxu0 0
        %3305 = vmatmul.mubr.bf16.gmra.mrb[0].mxu0 %v3271
        %v3306 = vpop.f32.mrb[0].mxu0
        %v3307 = vadd.f32 0.0, %v3306
        %v3308 = vpop.f32.mrb[0].mxu0
        %v3309 = vpop.f32.mrb[0].mxu0
        %v3310 = vpop.f32.mrb[0].mxu0
        %3311 = vdwg.mxu0
        %s3312 = scalar_lea.vmem %s12, 2
        %v3313 = vld [vmem:[%s3312] sm:$0x3]
        %3314 = vmatprep.subr.bf16.mxu0 0
        %3315 = vmatpush1.bf16.msra.mxu0 %v3162
        %3316 = vmatprep.subr.bf16.mxu0 0
        %3317 = vmatpush1.bf16.msra.mxu0 %v3163
        %3318 = vmatprep.subr.bf16.mxu0 0
        %3319 = vmatpush1.bf16.msra.mxu0 %v3164
        %3320 = vmatprep.subr.bf16.mxu0 0
        %3321 = vmatpush1.bf16.msra.mxu0 %v3165
        %3322 = vmatprep.subr.bf16.mxu0 0
        %3323 = vmatpush1.bf16.msra.mxu0 %v3166
        %3324 = vmatprep.subr.bf16.mxu0 0
        %3325 = vmatpush1.bf16.msra.mxu0 %v3167
        %3326 = vmatprep.subr.bf16.mxu0 0
        %3327 = vmatpush1.bf16.msra.mxu0 %v3168
        %3328 = vmatprep.subr.bf16.mxu0 0
        %3329 = vmatpush1.bf16.msra.mxu0 %v3169
        %3330 = vmatprep.subr.bf16.mxu0 0
        %3331 = vmatpush1.bf16.msra.mxu0 0
        %3332 = vmatprep.subr.bf16.mxu0 0
        %3333 = vmatpush1.bf16.msra.mxu0 0
        %3334 = vmatprep.subr.bf16.mxu0 0
        %3335 = vmatpush1.bf16.msra.mxu0 0
        %3336 = vmatprep.subr.bf16.mxu0 0
        %3337 = vmatpush1.bf16.msra.mxu0 0
        %3338 = vmatprep.subr.bf16.mxu0 0
        %3339 = vmatpush1.bf16.msra.mxu0 0
        %3340 = vmatprep.subr.bf16.mxu0 0
        %3341 = vmatpush1.bf16.msra.mxu0 0
        %3342 = vmatprep.subr.bf16.mxu0 0
        %3343 = vmatpush1.bf16.msra.mxu0 0
        %3344 = vmatprep.subr.bf16.mxu0 0
        %3345 = vmatpush1.bf16.msra.mxu0 0
        %3346 = vmatprep.mubr.bf16.mxu0 0
        %3347 = vmatmul.mubr.bf16.gmra.mrb[0].mxu0 %v3313
        %v3348 = vpop.f32.mrb[0].mxu0
        %v3349 = vadd.f32 0.0, %v3348
        %v3350 = vpop.f32.mrb[0].mxu0
        %v3351 = vpop.f32.mrb[0].mxu0
        %v3352 = vpop.f32.mrb[0].mxu0
        %3353 = vdwg.mxu0
        %v3354 = vmax.f32 %v3307, %v3349
        %v3355 = vpack.c.bf16 %v3354, %v3354
        %s3356 = scalar_lea.vmem %s5, 64
        %v3357 = vld [vmem:[%s3356] sm:$0xf]
        %v3358 = vld [vmem:[%s3356 + $0x4] sm:$0xf]
        %v3359 = vld [vmem:[%s3356 + $0x8] sm:$0xf]
        %v3360 = vld [vmem:[%s3356 + $0xc] sm:$0xf]
        %v3361 = vld [vmem:[%s3356 + $0x10] sm:$0xf]
        %v3362 = vld [vmem:[%s3356 + $0x14] sm:$0xf]
        %v3363 = vld [vmem:[%s3356 + $0x18] sm:$0xf]
        %v3364 = vld [vmem:[%s3356 + $0x1c] sm:$0xf]
        %v3365 = vld [vmem:[%s3356 + $0x20] sm:$0xf]
        %v3366 = vld [vmem:[%s3356 + $0x24] sm:$0xf]
        %v3367 = vld [vmem:[%s3356 + $0x28] sm:$0xf]
        %v3368 = vld [vmem:[%s3356 + $0x2c] sm:$0xf]
        %v3369 = vld [vmem:[%s3356 + $0x30] sm:$0xf]
        %v3370 = vld [vmem:[%s3356 + $0x34] sm:$0xf]
        %v3371 = vld [vmem:[%s3356 + $0x38] sm:$0xf]
        %v3372 = vld [vmem:[%s3356 + $0x3c] sm:$0xf]
        %v3389 = vunpack.c.l.b16 %v3357
        %v3390 = vunpack.c.l.b16 %v3358
        %v3391 = vunpack.c.l.b16 %v3359
        %v3392 = vunpack.c.l.b16 %v3360
        %v3393 = vunpack.c.l.b16 %v3361
        %v3394 = vunpack.c.l.b16 %v3362
        %v3395 = vunpack.c.l.b16 %v3363
        %v3396 = vunpack.c.l.b16 %v3364
        %v3397 = vunpack.c.l.b16 %v3365
        %v3398 = vunpack.c.l.b16 %v3366
        %v3399 = vunpack.c.l.b16 %v3367
        %v3400 = vunpack.c.l.b16 %v3368
        %v3401 = vunpack.c.l.b16 %v3369
        %v3402 = vunpack.c.l.b16 %v3370
        %v3403 = vunpack.c.l.b16 %v3371
        %v3404 = vunpack.c.l.b16 %v3372
        %v3405 = vpack.c.b16 %v3390, %v3389
        %v3406 = vpack.c.b16 %v3392, %v3391
        %v3407 = vpack.c.b16 %v3394, %v3393
        %v3408 = vpack.c.b16 %v3396, %v3395
        %v3409 = vpack.c.b16 %v3398, %v3397
        %v3410 = vpack.c.b16 %v3400, %v3399
        %v3411 = vpack.c.b16 %v3402, %v3401
        %v3412 = vpack.c.b16 %v3404, %v3403
        %3421 = vmatprep.subr.bf16.mxu0 0
        %3422 = vmatpush1.bf16.msra.mxu0 %v3405
        %3423 = vmatprep.subr.bf16.mxu0 0
        %3424 = vmatpush1.bf16.msra.mxu0 %v3406
        %3425 = vmatprep.subr.bf16.mxu0 0
        %3426 = vmatpush1.bf16.msra.mxu0 %v3407
        %3427 = vmatprep.subr.bf16.mxu0 0
        %3428 = vmatpush1.bf16.msra.mxu0 %v3408
        %3429 = vmatprep.subr.bf16.mxu0 0
        %3430 = vmatpush1.bf16.msra.mxu0 %v3409
        %3431 = vmatprep.subr.bf16.mxu0 0
        %3432 = vmatpush1.bf16.msra.mxu0 %v3410
        %3433 = vmatprep.subr.bf16.mxu0 0
        %3434 = vmatpush1.bf16.msra.mxu0 %v3411
        %3435 = vmatprep.subr.bf16.mxu0 0
        %3436 = vmatpush1.bf16.msra.mxu0 %v3412
        %3437 = vmatprep.subr.bf16.mxu0 0
        %3438 = vmatpush1.bf16.msra.mxu0 0
        %3439 = vmatprep.subr.bf16.mxu0 0
        %3440 = vmatpush1.bf16.msra.mxu0 0
        %3441 = vmatprep.subr.bf16.mxu0 0
        %3442 = vmatpush1.bf16.msra.mxu0 0
        %3443 = vmatprep.subr.bf16.mxu0 0
        %3444 = vmatpush1.bf16.msra.mxu0 0
        %3445 = vmatprep.subr.bf16.mxu0 0
        %3446 = vmatpush1.bf16.msra.mxu0 0
        %3447 = vmatprep.subr.bf16.mxu0 0
        %3448 = vmatpush1.bf16.msra.mxu0 0
        %3449 = vmatprep.subr.bf16.mxu0 0
        %3450 = vmatpush1.bf16.msra.mxu0 0
        %3451 = vmatprep.subr.bf16.mxu0 0
        %3452 = vmatpush1.bf16.msra.mxu0 0
        %3453 = vmatprep.mubr.bf16.mxu0 0
        %3454 = vmatmul.mubr.bf16.gmra.mrb[0].mxu0 %v3355
        %v3455 = vpop.f32.mrb[0].mxu0
        %v3456 = vadd.f32 0.0, %v3455
        %v3457 = vpop.f32.mrb[0].mxu0
        %v3458 = vpop.f32.mrb[0].mxu0
        %v3459 = vpop.f32.mrb[0].mxu0
        %3460 = vdwg.mxu0
        %v3477 = vunpack.c.l.b16 %v3254
        %v3478 = vunpack.c.l.b16 %v3255
        %v3479 = vunpack.c.l.b16 %v3256
        %v3480 = vunpack.c.l.b16 %v3257
        %v3481 = vunpack.c.l.b16 %v3258
        %v3482 = vunpack.c.l.b16 %v3259
        %v3483 = vunpack.c.l.b16 %v3260
        %v3484 = vunpack.c.l.b16 %v3261
        %v3485 = vunpack.c.l.b16 %v3262
        %v3486 = vunpack.c.l.b16 %v3263
        %v3487 = vunpack.c.l.b16 %v3264
        %v3488 = vunpack.c.l.b16 %v3265
        %v3489 = vunpack.c.l.b16 %v3266
        %v3490 = vunpack.c.l.b16 %v3267
        %v3491 = vunpack.c.l.b16 %v3268
        %v3492 = vunpack.c.l.b16 %v3269
        %v3493 = vpack.c.b16 %v3478, %v3477
        %v3494 = vpack.c.b16 %v3480, %v3479
        %v3495 = vpack.c.b16 %v3482, %v3481
        %v3496 = vpack.c.b16 %v3484, %v3483
        %v3497 = vpack.c.b16 %v3486, %v3485
        %v3498 = vpack.c.b16 %v3488, %v3487
        %v3499 = vpack.c.b16 %v3490, %v3489
        %v3500 = vpack.c.b16 %v3492, %v3491
        %3509 = vmatprep.subr.bf16.mxu0 0
        %3510 = vmatpush1.bf16.msra.mxu0 %v3493
        %3511 = vmatprep.subr.bf16.mxu0 0
        %3512 = vmatpush1.bf16.msra.mxu0 %v3494
        %3513 = vmatprep.subr.bf16.mxu0 0
        %3514 = vmatpush1.bf16.msra.mxu0 %v3495
        %3515 = vmatprep.subr.bf16.mxu0 0
        %3516 = vmatpush1.bf16.msra.mxu0 %v3496
        %3517 = vmatprep.subr.bf16.mxu0 0
        %3518 = vmatpush1.bf16.msra.mxu0 %v3497
        %3519 = vmatprep.subr.bf16.mxu0 0
        %3520 = vmatpush1.bf16.msra.mxu0 %v3498
        %3521 = vmatprep.subr.bf16.mxu0 0
        %3522 = vmatpush1.bf16.msra.mxu0 %v3499
        %3523 = vmatprep.subr.bf16.mxu0 0
        %3524 = vmatpush1.bf16.msra.mxu0 %v3500
        %3525 = vmatprep.subr.bf16.mxu0 0
        %3526 = vmatpush1.bf16.msra.mxu0 0
        %3527 = vmatprep.subr.bf16.mxu0 0
        %3528 = vmatpush1.bf16.msra.mxu0 0
        %3529 = vmatprep.subr.bf16.mxu0 0
        %3530 = vmatpush1.bf16.msra.mxu0 0
        %3531 = vmatprep.subr.bf16.mxu0 0
        %3532 = vmatpush1.bf16.msra.mxu0 0
        %3533 = vmatprep.subr.bf16.mxu0 0
        %3534 = vmatpush1.bf16.msra.mxu0 0
        %3535 = vmatprep.subr.bf16.mxu0 0
        %3536 = vmatpush1.bf16.msra.mxu0 0
        %3537 = vmatprep.subr.bf16.mxu0 0
        %3538 = vmatpush1.bf16.msra.mxu0 0
        %3539 = vmatprep.subr.bf16.mxu0 0
        %3540 = vmatpush1.bf16.msra.mxu0 0
        %3541 = vmatprep.mubr.bf16.mxu0 0
        %3542 = vmatmul.mubr.bf16.gmra.mrb[0].mxu0 %v3253
        %v3543 = vpop.f32.mrb[0].mxu0
        %v3544 = vadd.f32 %v3456, %v3543
        %v3545 = vpop.f32.mrb[0].mxu0
        %v3546 = vpop.f32.mrb[0].mxu0
        %v3547 = vpop.f32.mrb[0].mxu0
        %3548 = vdwg.mxu0
        %s3549 = scalar_lea.vmem %s11, 4
        %v3550 = vld [vmem:[%s3549] sm:$0x3]
        %3551 = vmatprep.subr.bf16.mxu0 0
        %3552 = vmatpush1.bf16.msra.mxu0 %v3162
        %3553 = vmatprep.subr.bf16.mxu0 0
        %3554 = vmatpush1.bf16.msra.mxu0 %v3163
        %3555 = vmatprep.subr.bf16.mxu0 0
        %3556 = vmatpush1.bf16.msra.mxu0 %v3164
        %3557 = vmatprep.subr.bf16.mxu0 0
        %3558 = vmatpush1.bf16.msra.mxu0 %v3165
        %3559 = vmatprep.subr.bf16.mxu0 0
        %3560 = vmatpush1.bf16.msra.mxu0 %v3166
        %3561 = vmatprep.subr.bf16.mxu0 0
        %3562 = vmatpush1.bf16.msra.mxu0 %v3167
        %3563 = vmatprep.subr.bf16.mxu0 0
        %3564 = vmatpush1.bf16.msra.mxu0 %v3168
        %3565 = vmatprep.subr.bf16.mxu0 0
        %3566 = vmatpush1.bf16.msra.mxu0 %v3169
        %3567 = vmatprep.subr.bf16.mxu0 0
        %3568 = vmatpush1.bf16.msra.mxu0 0
        %3569 = vmatprep.subr.bf16.mxu0 0
        %3570 = vmatpush1.bf16.msra.mxu0 0
        %3571 = vmatprep.subr.bf16.mxu0 0
        %3572 = vmatpush1.bf16.msra.mxu0 0
        %3573 = vmatprep.subr.bf16.mxu0 0
        %3574 = vmatpush1.bf16.msra.mxu0 0
        %3575 = vmatprep.subr.bf16.mxu0 0
        %3576 = vmatpush1.bf16.msra.mxu0 0
        %3577 = vmatprep.subr.bf16.mxu0 0
        %3578 = vmatpush1.bf16.msra.mxu0 0
        %3579 = vmatprep.subr.bf16.mxu0 0
        %3580 = vmatpush1.bf16.msra.mxu0 0
        %3581 = vmatprep.subr.bf16.mxu0 0
        %3582 = vmatpush1.bf16.msra.mxu0 0
        %3583 = vmatprep.mubr.bf16.mxu0 0
        %3584 = vmatmul.mubr.bf16.gmra.mrb[0].mxu0 %v3550
        %v3585 = vpop.f32.mrb[0].mxu0
        %v3586 = vadd.f32 0.0, %v3585
        %v3587 = vpop.f32.mrb[0].mxu0
        %v3588 = vpop.f32.mrb[0].mxu0
        %v3589 = vpop.f32.mrb[0].mxu0
        %3590 = vdwg.mxu0
        %s3591 = scalar_lea.vmem %s12, 4
        %v3592 = vld [vmem:[%s3591] sm:$0x3]
        %3593 = vmatprep.subr.bf16.mxu0 0
        %3594 = vmatpush1.bf16.msra.mxu0 %v3162
        %3595 = vmatprep.subr.bf16.mxu0 0
        %3596 = vmatpush1.bf16.msra.mxu0 %v3163
        %3597 = vmatprep.subr.bf16.mxu0 0
        %3598 = vmatpush1.bf16.msra.mxu0 %v3164
        %3599 = vmatprep.subr.bf16.mxu0 0
        %3600 = vmatpush1.bf16.msra.mxu0 %v3165
        %3601 = vmatprep.subr.bf16.mxu0 0
        %3602 = vmatpush1.bf16.msra.mxu0 %v3166
        %3603 = vmatprep.subr.bf16.mxu0 0
        %3604 = vmatpush1.bf16.msra.mxu0 %v3167
        %3605 = vmatprep.subr.bf16.mxu0 0
        %3606 = vmatpush1.bf16.msra.mxu0 %v3168
        %3607 = vmatprep.subr.bf16.mxu0 0
        %3608 = vmatpush1.bf16.msra.mxu0 %v3169
        %3609 = vmatprep.subr.bf16.mxu0 0
        %3610 = vmatpush1.bf16.msra.mxu0 0
        %3611 = vmatprep.subr.bf16.mxu0 0
        %3612 = vmatpush1.bf16.msra.mxu0 0
        %3613 = vmatprep.subr.bf16.mxu0 0
        %3614 = vmatpush1.bf16.msra.mxu0 0
        %3615 = vmatprep.subr.bf16.mxu0 0
        %3616 = vmatpush1.bf16.msra.mxu0 0
        %3617 = vmatprep.subr.bf16.mxu0 0
        %3618 = vmatpush1.bf16.msra.mxu0 0
        %3619 = vmatprep.subr.bf16.mxu0 0
        %3620 = vmatpush1.bf16.msra.mxu0 0
        %3621 = vmatprep.subr.bf16.mxu0 0
        %3622 = vmatpush1.bf16.msra.mxu0 0
        %3623 = vmatprep.subr.bf16.mxu0 0
        %3624 = vmatpush1.bf16.msra.mxu0 0
        %3625 = vmatprep.mubr.bf16.mxu0 0
        %3626 = vmatmul.mubr.bf16.gmra.mrb[0].mxu0 %v3592
        %v3627 = vpop.f32.mrb[0].mxu0
        %v3628 = vadd.f32 0.0, %v3627
        %v3629 = vpop.f32.mrb[0].mxu0
        %v3630 = vpop.f32.mrb[0].mxu0
        %v3631 = vpop.f32.mrb[0].mxu0
        %3632 = vdwg.mxu0
        %v3633 = vmax.f32 %v3586, %v3628
        %v3634 = vpack.c.bf16 %v3633, %v3633
        %s3635 = scalar_lea.vmem %s5, 128
        %v3636 = vld [vmem:[%s3635] sm:$0xf]
        %v3637 = vld [vmem:[%s3635 + $0x4] sm:$0xf]
        %v3638 = vld [vmem:[%s3635 + $0x8] sm:$0xf]
        %v3639 = vld [vmem:[%s3635 + $0xc] sm:$0xf]
        %v3640 = vld [vmem:[%s3635 + $0x10] sm:$0xf]
        %v3641 = vld [vmem:[%s3635 + $0x14] sm:$0xf]
        %v3642 = vld [vmem:[%s3635 + $0x18] sm:$0xf]
        %v3643 = vld [vmem:[%s3635 + $0x1c] sm:$0xf]
        %v3644 = vld [vmem:[%s3635 + $0x20] sm:$0xf]
        %v3645 = vld [vmem:[%s3635 + $0x24] sm:$0xf]
        %v3646 = vld [vmem:[%s3635 + $0x28] sm:$0xf]
        %v3647 = vld [vmem:[%s3635 + $0x2c] sm:$0xf]
        %v3648 = vld [vmem:[%s3635 + $0x30] sm:$0xf]
        %v3649 = vld [vmem:[%s3635 + $0x34] sm:$0xf]
        %v3650 = vld [vmem:[%s3635 + $0x38] sm:$0xf]
        %v3651 = vld [vmem:[%s3635 + $0x3c] sm:$0xf]
        %v3668 = vunpack.c.l.b16 %v3636
        %v3669 = vunpack.c.l.b16 %v3637
        %v3670 = vunpack.c.l.b16 %v3638
        %v3671 = vunpack.c.l.b16 %v3639
        %v3672 = vunpack.c.l.b16 %v3640
        %v3673 = vunpack.c.l.b16 %v3641
        %v3674 = vunpack.c.l.b16 %v3642
        %v3675 = vunpack.c.l.b16 %v3643
        %v3676 = vunpack.c.l.b16 %v3644
        %v3677 = vunpack.c.l.b16 %v3645
        %v3678 = vunpack.c.l.b16 %v3646
        %v3679 = vunpack.c.l.b16 %v3647
        %v3680 = vunpack.c.l.b16 %v3648
        %v3681 = vunpack.c.l.b16 %v3649
        %v3682 = vunpack.c.l.b16 %v3650
        %v3683 = vunpack.c.l.b16 %v3651
        %v3684 = vpack.c.b16 %v3669, %v3668
        %v3685 = vpack.c.b16 %v3671, %v3670
        %v3686 = vpack.c.b16 %v3673, %v3672
        %v3687 = vpack.c.b16 %v3675, %v3674
        %v3688 = vpack.c.b16 %v3677, %v3676
        %v3689 = vpack.c.b16 %v3679, %v3678
        %v3690 = vpack.c.b16 %v3681, %v3680
        %v3691 = vpack.c.b16 %v3683, %v3682
        %3700 = vmatprep.subr.bf16.mxu0 0
        %3701 = vmatpush1.bf16.msra.mxu0 %v3684
        %3702 = vmatprep.subr.bf16.mxu0 0
        %3703 = vmatpush1.bf16.msra.mxu0 %v3685
        %3704 = vmatprep.subr.bf16.mxu0 0
        %3705 = vmatpush1.bf16.msra.mxu0 %v3686
        %3706 = vmatprep.subr.bf16.mxu0 0
        %3707 = vmatpush1.bf16.msra.mxu0 %v3687
        %3708 = vmatprep.subr.bf16.mxu0 0
        %3709 = vmatpush1.bf16.msra.mxu0 %v3688
        %3710 = vmatprep.subr.bf16.mxu0 0
        %3711 = vmatpush1.bf16.msra.mxu0 %v3689
        %3712 = vmatprep.subr.bf16.mxu0 0
        %3713 = vmatpush1.bf16.msra.mxu0 %v3690
        %3714 = vmatprep.subr.bf16.mxu0 0
        %3715 = vmatpush1.bf16.msra.mxu0 %v3691
        %3716 = vmatprep.subr.bf16.mxu0 0
        %3717 = vmatpush1.bf16.msra.mxu0 0
        %3718 = vmatprep.subr.bf16.mxu0 0
        %3719 = vmatpush1.bf16.msra.mxu0 0
        %3720 = vmatprep.subr.bf16.mxu0 0
        %3721 = vmatpush1.bf16.msra.mxu0 0
        %3722 = vmatprep.subr.bf16.mxu0 0
        %3723 = vmatpush1.bf16.msra.mxu0 0
        %3724 = vmatprep.subr.bf16.mxu0 0
        %3725 = vmatpush1.bf16.msra.mxu0 0
        %3726 = vmatprep.subr.bf16.mxu0 0
        %3727 = vmatpush1.bf16.msra.mxu0 0
        %3728 = vmatprep.subr.bf16.mxu0 0
        %3729 = vmatpush1.bf16.msra.mxu0 0
        %3730 = vmatprep.subr.bf16.mxu0 0
        %3731 = vmatpush1.bf16.msra.mxu0 0
        %3732 = vmatprep.mubr.bf16.mxu0 0
        %3733 = vmatmul.mubr.bf16.gmra.mrb[0].mxu0 %v3634
        %v3734 = vpop.f32.mrb[0].mxu0
        %v3735 = vadd.f32 0.0, %v3734
        %v3736 = vpop.f32.mrb[0].mxu0
        %v3737 = vpop.f32.mrb[0].mxu0
        %v3738 = vpop.f32.mrb[0].mxu0
        %3739 = vdwg.mxu0
        %v3740 = vadd.f32 %v3544, %v3735
        %s3741 = scalar_lea.vmem %s11, 6
        %v3742 = vld [vmem:[%s3741] sm:$0x3]
        %3743 = vmatprep.subr.bf16.mxu0 0
        %3744 = vmatpush1.bf16.msra.mxu0 %v3162
        %3745 = vmatprep.subr.bf16.mxu0 0
        %3746 = vmatpush1.bf16.msra.mxu0 %v3163
        %3747 = vmatprep.subr.bf16.mxu0 0
        %3748 = vmatpush1.bf16.msra.mxu0 %v3164
        %3749 = vmatprep.subr.bf16.mxu0 0
        %3750 = vmatpush1.bf16.msra.mxu0 %v3165
        %3751 = vmatprep.subr.bf16.mxu0 0
        %3752 = vmatpush1.bf16.msra.mxu0 %v3166
        %3753 = vmatprep.subr.bf16.mxu0 0
        %3754 = vmatpush1.bf16.msra.mxu0 %v3167
        %3755 = vmatprep.subr.bf16.mxu0 0
        %3756 = vmatpush1.bf16.msra.mxu0 %v3168
        %3757 = vmatprep.subr.bf16.mxu0 0
        %3758 = vmatpush1.bf16.msra.mxu0 %v3169
        %3759 = vmatprep.subr.bf16.mxu0 0
        %3760 = vmatpush1.bf16.msra.mxu0 0
        %3761 = vmatprep.subr.bf16.mxu0 0
        %3762 = vmatpush1.bf16.msra.mxu0 0
        %3763 = vmatprep.subr.bf16.mxu0 0
        %3764 = vmatpush1.bf16.msra.mxu0 0
        %3765 = vmatprep.subr.bf16.mxu0 0
        %3766 = vmatpush1.bf16.msra.mxu0 0
        %3767 = vmatprep.subr.bf16.mxu0 0
        %3768 = vmatpush1.bf16.msra.mxu0 0
        %3769 = vmatprep.subr.bf16.mxu0 0
        %3770 = vmatpush1.bf16.msra.mxu0 0
        %3771 = vmatprep.subr.bf16.mxu0 0
        %3772 = vmatpush1.bf16.msra.mxu0 0
        %3773 = vmatprep.subr.bf16.mxu0 0
        %3774 = vmatpush1.bf16.msra.mxu0 0
        %3775 = vmatprep.mubr.bf16.mxu0 0
        %3776 = vmatmul.mubr.bf16.gmra.mrb[0].mxu0 %v3742
        %v3777 = vpop.f32.mrb[0].mxu0
        %v3778 = vadd.f32 0.0, %v3777
        %v3779 = vpop.f32.mrb[0].mxu0
        %v3780 = vpop.f32.mrb[0].mxu0
        %v3781 = vpop.f32.mrb[0].mxu0
        %3782 = vdwg.mxu0
        %s3783 = scalar_lea.vmem %s12, 6
        %v3784 = vld [vmem:[%s3783] sm:$0x3]
        %3785 = vmatprep.subr.bf16.mxu0 0
        %3786 = vmatpush1.bf16.msra.mxu0 %v3162
        %3787 = vmatprep.subr.bf16.mxu0 0
        %3788 = vmatpush1.bf16.msra.mxu0 %v3163
        %3789 = vmatprep.subr.bf16.mxu0 0
        %3790 = vmatpush1.bf16.msra.mxu0 %v3164
        %3791 = vmatprep.subr.bf16.mxu0 0
        %3792 = vmatpush1.bf16.msra.mxu0 %v3165
        %3793 = vmatprep.subr.bf16.mxu0 0
        %3794 = vmatpush1.bf16.msra.mxu0 %v3166
        %3795 = vmatprep.subr.bf16.mxu0 0
        %3796 = vmatpush1.bf16.msra.mxu0 %v3167
        %3797 = vmatprep.subr.bf16.mxu0 0
        %3798 = vmatpush1.bf16.msra.mxu0 %v3168
        %3799 = vmatprep.subr.bf16.mxu0 0
        %3800 = vmatpush1.bf16.msra.mxu0 %v3169
        %3801 = vmatprep.subr.bf16.mxu0 0
        %3802 = vmatpush1.bf16.msra.mxu0 0
        %3803 = vmatprep.subr.bf16.mxu0 0
        %3804 = vmatpush1.bf16.msra.mxu0 0
        %3805 = vmatprep.subr.bf16.mxu0 0
        %3806 = vmatpush1.bf16.msra.mxu0 0
        %3807 = vmatprep.subr.bf16.mxu0 0
        %3808 = vmatpush1.bf16.msra.mxu0 0
        %3809 = vmatprep.subr.bf16.mxu0 0
        %3810 = vmatpush1.bf16.msra.mxu0 0
        %3811 = vmatprep.subr.bf16.mxu0 0
        %3812 = vmatpush1.bf16.msra.mxu0 0
        %3813 = vmatprep.subr.bf16.mxu0 0
        %3814 = vmatpush1.bf16.msra.mxu0 0
        %3815 = vmatprep.subr.bf16.mxu0 0
        %3816 = vmatpush1.bf16.msra.mxu0 0
        %3817 = vmatprep.mubr.bf16.mxu0 0
        %3818 = vmatmul.mubr.bf16.gmra.mrb[0].mxu0 %v3784
        %v3819 = vpop.f32.mrb[0].mxu0
        %v3820 = vadd.f32 0.0, %v3819
        %v3821 = vpop.f32.mrb[0].mxu0
        %v3822 = vpop.f32.mrb[0].mxu0
        %v3823 = vpop.f32.mrb[0].mxu0
        %3824 = vdwg.mxu0
        %v3825 = vmax.f32 %v3778, %v3820
        %v3826 = vpack.c.bf16 %v3825, %v3825
        %s3827 = scalar_lea.vmem %s5, 192
        %v3828 = vld [vmem:[%s3827] sm:$0xf]
        %v3829 = vld [vmem:[%s3827 + $0x4] sm:$0xf]
        %v3830 = vld [vmem:[%s3827 + $0x8] sm:$0xf]
        %v3831 = vld [vmem:[%s3827 + $0xc] sm:$0xf]
        %v3832 = vld [vmem:[%s3827 + $0x10] sm:$0xf]
        %v3833 = vld [vmem:[%s3827 + $0x14] sm:$0xf]
        %v3834 = vld [vmem:[%s3827 + $0x18] sm:$0xf]
        %v3835 = vld [vmem:[%s3827 + $0x1c] sm:$0xf]
        %v3836 = vld [vmem:[%s3827 + $0x20] sm:$0xf]
        %v3837 = vld [vmem:[%s3827 + $0x24] sm:$0xf]
        %v3838 = vld [vmem:[%s3827 + $0x28] sm:$0xf]
        %v3839 = vld [vmem:[%s3827 + $0x2c] sm:$0xf]
        %v3840 = vld [vmem:[%s3827 + $0x30] sm:$0xf]
        %v3841 = vld [vmem:[%s3827 + $0x34] sm:$0xf]
        %v3842 = vld [vmem:[%s3827 + $0x38] sm:$0xf]
        %v3843 = vld [vmem:[%s3827 + $0x3c] sm:$0xf]
        %v3860 = vunpack.c.l.b16 %v3828
        %v3861 = vunpack.c.l.b16 %v3829
        %v3862 = vunpack.c.l.b16 %v3830
        %v3863 = vunpack.c.l.b16 %v3831
        %v3864 = vunpack.c.l.b16 %v3832
        %v3865 = vunpack.c.l.b16 %v3833
        %v3866 = vunpack.c.l.b16 %v3834
        %v3867 = vunpack.c.l.b16 %v3835
        %v3868 = vunpack.c.l.b16 %v3836
        %v3869 = vunpack.c.l.b16 %v3837
        %v3870 = vunpack.c.l.b16 %v3838
        %v3871 = vunpack.c.l.b16 %v3839
        %v3872 = vunpack.c.l.b16 %v3840
        %v3873 = vunpack.c.l.b16 %v3841
        %v3874 = vunpack.c.l.b16 %v3842
        %v3875 = vunpack.c.l.b16 %v3843
        %v3876 = vpack.c.b16 %v3861, %v3860
        %v3877 = vpack.c.b16 %v3863, %v3862
        %v3878 = vpack.c.b16 %v3865, %v3864
        %v3879 = vpack.c.b16 %v3867, %v3866
        %v3880 = vpack.c.b16 %v3869, %v3868
        %v3881 = vpack.c.b16 %v3871, %v3870
        %v3882 = vpack.c.b16 %v3873, %v3872
        %v3883 = vpack.c.b16 %v3875, %v3874
        %3892 = vmatprep.subr.bf16.mxu0 0
        %3893 = vmatpush1.bf16.msra.mxu0 %v3876
        %3894 = vmatprep.subr.bf16.mxu0 0
        %3895 = vmatpush1.bf16.msra.mxu0 %v3877
        %3896 = vmatprep.subr.bf16.mxu0 0
        %3897 = vmatpush1.bf16.msra.mxu0 %v3878
        %3898 = vmatprep.subr.bf16.mxu0 0
        %3899 = vmatpush1.bf16.msra.mxu0 %v3879
        %3900 = vmatprep.subr.bf16.mxu0 0
        %3901 = vmatpush1.bf16.msra.mxu0 %v3880
        %3902 = vmatprep.subr.bf16.mxu0 0
        %3903 = vmatpush1.bf16.msra.mxu0 %v3881
        %3904 = vmatprep.subr.bf16.mxu0 0
        %3905 = vmatpush1.bf16.msra.mxu0 %v3882
        %3906 = vmatprep.subr.bf16.mxu0 0
        %3907 = vmatpush1.bf16.msra.mxu0 %v3883
        %3908 = vmatprep.subr.bf16.mxu0 0
        %3909 = vmatpush1.bf16.msra.mxu0 0
        %3910 = vmatprep.subr.bf16.mxu0 0
        %3911 = vmatpush1.bf16.msra.mxu0 0
        %3912 = vmatprep.subr.bf16.mxu0 0
        %3913 = vmatpush1.bf16.msra.mxu0 0
        %3914 = vmatprep.subr.bf16.mxu0 0
        %3915 = vmatpush1.bf16.msra.mxu0 0
        %3916 = vmatprep.subr.bf16.mxu0 0
        %3917 = vmatpush1.bf16.msra.mxu0 0
        %3918 = vmatprep.subr.bf16.mxu0 0
        %3919 = vmatpush1.bf16.msra.mxu0 0
        %3920 = vmatprep.subr.bf16.mxu0 0
        %3921 = vmatpush1.bf16.msra.mxu0 0
        %3922 = vmatprep.subr.bf16.mxu0 0
        %3923 = vmatpush1.bf16.msra.mxu0 0
        %3924 = vmatprep.mubr.bf16.mxu0 0
        %3925 = vmatmul.mubr.bf16.gmra.mrb[0].mxu0 %v3826
        %v3926 = vpop.f32.mrb[0].mxu0
        %v3927 = vadd.f32 0.0, %v3926
        %v3928 = vpop.f32.mrb[0].mxu0
        %v3929 = vpop.f32.mrb[0].mxu0
        %v3930 = vpop.f32.mrb[0].mxu0
        %3931 = vdwg.mxu0
        %v3932 = vadd.f32 %v3740, %v3927
        %s3933 = scalar_lea.vmem %s11, 8
        %v3934 = vld [vmem:[%s3933] sm:$0x3]
        %3935 = vmatprep.subr.bf16.mxu0 0
        %3936 = vmatpush1.bf16.msra.mxu0 %v3162
        %3937 = vmatprep.subr.bf16.mxu0 0
        %3938 = vmatpush1.bf16.msra.mxu0 %v3163
        %3939 = vmatprep.subr.bf16.mxu0 0
        %3940 = vmatpush1.bf16.msra.mxu0 %v3164
        %3941 = vmatprep.subr.bf16.mxu0 0
        %3942 = vmatpush1.bf16.msra.mxu0 %v3165
        %3943 = vmatprep.subr.bf16.mxu0 0
        %3944 = vmatpush1.bf16.msra.mxu0 %v3166
        %3945 = vmatprep.subr.bf16.mxu0 0
        %3946 = vmatpush1.bf16.msra.mxu0 %v3167
        %3947 = vmatprep.subr.bf16.mxu0 0
        %3948 = vmatpush1.bf16.msra.mxu0 %v3168
        %3949 = vmatprep.subr.bf16.mxu0 0
        %3950 = vmatpush1.bf16.msra.mxu0 %v3169
        %3951 = vmatprep.subr.bf16.mxu0 0
        %3952 = vmatpush1.bf16.msra.mxu0 0
        %3953 = vmatprep.subr.bf16.mxu0 0
        %3954 = vmatpush1.bf16.msra.mxu0 0
        %3955 = vmatprep.subr.bf16.mxu0 0
        %3956 = vmatpush1.bf16.msra.mxu0 0
        %3957 = vmatprep.subr.bf16.mxu0 0
        %3958 = vmatpush1.bf16.msra.mxu0 0
        %3959 = vmatprep.subr.bf16.mxu0 0
        %3960 = vmatpush1.bf16.msra.mxu0 0
        %3961 = vmatprep.subr.bf16.mxu0 0
        %3962 = vmatpush1.bf16.msra.mxu0 0
        %3963 = vmatprep.subr.bf16.mxu0 0
        %3964 = vmatpush1.bf16.msra.mxu0 0
        %3965 = vmatprep.subr.bf16.mxu0 0
        %3966 = vmatpush1.bf16.msra.mxu0 0
        %3967 = vmatprep.mubr.bf16.mxu0 0
        %3968 = vmatmul.mubr.bf16.gmra.mrb[0].mxu0 %v3934
        %v3969 = vpop.f32.mrb[0].mxu0
        %v3970 = vadd.f32 0.0, %v3969
        %v3971 = vpop.f32.mrb[0].mxu0
        %v3972 = vpop.f32.mrb[0].mxu0
        %v3973 = vpop.f32.mrb[0].mxu0
        %3974 = vdwg.mxu0
        %s3975 = scalar_lea.vmem %s12, 8
        %v3976 = vld [vmem:[%s3975] sm:$0x3]
        %3977 = vmatprep.subr.bf16.mxu0 0
        %3978 = vmatpush1.bf16.msra.mxu0 %v3162
        %3979 = vmatprep.subr.bf16.mxu0 0
        %3980 = vmatpush1.bf16.msra.mxu0 %v3163
        %3981 = vmatprep.subr.bf16.mxu0 0
        %3982 = vmatpush1.bf16.msra.mxu0 %v3164
        %3983 = vmatprep.subr.bf16.mxu0 0
        %3984 = vmatpush1.bf16.msra.mxu0 %v3165
        %3985 = vmatprep.subr.bf16.mxu0 0
        %3986 = vmatpush1.bf16.msra.mxu0 %v3166
        %3987 = vmatprep.subr.bf16.mxu0 0
        %3988 = vmatpush1.bf16.msra.mxu0 %v3167
        %3989 = vmatprep.subr.bf16.mxu0 0
        %3990 = vmatpush1.bf16.msra.mxu0 %v3168
        %3991 = vmatprep.subr.bf16.mxu0 0
        %3992 = vmatpush1.bf16.msra.mxu0 %v3169
        %3993 = vmatprep.subr.bf16.mxu0 0
        %3994 = vmatpush1.bf16.msra.mxu0 0
        %3995 = vmatprep.subr.bf16.mxu0 0
        %3996 = vmatpush1.bf16.msra.mxu0 0
        %3997 = vmatprep.subr.bf16.mxu0 0
        %3998 = vmatpush1.bf16.msra.mxu0 0
        %3999 = vmatprep.subr.bf16.mxu0 0
        %4000 = vmatpush1.bf16.msra.mxu0 0
        %4001 = vmatprep.subr.bf16.mxu0 0
        %4002 = vmatpush1.bf16.msra.mxu0 0
        %4003 = vmatprep.subr.bf16.mxu0 0
        %4004 = vmatpush1.bf16.msra.mxu0 0
        %4005 = vmatprep.subr.bf16.mxu0 0
        %4006 = vmatpush1.bf16.msra.mxu0 0
        %4007 = vmatprep.subr.bf16.mxu0 0
        %4008 = vmatpush1.bf16.msra.mxu0 0
        %4009 = vmatprep.mubr.bf16.mxu0 0
        %4010 = vmatmul.mubr.bf16.gmra.mrb[0].mxu0 %v3976
        %v4011 = vpop.f32.mrb[0].mxu0
        %v4012 = vadd.f32 0.0, %v4011
        %v4013 = vpop.f32.mrb[0].mxu0
        %v4014 = vpop.f32.mrb[0].mxu0
        %v4015 = vpop.f32.mrb[0].mxu0
        %4016 = vdwg.mxu0
        %v4017 = vmax.f32 %v3970, %v4012
        %v4018 = vpack.c.bf16 %v4017, %v4017
        %s4019 = scalar_lea.vmem %s5, 256
        %v4020 = vld [vmem:[%s4019] sm:$0xf]
        %v4021 = vld [vmem:[%s4019 + $0x4] sm:$0xf]
        %v4022 = vld [vmem:[%s4019 + $0x8] sm:$0xf]
        %v4023 = vld [vmem:[%s4019 + $0xc] sm:$0xf]
        %v4024 = vld [vmem:[%s4019 + $0x10] sm:$0xf]
        %v4025 = vld [vmem:[%s4019 + $0x14] sm:$0xf]
        %v4026 = vld [vmem:[%s4019 + $0x18] sm:$0xf]
        %v4027 = vld [vmem:[%s4019 + $0x1c] sm:$0xf]
        %v4028 = vld [vmem:[%s4019 + $0x20] sm:$0xf]
        %v4029 = vld [vmem:[%s4019 + $0x24] sm:$0xf]
        %v4030 = vld [vmem:[%s4019 + $0x28] sm:$0xf]
        %v4031 = vld [vmem:[%s4019 + $0x2c] sm:$0xf]
        %v4032 = vld [vmem:[%s4019 + $0x30] sm:$0xf]
        %v4033 = vld [vmem:[%s4019 + $0x34] sm:$0xf]
        %v4034 = vld [vmem:[%s4019 + $0x38] sm:$0xf]
        %v4035 = vld [vmem:[%s4019 + $0x3c] sm:$0xf]
        %v4052 = vunpack.c.l.b16 %v4020
        %v4053 = vunpack.c.l.b16 %v4021
        %v4054 = vunpack.c.l.b16 %v4022
        %v4055 = vunpack.c.l.b16 %v4023
        %v4056 = vunpack.c.l.b16 %v4024
        %v4057 = vunpack.c.l.b16 %v4025
        %v4058 = vunpack.c.l.b16 %v4026
        %v4059 = vunpack.c.l.b16 %v4027
        %v4060 = vunpack.c.l.b16 %v4028
        %v4061 = vunpack.c.l.b16 %v4029
        %v4062 = vunpack.c.l.b16 %v4030
        %v4063 = vunpack.c.l.b16 %v4031
        %v4064 = vunpack.c.l.b16 %v4032
        %v4065 = vunpack.c.l.b16 %v4033
        %v4066 = vunpack.c.l.b16 %v4034
        %v4067 = vunpack.c.l.b16 %v4035
        %v4068 = vpack.c.b16 %v4053, %v4052
        %v4069 = vpack.c.b16 %v4055, %v4054
        %v4070 = vpack.c.b16 %v4057, %v4056
        %v4071 = vpack.c.b16 %v4059, %v4058
        %v4072 = vpack.c.b16 %v4061, %v4060
        %v4073 = vpack.c.b16 %v4063, %v4062
        %v4074 = vpack.c.b16 %v4065, %v4064
        %v4075 = vpack.c.b16 %v4067, %v4066
        %4084 = vmatprep.subr.bf16.mxu0 0
        %4085 = vmatpush1.bf16.msra.mxu0 %v4068
        %4086 = vmatprep.subr.bf16.mxu0 0
        %4087 = vmatpush1.bf16.msra.mxu0 %v4069
        %4088 = vmatprep.subr.bf16.mxu0 0
        %4089 = vmatpush1.bf16.msra.mxu0 %v4070
        %4090 = vmatprep.subr.bf16.mxu0 0
        %4091 = vmatpush1.bf16.msra.mxu0 %v4071
        %4092 = vmatprep.subr.bf16.mxu0 0
        %4093 = vmatpush1.bf16.msra.mxu0 %v4072
        %4094 = vmatprep.subr.bf16.mxu0 0
        %4095 = vmatpush1.bf16.msra.mxu0 %v4073
        %4096 = vmatprep.subr.bf16.mxu0 0
        %4097 = vmatpush1.bf16.msra.mxu0 %v4074
        %4098 = vmatprep.subr.bf16.mxu0 0
        %4099 = vmatpush1.bf16.msra.mxu0 %v4075
        %4100 = vmatprep.subr.bf16.mxu0 0
        %4101 = vmatpush1.bf16.msra.mxu0 0
        %4102 = vmatprep.subr.bf16.mxu0 0
        %4103 = vmatpush1.bf16.msra.mxu0 0
        %4104 = vmatprep.subr.bf16.mxu0 0
        %4105 = vmatpush1.bf16.msra.mxu0 0
        %4106 = vmatprep.subr.bf16.mxu0 0
        %4107 = vmatpush1.bf16.msra.mxu0 0
        %4108 = vmatprep.subr.bf16.mxu0 0
        %4109 = vmatpush1.bf16.msra.mxu0 0
        %4110 = vmatprep.subr.bf16.mxu0 0
        %4111 = vmatpush1.bf16.msra.mxu0 0
        %4112 = vmatprep.subr.bf16.mxu0 0
        %4113 = vmatpush1.bf16.msra.mxu0 0
        %4114 = vmatprep.subr.bf16.mxu0 0
        %4115 = vmatpush1.bf16.msra.mxu0 0
        %4116 = vmatprep.mubr.bf16.mxu0 0
        %4117 = vmatmul.mubr.bf16.gmra.mrb[0].mxu0 %v4018
        %v4118 = vpop.f32.mrb[0].mxu0
        %v4119 = vadd.f32 0.0, %v4118
        %v4120 = vpop.f32.mrb[0].mxu0
        %v4121 = vpop.f32.mrb[0].mxu0
        %v4122 = vpop.f32.mrb[0].mxu0
        %4123 = vdwg.mxu0
        %v4124 = vadd.f32 %v3932, %v4119
        %v4125 = vld [vmem:[%s6] sm:$0x1]
        %v4127 = vlaneseq
        %v4128 = vshrl.u32 %v4127, 7
        %v4129 = vsub.s32 0, %v4128
        %v4130 = vrot.slane %v4125, %v4129
        %v4132 = vadd.f32 %v4124, %v4130
        %v4133 = vmax.f32 %v4132, 0.0
        %v4134 = vpack.c.bf16 %v4133, %v4133
        %v4135 = vld [vmem:[%s7] sm:$0xf]
        %v4136 = vld [vmem:[%s7 + $0x4] sm:$0xf]
        %v4137 = vld [vmem:[%s7 + $0x8] sm:$0xf]
        %v4138 = vld [vmem:[%s7 + $0xc] sm:$0xf]
        %v4139 = vld [vmem:[%s7 + $0x10] sm:$0xf]
        %v4140 = vld [vmem:[%s7 + $0x14] sm:$0xf]
        %v4141 = vld [vmem:[%s7 + $0x18] sm:$0xf]
        %v4142 = vld [vmem:[%s7 + $0x1c] sm:$0xf]
        %v4143 = vld [vmem:[%s7 + $0x20] sm:$0xf]
        %v4144 = vld [vmem:[%s7 + $0x24] sm:$0xf]
        %v4145 = vld [vmem:[%s7 + $0x28] sm:$0xf]
        %v4146 = vld [vmem:[%s7 + $0x2c] sm:$0xf]
        %v4147 = vld [vmem:[%s7 + $0x30] sm:$0xf]
        %v4148 = vld [vmem:[%s7 + $0x34] sm:$0xf]
        %v4149 = vld [vmem:[%s7 + $0x38] sm:$0xf]
        %v4150 = vld [vmem:[%s7 + $0x3c] sm:$0xf]
        %v4151 = vld [vmem:[%s8] sm:$0x1]
        %v4153 = vlaneseq
        %v4154 = vshrl.u32 %v4153, 7
        %v4155 = vsub.s32 0, %v4154
        %v4156 = vrot.slane %v4151, %v4155
        %v4174 = vunpack.c.l.b16 %v4135
        %v4175 = vunpack.c.l.b16 %v4136
        %v4176 = vunpack.c.l.b16 %v4137
        %v4177 = vunpack.c.l.b16 %v4138
        %v4178 = vunpack.c.l.b16 %v4139
        %v4179 = vunpack.c.l.b16 %v4140
        %v4180 = vunpack.c.l.b16 %v4141
        %v4181 = vunpack.c.l.b16 %v4142
        %v4182 = vunpack.c.l.b16 %v4143
        %v4183 = vunpack.c.l.b16 %v4144
        %v4184 = vunpack.c.l.b16 %v4145
        %v4185 = vunpack.c.l.b16 %v4146
        %v4186 = vunpack.c.l.b16 %v4147
        %v4187 = vunpack.c.l.b16 %v4148
        %v4188 = vunpack.c.l.b16 %v4149
        %v4189 = vunpack.c.l.b16 %v4150
        %v4190 = vpack.c.b16 %v4175, %v4174
        %v4191 = vpack.c.b16 %v4177, %v4176
        %v4192 = vpack.c.b16 %v4179, %v4178
        %v4193 = vpack.c.b16 %v4181, %v4180
        %v4194 = vpack.c.b16 %v4183, %v4182
        %v4195 = vpack.c.b16 %v4185, %v4184
        %v4196 = vpack.c.b16 %v4187, %v4186
        %v4197 = vpack.c.b16 %v4189, %v4188
        %4206 = vmatprep.subr.bf16.mxu0 0
        %4207 = vmatpush1.bf16.msra.mxu0 %v4190
        %4208 = vmatprep.subr.bf16.mxu0 0
        %4209 = vmatpush1.bf16.msra.mxu0 %v4191
        %4210 = vmatprep.subr.bf16.mxu0 0
        %4211 = vmatpush1.bf16.msra.mxu0 %v4192
        %4212 = vmatprep.subr.bf16.mxu0 0
        %4213 = vmatpush1.bf16.msra.mxu0 %v4193
        %4214 = vmatprep.subr.bf16.mxu0 0
        %4215 = vmatpush1.bf16.msra.mxu0 %v4194
        %4216 = vmatprep.subr.bf16.mxu0 0
        %4217 = vmatpush1.bf16.msra.mxu0 %v4195
        %4218 = vmatprep.subr.bf16.mxu0 0
        %4219 = vmatpush1.bf16.msra.mxu0 %v4196
        %4220 = vmatprep.subr.bf16.mxu0 0
        %4221 = vmatpush1.bf16.msra.mxu0 %v4197
        %4222 = vmatprep.subr.bf16.mxu0 0
        %4223 = vmatpush1.bf16.msra.mxu0 0
        %4224 = vmatprep.subr.bf16.mxu0 0
        %4225 = vmatpush1.bf16.msra.mxu0 0
        %4226 = vmatprep.subr.bf16.mxu0 0
        %4227 = vmatpush1.bf16.msra.mxu0 0
        %4228 = vmatprep.subr.bf16.mxu0 0
        %4229 = vmatpush1.bf16.msra.mxu0 0
        %4230 = vmatprep.subr.bf16.mxu0 0
        %4231 = vmatpush1.bf16.msra.mxu0 0
        %4232 = vmatprep.subr.bf16.mxu0 0
        %4233 = vmatpush1.bf16.msra.mxu0 0
        %4234 = vmatprep.subr.bf16.mxu0 0
        %4235 = vmatpush1.bf16.msra.mxu0 0
        %4236 = vmatprep.subr.bf16.mxu0 0
        %4237 = vmatpush1.bf16.msra.mxu0 0
        %4238 = vmatprep.mubr.bf16.mxu0 0
        %4239 = vmatmul.mubr.bf16.gmra.mrb[0].mxu0 %v4134
        %v4240 = vpop.f32.mrb[0].mxu0
        %v4241 = vadd.f32 %v4156, %v4240
        %v4242 = vpop.f32.mrb[0].mxu0
        %v4243 = vpop.f32.mrb[0].mxu0
        %v4244 = vpop.f32.mrb[0].mxu0
        %4245 = vdwg.mxu0
        %v4246 = vmax.f32 %v4241, 0.0
        %v4247 = vpack.c.bf16 %v4246, %v4246
        %v4248 = vld [vmem:[%s9] sm:$0xf]
        %v4249 = vld [vmem:[%s9 + $0x4] sm:$0xf]
        %v4250 = vld [vmem:[%s9 + $0x8] sm:$0xf]
        %v4251 = vld [vmem:[%s9 + $0xc] sm:$0xf]
        %v4252 = vld [vmem:[%s9 + $0x10] sm:$0xf]
        %v4253 = vld [vmem:[%s9 + $0x14] sm:$0xf]
        %v4254 = vld [vmem:[%s9 + $0x18] sm:$0xf]
        %v4255 = vld [vmem:[%s9 + $0x1c] sm:$0xf]
        %v4256 = vld [vmem:[%s9 + $0x20] sm:$0xf]
        %v4257 = vld [vmem:[%s9 + $0x24] sm:$0xf]
        %v4258 = vld [vmem:[%s9 + $0x28] sm:$0xf]
        %v4259 = vld [vmem:[%s9 + $0x2c] sm:$0xf]
        %v4260 = vld [vmem:[%s9 + $0x30] sm:$0xf]
        %v4261 = vld [vmem:[%s9 + $0x34] sm:$0xf]
        %v4262 = vld [vmem:[%s9 + $0x38] sm:$0xf]
        %v4263 = vld [vmem:[%s9 + $0x3c] sm:$0xf]
        %v4264 = vld [vmem:[%s10] sm:$0x1]
        %v4266 = vlaneseq
        %v4267 = vshrl.u32 %v4266, 7
        %v4268 = vsub.s32 0, %v4267
        %v4269 = vrot.slane %v4264, %v4268
        %v4287 = vunpack.c.l.b16 %v4248
        %v4288 = vunpack.c.l.b16 %v4249
        %v4289 = vunpack.c.l.b16 %v4250
        %v4290 = vunpack.c.l.b16 %v4251
        %v4291 = vunpack.c.l.b16 %v4252
        %v4292 = vunpack.c.l.b16 %v4253
        %v4293 = vunpack.c.l.b16 %v4254
        %v4294 = vunpack.c.l.b16 %v4255
        %v4295 = vunpack.c.l.b16 %v4256
        %v4296 = vunpack.c.l.b16 %v4257
        %v4297 = vunpack.c.l.b16 %v4258
        %v4298 = vunpack.c.l.b16 %v4259
        %v4299 = vunpack.c.l.b16 %v4260
        %v4300 = vunpack.c.l.b16 %v4261
        %v4301 = vunpack.c.l.b16 %v4262
        %v4302 = vunpack.c.l.b16 %v4263
        %v4303 = vpack.c.b16 %v4288, %v4287
        %v4304 = vpack.c.b16 %v4290, %v4289
        %v4305 = vpack.c.b16 %v4292, %v4291
        %v4306 = vpack.c.b16 %v4294, %v4293
        %v4307 = vpack.c.b16 %v4296, %v4295
        %v4308 = vpack.c.b16 %v4298, %v4297
        %v4309 = vpack.c.b16 %v4300, %v4299
        %v4310 = vpack.c.b16 %v4302, %v4301
        %4319 = vmatprep.subr.bf16.mxu0 0
        %4320 = vmatpush1.bf16.msra.mxu0 %v4303
        %4321 = vmatprep.subr.bf16.mxu0 0
        %4322 = vmatpush1.bf16.msra.mxu0 %v4304
        %4323 = vmatprep.subr.bf16.mxu0 0
        %4324 = vmatpush1.bf16.msra.mxu0 %v4305
        %4325 = vmatprep.subr.bf16.mxu0 0
        %4326 = vmatpush1.bf16.msra.mxu0 %v4306
        %4327 = vmatprep.subr.bf16.mxu0 0
        %4328 = vmatpush1.bf16.msra.mxu0 %v4307
        %4329 = vmatprep.subr.bf16.mxu0 0
        %4330 = vmatpush1.bf16.msra.mxu0 %v4308
        %4331 = vmatprep.subr.bf16.mxu0 0
        %4332 = vmatpush1.bf16.msra.mxu0 %v4309
        %4333 = vmatprep.subr.bf16.mxu0 0
        %4334 = vmatpush1.bf16.msra.mxu0 %v4310
        %4335 = vmatprep.subr.bf16.mxu0 0
        %4336 = vmatpush1.bf16.msra.mxu0 0
        %4337 = vmatprep.subr.bf16.mxu0 0
        %4338 = vmatpush1.bf16.msra.mxu0 0
        %4339 = vmatprep.subr.bf16.mxu0 0
        %4340 = vmatpush1.bf16.msra.mxu0 0
        %4341 = vmatprep.subr.bf16.mxu0 0
        %4342 = vmatpush1.bf16.msra.mxu0 0
        %4343 = vmatprep.subr.bf16.mxu0 0
        %4344 = vmatpush1.bf16.msra.mxu0 0
        %4345 = vmatprep.subr.bf16.mxu0 0
        %4346 = vmatpush1.bf16.msra.mxu0 0
        %4347 = vmatprep.subr.bf16.mxu0 0
        %4348 = vmatpush1.bf16.msra.mxu0 0
        %4349 = vmatprep.subr.bf16.mxu0 0
        %4350 = vmatpush1.bf16.msra.mxu0 0
        %4351 = vmatprep.mubr.bf16.mxu0 0
        %4352 = vmatmul.mubr.bf16.gmra.mrb[0].mxu0 %v4247
        %v4353 = vpop.f32.mrb[0].mxu0
        %v4354 = vadd.f32 %v4269, %v4353
        %v4355 = vpop.f32.mrb[0].mxu0
        %v4356 = vpop.f32.mrb[0].mxu0
        %v4357 = vpop.f32.mrb[0].mxu0
        %4358 = vdwg.mxu0
        %4359 = vst [vmem:[%s433] sm:$0xf] %v4354
        %s4360 = sand.u32 %s313, 1
        %s4361 = scalar_lea.sflag [#allocation5], %s4360
        %s4362 = sand.u32 %s313, 1
        %s4363 = smul.addr %s4362, 4
        %s4364 = scalar_lea.vmem [#allocation4], %s4363
        // Predicated region
        $region73: #{cifar_model_forward.1} parent=71 // pred_check
          %p4365 = pneg %p323
        $region74: #{cifar_model_forward.1} parent=71 // pred_check_branch
          %4367 = sbr.rel (%p4365) target = $region76
        $region75: #{cifar_model_forward.1} parent=71 // pred_region
          %s4369 = ssub.s32 64, 64
          %4370 = vsyncadd %s4361, %s4369
          %s4371 = smul.addr %s27, 64
          %s4372 = scalar_lea.hbm %s13, %s4371
          %s4374 = sshll.u32 %s4364, 4
          %s4375 = int_to_ptr.vmem [resolvable:$true] %s4374
          %4377 = dma.vmem_to_hbm [thread:$0]  %s4375, 64, %s4372, %s4361
        $region76: #{cifar_model_forward.1} parent=71 // pred_fallthru
          _
      $region72: #{cifar_model_forward.1} parent=5 // pred_fallthru
        _
      %p4378 = scmp.le.s32.totalorder 2, %s22
      // Predicated region
      $region77: #{cifar_model_forward.1} parent=5 // pred_check
        %p4379 = pneg %p4378
      $region78: #{cifar_model_forward.1} parent=5 // pred_check_branch
        %4381 = sbr.rel (%p4379) target = $region80
      $region79: #{cifar_model_forward.1} parent=5 // pred_region
        %s4382 = ssub.s32 %s22, 2
        // Predicated region
        $region81: #{cifar_model_forward.1} parent=79 // pred_check
          %p4383 = pneg %p329
        $region82: #{cifar_model_forward.1} parent=79 // pred_check_branch
          %4385 = sbr.rel (%p4383) target = $region84
        $region83: #{cifar_model_forward.1} parent=79 // pred_region
          %s4386 = sand.u32 %s314, 1
          %s4387 = scalar_lea.sflag [#allocation5], %s4386
          %s4388 = sand.u32 %s314, 1
          %s4389 = smul.addr %s4388, 4
          %s4390 = scalar_lea.vmem [#allocation4], %s4389
          %4391 = dma.done %s4387, 64
        $region84: #{cifar_model_forward.1} parent=79 // pred_fallthru
          _
      $region80: #{cifar_model_forward.1} parent=5 // pred_fallthru
        _
    $region6: #{cifar_model_forward.1} parent=1 // loop_footer
      %s26 = sadd.s32 1, %s22
    $region7: #{cifar_model_forward.1} parent=1 // loop_footer_branch
      %21 = sbr.rel target = $region3
    $region8: #{cifar_model_forward.1} parent=1 // loop_exit
      _
    %4392 = vsyncpa [#allocation5], 1
    %s4393 = scalar_lea.sflag [#allocation5], 1
    %4394 = vsyncpa %s4393, 1

</llo_original>
